<compile_context>
chip_gen: v7x
topology: tpu7x:2x2x1
jax: 0.10.0
libtpu: 0.0.40
codegen_flags: <defaults>
</compile_context>

<pallas_src>
import functools

import jax
import jax.numpy as jnp
from jax.experimental import pallas as pl
from jax.experimental.pallas import tpu as pltpu


def _relpos_attn_kernel(mask_ref, q_ref, k_ref, v_ref, *rest,
                        heads, h, w, relative):
    # `heads` here is the per-grid-step head-group size.
    if relative:
        rw_ref, rh_ref, o_ref = rest
    else:
        (o_ref,) = rest

    S = h * w
    dim = q_ref.shape[-1]

    mask_add = mask_ref[...]              # [1, S] f32 additive mask (0 / -1e30)
    if relative:
        rw = rw_ref[...]                  # [w, S, dim] bf16 (loop-invariant)
        rh = rh_ref[...]                  # [h, S, dim] bf16 (loop-invariant)

    for n in range(heads):                # small & static -> unrolled
        qn = q_ref[n]                     # [S, dim] bf16, already * dim**-0.5
        kn = k_ref[n]                     # [S, dim] bf16
        vn = v_ref[n]                     # [S, dim] bf16

        if relative:
            q3 = qn.reshape(h, w, dim)                        # [h, w, dim]

            # content + height-relative fused: for query row x the effective
            # key is k + rel_emb_h[(t//w) - x + h - 1]; one batched matmul
            # (batch over x) replaces two full S^2*dim matmuls.
            k_eff = kn[None, :, :] + rh                       # [h, S, dim] bf16
            logits3 = jax.lax.dot_general(
                q3, k_eff, (((2,), (2,)), ((0,), (0,))),
                preferred_element_type=jnp.float32)           # [h, w, S]

            # width-relative: batch over query column y; the y-major query
            # view is a tiny in-kernel transpose (no extra HBM input).
            q3t = jnp.transpose(q3, (1, 0, 2))                # [w, h, dim]
            rel_w = jax.lax.dot_general(
                q3t, rw, (((2,), (2,)), ((0,), (0,))),
                preferred_element_type=jnp.float32)           # [w, h, S]
            rel_w = jnp.transpose(rel_w, (1, 0, 2))           # [h, w, S] (XLU)

            logits = (logits3 + rel_w).reshape(S, S)
        else:
            logits = jax.lax.dot_general(
                qn, kn, (((1,), (1,)), ((), ())),
                preferred_element_type=jnp.float32)           # [S, S]

        # additive mask (scale already folded into q in the wrapper)
        logits = logits + mask_add

        # softmax over the key axis (f32); reciprocal runs on the EUP
        m = jnp.max(logits, axis=-1, keepdims=True)
        e = jnp.exp(logits - m)
        denom = jnp.sum(e, axis=-1, keepdims=True)
        p = e * pl.reciprocal(denom, approx=True)

        # attention output: bf16 probs @ bf16 v, f32 accumulation -> [S, dim]
        out_n = jax.lax.dot_general(
            p.astype(vn.dtype), vn, (((1,), (0,)), ((), ())),
            preferred_element_type=jnp.float32)

        # flush this head immediately (static lane offset); no concatenate,
        # no whole-kernel-lifetime list of per-head outputs.
        o_ref[:, n * dim:(n + 1) * dim] = out_n.astype(o_ref.dtype)


def _vmem_limit_bytes():
    # Generation-dependent scoped-VMEM cap, leaving headroom for Mosaic
    # internals: ~96 MiB on v5e/v6e (128 MiB physical), 48 MiB on v7x (64 MiB).
    try:
        cap = int(pltpu.get_tpu_info().vmem_capacity_bytes)
        return min(96 * 1024 * 1024, (cap * 3) // 4)
    except Exception:
        # Conservative but non-throttling fallback, safe on v5e/v6e/v7x.
        return 48 * 1024 * 1024


def _pick_head_group(bs, heads, dim):
    """Heads processed per grid step.

    Prefer enough grid steps (>=4) for pipelining / v7x's 2 TensorCores while
    keeping blocks big; the output lane block (hg*dim) must be 128-aligned
    unless it covers all heads (Mosaic last-dim block constraint).
    """
    if bs >= 4:
        return heads
    for hg in range(heads, 0, -1):
        if heads % hg:
            continue
        if hg != heads and (hg * dim) % 128 != 0:
            continue
        if bs * (heads // hg) >= 4:
            return hg
    return heads


def rel_pos_self_attention(q, k, v, attn_mask, rel_emb_w, rel_emb_h,
                           *, relative=True, fold_heads=False):
    """q, k, v: [bs, heads, h, w, dim]; attn_mask: [bs, h*w] bool."""
    bs, heads, h, w, dim = q.shape
    S = h * w
    cdt = jnp.bfloat16
    scale = dim ** (-0.5)

    # Fold the 1/sqrt(dim) scale into the cast (all logit terms are linear in q).
    qf = (q * scale).reshape(bs, heads, S, dim).astype(cdt)
    kf = k.reshape(bs, heads, S, dim).astype(cdt)
    vf = v.reshape(bs, heads, S, dim).astype(cdt)

    # Additive mask precomputed once: 0 where attended, -1e30 where masked
    # (finite value avoids NaN propagation for fully-masked rows).
    mask_add = jnp.where(attn_mask.reshape(bs, 1, S).astype(bool),
                         0.0, -1e30).astype(jnp.float32)

    hg = _pick_head_group(bs, heads, dim)
    grid = (bs, heads // hg)

    in_specs = [
        pl.BlockSpec((None, 1, S), lambda b, j: (b, 0, 0)),                # mask
        pl.BlockSpec((None, hg, S, dim), lambda b, j: (b, j, 0, 0)),       # q
        pl.BlockSpec((None, hg, S, dim), lambda b, j: (b, j, 0, 0)),       # k
        pl.BlockSpec((None, hg, S, dim), lambda b, j: (b, j, 0, 0)),       # v
    ]
    args = [mask_add, qf, kf, vf]

    if relative:
        # Expanded per-(query coord, key coord) relative tables (bf16), same
        # semantics as the torch rel_to_abs pad/reshape trick:
        #   rw[y0, t, :] = rel_emb_w[(t %  w) - y0 + w - 1]
        #   rh[x0, t, :] = rel_emb_h[(t // w) - x0 + h - 1]
        t = jnp.arange(S)
        idx_w = (t % w)[None, :] - jnp.arange(w)[:, None] + (w - 1)   # [w, S]
        idx_h = (t // w)[None, :] - jnp.arange(h)[:, None] + (h - 1)  # [h, S]
        rw = rel_emb_w[idx_w].astype(cdt)                             # [w, S, dim]
        rh = rel_emb_h[idx_h].astype(cdt)                             # [h, S, dim]
        in_specs += [
            pl.BlockSpec((w, S, dim), lambda b, j: (0, 0, 0)),         # rw (const)
            pl.BlockSpec((h, S, dim), lambda b, j: (0, 0, 0)),         # rh (const)
        ]
        args += [rw, rh]

    kernel = functools.partial(_relpos_attn_kernel,
                               heads=hg, h=h, w=w, relative=relative)

    out = pl.pallas_call(
        kernel,
        out_shape=jax.ShapeDtypeStruct((bs, S, heads * dim), jnp.float32),
        grid=grid,
        in_specs=in_specs,
        out_specs=pl.BlockSpec((None, S, hg * dim), lambda b, j: (b, 0, j)),
        compiler_params=pltpu.CompilerParams(
            dimension_semantics=("parallel", "parallel"),
            vmem_limit_bytes=_vmem_limit_bytes()),
    )(*args)

    # out[b, x*w + y, n*dim + d] == 'bhwnd' flattened -> reshapes are free.
    out = out.reshape(bs, h, w, heads, dim)
    if fold_heads:
        out = out.reshape(bs, h, w, heads * dim)
    return out


# ----------------------- pure-JAX reference (faithful port) -----------------
def _rel_to_abs(x):
    bs, heads, L, _ = x.shape
    x = jnp.concatenate([x, jnp.zeros((bs, heads, L, 1), x.dtype)], axis=3)
    flat_x = x.reshape(bs, heads, -1)
    flat_x = jnp.concatenate(
        [flat_x, jnp.zeros((bs, heads, L - 1), x.dtype)], axis=2)
    final = flat_x.reshape(bs, heads, L + 1, 2 * L - 1)
    return final[:, :, :L, L - 1:]


def _relative_logits_1d(q, rel_k, transpose_mask):
    bs, heads, h, w, dim = q.shape
    rel = jnp.einsum('bhxyd,md->bhxym', q, rel_k)
    rel = rel.reshape(bs, heads * h, w, 2 * w - 1)
    rel = _rel_to_abs(rel)
    rel = rel.reshape(bs, heads, h, w, w)
    rel = jnp.expand_dims(rel, axis=3)
    rel = jnp.tile(rel, (1, 1, 1, h, 1, 1))
    return jnp.transpose(rel, transpose_mask)


def reference_relpos_attention(q, k, v, attn_mask, rel_emb_w, rel_emb_h,
                               relative=True, fold_heads=False):
    bs, heads, h, w, dim = q.shape
    qs = q * dim ** (-0.5)
    logits = jnp.einsum('bnhwd,bnpqd->bnhwpq', qs, k)
    if relative:
        rel_w = _relative_logits_1d(qs, rel_emb_w, (0, 1, 2, 4, 3, 5))
        rel_h = _relative_logits_1d(jnp.transpose(qs, (0, 1, 3, 2, 4)),
                                    rel_emb_h, (0, 1, 4, 2, 5, 3))
        logits = logits + rel_h + rel_w
    weights = logits.reshape(bs, heads, h, w, h * w)
    weights = weights + jnp.where(
        attn_mask.reshape(bs, 1, 1, 1, h * w), 0.0, -jnp.inf)
    weights = jax.nn.softmax(weights, axis=-1)
    weights = weights.reshape(bs, heads, h, w, h, w)
    out = jnp.einsum('bnhwpq,bnpqd->bhwnd', weights, v)
    if fold_heads:
        out = out.reshape(bs, h, w, heads * dim)
    return out


if __name__ == "__main__":
    bs, heads, h, w, dim = 2, 2, 8, 8, 32
    fold_heads = True

    key = jax.random.PRNGKey(0)
    kq, kk, kv, km, kew, keh = jax.random.split(key, 6)
    q = jax.random.normal(kq, (bs, heads, h, w, dim), jnp.float32)
    k = jax.random.normal(kk, (bs, heads, h, w, dim), jnp.float32)
    v = jax.random.normal(kv, (bs, heads, h, w, dim), jnp.float32)
    attn_mask = jax.random.bernoulli(km, 0.85, (bs, h * w))
    attn_mask = attn_mask.at[:, 0].set(True)  # avoid fully-masked rows in ref

    # nn.init.normal_(std=dim**-0.5), deterministic
    rel_emb_w = jax.random.normal(kew, (2 * w - 1, dim), jnp.float32) * dim ** (-0.5)
    rel_emb_h = jax.random.normal(keh, (2 * h - 1, dim), jnp.float32) * dim ** (-0.5)

    # relative=True (default module config)
    out = rel_pos_self_attention(q, k, v, attn_mask, rel_emb_w, rel_emb_h,
                                 relative=True, fold_heads=fold_heads)
    out = jax.block_until_ready(out)
    ref = reference_relpos_attention(q, k, v, attn_mask, rel_emb_w, rel_emb_h,
                                     relative=True, fold_heads=fold_heads)
    assert out.shape == ref.shape, (out.shape, ref.shape)
    max_err = float(jnp.max(jnp.abs(out - ref)))
    assert jnp.allclose(out, ref, atol=5e-2, rtol=5e-2), max_err

    # relative=False path
    out_nr = rel_pos_self_attention(q, k, v, attn_mask, rel_emb_w, rel_emb_h,
                                    relative=False, fold_heads=False)
    out_nr = jax.block_until_ready(out_nr)
    ref_nr = reference_relpos_attention(q, k, v, attn_mask, rel_emb_w, rel_emb_h,
                                        relative=False, fold_heads=False)
    assert out_nr.shape == ref_nr.shape, (out_nr.shape, ref_nr.shape)
    max_err_nr = float(jnp.max(jnp.abs(out_nr - ref_nr)))
    assert jnp.allclose(out_nr, ref_nr, atol=5e-2, rtol=5e-2), max_err_nr

    print("KERNEL_OK")
</pallas_src>

<mosaic_0001>
module attributes {stable_mosaic.version = 11 : i64} {
  func.func @_relpos_attn_kernel(%arg0: i32, %arg1: i32, %arg2: memref<1x1x64xf32, #tpu.memory_space<vmem>>, %arg3: memref<1x2x64x32xbf16, #tpu.memory_space<vmem>>, %arg4: memref<1x2x64x32xbf16, #tpu.memory_space<vmem>>, %arg5: memref<1x2x64x32xbf16, #tpu.memory_space<vmem>>, %arg6: memref<8x64x32xbf16, #tpu.memory_space<vmem>>, %arg7: memref<8x64x32xbf16, #tpu.memory_space<vmem>>, %arg8: memref<1x64x64xf32, #tpu.memory_space<vmem>>) attributes {dimension_semantics = [#tpu.dimension_semantics<parallel>, #tpu.dimension_semantics<parallel>], iteration_bounds = array<i64: 2, 1>, scalar_prefetch = 0 : i64, scratch_operands = 0 : i64, tpu.core_type = #tpu.core_type<tc>, window_params = [{transform_indices = @transform_0, window_bounds = array<i64: 1, 1, 64>}, {transform_indices = @transform_1, window_bounds = array<i64: 1, 2, 64, 32>}, {transform_indices = @transform_2, window_bounds = array<i64: 1, 2, 64, 32>}, {transform_indices = @transform_3, window_bounds = array<i64: 1, 2, 64, 32>}, {pipeline_mode = #tpu.pipeline_mode<synchronous>, transform_indices = @transform_4, window_bounds = array<i64: 8, 64, 32>}, {pipeline_mode = #tpu.pipeline_mode<synchronous>, transform_indices = @transform_5, window_bounds = array<i64: 8, 64, 32>}, {transform_indices = @transform_6, window_bounds = array<i64: 1, 64, 64>}]} {
    %c0 = arith.constant 0 : index
    %c0_0 = arith.constant 0 : index
    %c0_1 = arith.constant 0 : index
    %0 = vector.load %arg2[%c0, %c0_0, %c0_1] : memref<1x1x64xf32, #tpu.memory_space<vmem>>, vector<1x1x64xf32>
    %1 = vector.shape_cast %0 : vector<1x1x64xf32> to vector<1x64xf32>
    %c0_2 = arith.constant 0 : index
    %c0_3 = arith.constant 0 : index
    %c0_4 = arith.constant 0 : index
    %2 = vector.load %arg6[%c0_2, %c0_3, %c0_4] : memref<8x64x32xbf16, #tpu.memory_space<vmem>>, vector<8x64x32xbf16>
    %c0_5 = arith.constant 0 : index
    %c0_6 = arith.constant 0 : index
    %c0_7 = arith.constant 0 : index
    %3 = vector.load %arg7[%c0_5, %c0_6, %c0_7] : memref<8x64x32xbf16, #tpu.memory_space<vmem>>, vector<8x64x32xbf16>
    %c0_8 = arith.constant 0 : index
    %c0_9 = arith.constant 0 : index
    %c0_10 = arith.constant 0 : index
    %c0_11 = arith.constant 0 : index
    %4 = vector.load %arg3[%c0_8, %c0_9, %c0_10, %c0_11] : memref<1x2x64x32xbf16, #tpu.memory_space<vmem>>, vector<1x1x64x32xbf16>
    %5 = vector.shape_cast %4 : vector<1x1x64x32xbf16> to vector<64x32xbf16>
    %c0_12 = arith.constant 0 : index
    %c0_13 = arith.constant 0 : index
    %c0_14 = arith.constant 0 : index
    %c0_15 = arith.constant 0 : index
    %6 = vector.load %arg4[%c0_12, %c0_13, %c0_14, %c0_15] : memref<1x2x64x32xbf16, #tpu.memory_space<vmem>>, vector<1x1x64x32xbf16>
    %7 = vector.shape_cast %6 : vector<1x1x64x32xbf16> to vector<64x32xbf16>
    %c0_16 = arith.constant 0 : index
    %c0_17 = arith.constant 0 : index
    %c0_18 = arith.constant 0 : index
    %c0_19 = arith.constant 0 : index
    %8 = vector.load %arg5[%c0_16, %c0_17, %c0_18, %c0_19] : memref<1x2x64x32xbf16, #tpu.memory_space<vmem>>, vector<1x1x64x32xbf16>
    %9 = vector.shape_cast %8 : vector<1x1x64x32xbf16> to vector<64x32xbf16>
    %10 = vector.shape_cast %5 : vector<64x32xbf16> to vector<8x8x32xbf16>
    %11 = vector.shape_cast %7 : vector<64x32xbf16> to vector<1x64x32xbf16>
    %12 = vector.broadcast %11 : vector<1x64x32xbf16> to vector<8x64x32xbf16>
    %13 = arith.addf %12, %3 : vector<8x64x32xbf16>
    %cst = arith.constant dense<0.000000e+00> : vector<8x8x64xf32>
    %14 = tpu.matmul %10, %13, %cst {dimension_numbers = #tpu.dot_dimension_numbers<[2], [2], [1], [1], [0, 0, 0, 1, 1, 1], [0], [0]>} : vector<8x8x32xbf16>, vector<8x64x32xbf16>, vector<8x8x64xf32> -> vector<8x8x64xf32>
    %15 = tpu.transpose %10, [1, 0, 2] : vector<8x8x32xbf16> -> vector<8x8x32xbf16>
    %cst_20 = arith.constant dense<0.000000e+00> : vector<8x8x64xf32>
    %16 = tpu.matmul %15, %2, %cst_20 {dimension_numbers = #tpu.dot_dimension_numbers<[2], [2], [1], [1], [0, 0, 0, 1, 1, 1], [0], [0]>} : vector<8x8x32xbf16>, vector<8x64x32xbf16>, vector<8x8x64xf32> -> vector<8x8x64xf32>
    %17 = tpu.transpose %16, [1, 0, 2] : vector<8x8x64xf32> -> vector<8x8x64xf32>
    %18 = arith.addf %14, %17 : vector<8x8x64xf32>
    %19 = vector.shape_cast %18 : vector<8x8x64xf32> to vector<64x64xf32>
    %20 = vector.broadcast %1 : vector<1x64xf32> to vector<64x64xf32>
    %21 = arith.addf %19, %20 : vector<64x64xf32>
    %cst_21 = arith.constant dense<0xFF800000> : vector<64xf32>
    %22 = vector.multi_reduction <maximumf>, %21, %cst_21 [1] : vector<64x64xf32> to vector<64xf32>
    %23 = vector.shape_cast %22 : vector<64xf32> to vector<64x1xf32>
    %24 = vector.broadcast %23 : vector<64x1xf32> to vector<64x64xf32>
    %25 = arith.subf %21, %24 : vector<64x64xf32>
    %26 = math.exp %25 : vector<64x64xf32>
    %cst_22 = arith.constant dense<0.000000e+00> : vector<64xf32>
    %27 = vector.multi_reduction <add>, %26, %cst_22 [1] : vector<64x64xf32> to vector<64xf32>
    %28 = vector.shape_cast %27 : vector<64xf32> to vector<64x1xf32>
    %29 = tpu.reciprocal %28 {approx = true} : vector<64x1xf32> -> vector<64x1xf32>
    %30 = vector.broadcast %29 : vector<64x1xf32> to vector<64x64xf32>
    %31 = arith.mulf %26, %30 : vector<64x64xf32>
    %32 = arith.truncf %31 : vector<64x64xf32> to vector<64x64xbf16>
    %cst_23 = arith.constant dense<0.000000e+00> : vector<64x32xf32>
    %33 = tpu.matmul %32, %9, %cst_23 {dimension_numbers = #tpu.dot_dimension_numbers<[1], [0], [0], [1], [0, 0, 1, 1], [], []>} : vector<64x64xbf16>, vector<64x32xbf16>, vector<64x32xf32> -> vector<64x32xf32>
    %c0_24 = arith.constant 0 : index
    %c0_25 = arith.constant 0 : index
    %c0_26 = arith.constant 0 : index
    %34 = vector.load %arg8[%c0_24, %c0_25, %c0_26] : memref<1x64x64xf32, #tpu.memory_space<vmem>>, vector<1x64x32xf32>
    %35 = vector.shape_cast %34 : vector<1x64x32xf32> to vector<64x32xf32>
    %36 = vector.shape_cast %33 : vector<64x32xf32> to vector<1x64x32xf32>
    tpu.vector_store %arg8[%c0_24, %c0_25, %c0_26], %36 {strides = array<i32>} : memref<1x64x64xf32, #tpu.memory_space<vmem>>, vector<1x64x32xf32>,
    %c0_27 = arith.constant 0 : index
    %c1 = arith.constant 1 : index
    %c0_28 = arith.constant 0 : index
    %c0_29 = arith.constant 0 : index
    %37 = vector.load %arg3[%c0_27, %c1, %c0_28, %c0_29] : memref<1x2x64x32xbf16, #tpu.memory_space<vmem>>, vector<1x1x64x32xbf16>
    %38 = vector.shape_cast %37 : vector<1x1x64x32xbf16> to vector<64x32xbf16>
    %c0_30 = arith.constant 0 : index
    %c1_31 = arith.constant 1 : index
    %c0_32 = arith.constant 0 : index
    %c0_33 = arith.constant 0 : index
    %39 = vector.load %arg4[%c0_30, %c1_31, %c0_32, %c0_33] : memref<1x2x64x32xbf16, #tpu.memory_space<vmem>>, vector<1x1x64x32xbf16>
    %40 = vector.shape_cast %39 : vector<1x1x64x32xbf16> to vector<64x32xbf16>
    %c0_34 = arith.constant 0 : index
    %c1_35 = arith.constant 1 : index
    %c0_36 = arith.constant 0 : index
    %c0_37 = arith.constant 0 : index
    %41 = vector.load %arg5[%c0_34, %c1_35, %c0_36, %c0_37] : memref<1x2x64x32xbf16, #tpu.memory_space<vmem>>, vector<1x1x64x32xbf16>
    %42 = vector.shape_cast %41 : vector<1x1x64x32xbf16> to vector<64x32xbf16>
    %43 = vector.shape_cast %38 : vector<64x32xbf16> to vector<8x8x32xbf16>
    %44 = vector.shape_cast %40 : vector<64x32xbf16> to vector<1x64x32xbf16>
    %45 = vector.broadcast %44 : vector<1x64x32xbf16> to vector<8x64x32xbf16>
    %46 = arith.addf %45, %3 : vector<8x64x32xbf16>
    %cst_38 = arith.constant dense<0.000000e+00> : vector<8x8x64xf32>
    %47 = tpu.matmul %43, %46, %cst_38 {dimension_numbers = #tpu.dot_dimension_numbers<[2], [2], [1], [1], [0, 0, 0, 1, 1, 1], [0], [0]>} : vector<8x8x32xbf16>, vector<8x64x32xbf16>, vector<8x8x64xf32> -> vector<8x8x64xf32>
    %48 = tpu.transpose %43, [1, 0, 2] : vector<8x8x32xbf16> -> vector<8x8x32xbf16>
    %cst_39 = arith.constant dense<0.000000e+00> : vector<8x8x64xf32>
    %49 = tpu.matmul %48, %2, %cst_39 {dimension_numbers = #tpu.dot_dimension_numbers<[2], [2], [1], [1], [0, 0, 0, 1, 1, 1], [0], [0]>} : vector<8x8x32xbf16>, vector<8x64x32xbf16>, vector<8x8x64xf32> -> vector<8x8x64xf32>
    %50 = tpu.transpose %49, [1, 0, 2] : vector<8x8x64xf32> -> vector<8x8x64xf32>
    %51 = arith.addf %47, %50 : vector<8x8x64xf32>
    %52 = vector.shape_cast %51 : vector<8x8x64xf32> to vector<64x64xf32>
    %53 = vector.broadcast %1 : vector<1x64xf32> to vector<64x64xf32>
    %54 = arith.addf %52, %53 : vector<64x64xf32>
    %cst_40 = arith.constant dense<0xFF800000> : vector<64xf32>
    %55 = vector.multi_reduction <maximumf>, %54, %cst_40 [1] : vector<64x64xf32> to vector<64xf32>
    %56 = vector.shape_cast %55 : vector<64xf32> to vector<64x1xf32>
    %57 = vector.broadcast %56 : vector<64x1xf32> to vector<64x64xf32>
    %58 = arith.subf %54, %57 : vector<64x64xf32>
    %59 = math.exp %58 : vector<64x64xf32>
    %cst_41 = arith.constant dense<0.000000e+00> : vector<64xf32>
    %60 = vector.multi_reduction <add>, %59, %cst_41 [1] : vector<64x64xf32> to vector<64xf32>
    %61 = vector.shape_cast %60 : vector<64xf32> to vector<64x1xf32>
    %62 = tpu.reciprocal %61 {approx = true} : vector<64x1xf32> -> vector<64x1xf32>
    %63 = vector.broadcast %62 : vector<64x1xf32> to vector<64x64xf32>
    %64 = arith.mulf %59, %63 : vector<64x64xf32>
    %65 = arith.truncf %64 : vector<64x64xf32> to vector<64x64xbf16>
    %cst_42 = arith.constant dense<0.000000e+00> : vector<64x32xf32>
    %66 = tpu.matmul %65, %42, %cst_42 {dimension_numbers = #tpu.dot_dimension_numbers<[1], [0], [0], [1], [0, 0, 1, 1], [], []>} : vector<64x64xbf16>, vector<64x32xbf16>, vector<64x32xf32> -> vector<64x32xf32>
    %c0_43 = arith.constant 0 : index
    %c0_44 = arith.constant 0 : index
    %c32 = arith.constant 32 : index
    %67 = vector.load %arg8[%c0_43, %c0_44, %c32] : memref<1x64x64xf32, #tpu.memory_space<vmem>>, vector<1x64x32xf32>
    %68 = vector.shape_cast %67 : vector<1x64x32xf32> to vector<64x32xf32>
    %69 = vector.shape_cast %66 : vector<64x32xf32> to vector<1x64x32xf32>
    tpu.vector_store %arg8[%c0_43, %c0_44, %c32], %69 {strides = array<i32>} : memref<1x64x64xf32, #tpu.memory_space<vmem>>, vector<1x64x32xf32>,
    return
  }
  func.func @transform_0(%arg0: i32, %arg1: i32) -> (i32, i32, i32) {
    %c0_i32 = arith.constant 0 : i32
    %c0_i32_0 = arith.constant 0 : i32
    %c0_i32_1 = arith.constant 0 : i32
    return %arg0, %c0_i32, %c0_i32_0 : i32, i32, i32
  }
  func.func @transform_1(%arg0: i32, %arg1: i32) -> (i32, i32, i32, i32) {
    %c0_i32 = arith.constant 0 : i32
    %c0_i32_0 = arith.constant 0 : i32
    %c0_i32_1 = arith.constant 0 : i32
    return %arg0, %arg1, %c0_i32, %c0_i32_0 : i32, i32, i32, i32
  }
  func.func @transform_2(%arg0: i32, %arg1: i32) -> (i32, i32, i32, i32) {
    %c0_i32 = arith.constant 0 : i32
    %c0_i32_0 = arith.constant 0 : i32
    %c0_i32_1 = arith.constant 0 : i32
    return %arg0, %arg1, %c0_i32, %c0_i32_0 : i32, i32, i32, i32
  }
  func.func @transform_3(%arg0: i32, %arg1: i32) -> (i32, i32, i32, i32) {
    %c0_i32 = arith.constant 0 : i32
    %c0_i32_0 = arith.constant 0 : i32
    %c0_i32_1 = arith.constant 0 : i32
    return %arg0, %arg1, %c0_i32, %c0_i32_0 : i32, i32, i32, i32
  }
  func.func @transform_4(%arg0: i32, %arg1: i32) -> (i32, i32, i32) {
    %c0_i32 = arith.constant 0 : i32
    %c0_i32_0 = arith.constant 0 : i32
    %c0_i32_1 = arith.constant 0 : i32
    %c0_i32_2 = arith.constant 0 : i32
    return %c0_i32, %c0_i32_0, %c0_i32_1 : i32, i32, i32
  }
  func.func @transform_5(%arg0: i32, %arg1: i32) -> (i32, i32, i32) {
    %c0_i32 = arith.constant 0 : i32
    %c0_i32_0 = arith.constant 0 : i32
    %c0_i32_1 = arith.constant 0 : i32
    %c0_i32_2 = arith.constant 0 : i32
    return %c0_i32, %c0_i32_0, %c0_i32_1 : i32, i32, i32
  }
  func.func @transform_6(%arg0: i32, %arg1: i32) -> (i32, i32, i32) {
    %c0_i32 = arith.constant 0 : i32
    %c0_i32_0 = arith.constant 0 : i32
    return %arg0, %c0_i32, %arg1 : i32, i32, i32
  }
}

</mosaic_0001>

<llo_original>
// kernel: tpu_custom_call.1
$region0: #{tpu_custom_call.1}
  #allocation0 [shape = 'u32[]', space=smem, size = 0x4, offset = 0x4, fixed_abs, tag = 'smem constant byte address 0x4 - core index']
  #allocation1 [shape = 'u32[144,128]{1,0:T(1,128)}', space=vmem, size = 0x12000, scoped, tag = 'internal scratch']
  %s0 = inlined_call_operand.vmem [shape: f32[2,1,64], index: 0, kind: input, shape index: {}]
  %s1 = inlined_call_operand.vmem [shape: bf16[2,2,64,32], index: 1, kind: input, shape index: {}]
  %s2 = inlined_call_operand.vmem [shape: bf16[2,2,64,32], index: 2, kind: input, shape index: {}]
  %s3 = inlined_call_operand.vmem [shape: bf16[2,2,64,32], index: 3, kind: input, shape index: {}]
  %s4 = inlined_call_operand.vmem [shape: bf16[8,64,32], index: 4, kind: input, shape index: {}]
  %s5 = inlined_call_operand.vmem [shape: bf16[8,64,32], index: 5, kind: input, shape index: {}]
  %s6 = inlined_call_operand.hbm [shape: f32[2,64,64], index: 6, kind: output, shape index: {}]
  %s7 = sld [smem:[#allocation0]]
  $region57: #{tpu_custom_call.1} parent=0
    _
  %s9 = ssub.s32 1, %s7
  %s10 = scalar_select 0, %s9, %s7
  $region1: #{tpu_custom_call.1} parent=0
    #allocation2 [shape = 'u8[65536]{0}', space=vmem, size = 0x10000, scoped, tag = 'output window, operand 0']
    #allocation3 [shape = 's32[2]{0}', space=sflag, size = 0x8, scoped, tag = 'scoped memory for tpu_custom_call.1']
    %11 = vsyncpa [#allocation3], 0
    %s12 = scalar_lea.sflag [#allocation3], 1
    %13 = vsyncpa %s12, 0
    loop: start=0, step=1, limit=4
    $region2: #{tpu_custom_call.1} parent=1 // loop_pre_header
      _
    $region3: #{tpu_custom_call.1} parent=1 // loop_header
      %s15 = sphi 0, %s19
      %p16 = scmp.ge.s32.totalorder %s15, 4
      %s22 = sphi 0, %s34
      %s23 = sphi 0, %s30
      %s24 = sphi 0, %s22
      %s25 = sphi 0, %s23
      %s26 = sphi 0, %s24
      %s27 = sphi 0, %s25
      %s37 = sphi 0, %s39
      %s40 = sphi 0, %s37
      %s41 = sphi 0, %s40
      %s57 = sphi 0, %s41
      %s65 = sphi 0, %s67
      %s68 = sphi 0, %s65
      %s69 = sphi 0, %s68
      %s85 = sphi 0, %s69
      %s93 = sphi 0, %s95
      %s96 = sphi 0, %s93
      %s97 = sphi 0, %s96
      %s113 = sphi 0, %s97
      %s121 = sphi 0, %s123
      %s124 = sphi 0, %s121
      %s125 = sphi 0, %s124
      %s141 = sphi 0, %s125
      %s145 = sphi 0, %s145
      %s147 = sphi 0, %s145
      %s148 = sphi 0, %s147
      %s162 = sphi 0, %s148
      %s166 = sphi 0, %s166
      %s168 = sphi 0, %s166
      %s169 = sphi 0, %s168
      %s183 = sphi 0, %s169
      %s191 = sphi 0, %s193
      %s194 = sphi 0, %s191
      %s195 = sphi 0, %s194
      %s211 = sphi 0, %s195
    $region4: #{tpu_custom_call.1} parent=1 // loop_header_branch
      %18 = sbr.rel (%p16) target = $region8
    $region5: #{tpu_custom_call.1} parent=1 // loop_body
      %s20 = ssub.s32 %s15, 1
      %s21 = ssub.s32 %s15, 2
      %s28 = sadd.s32 1, %s23
      %p29 = scmp.ge.s32.totalorder %s28, 1
      %s30 = scalar_select %p29, 0, %s28
      %s31 = sadd.s32 1, %s22
      %s32 = scalar_select %p29, %s31, %s22
      %p33 = scmp.ge.s32.totalorder %s32, 2
      %s34 = scalar_select %p33, 0, %s32
      %s35 = ssub.s32 %s22, %s34
      %p36 = scmp.eq.s32.totalorder %s35, 0
      %s38 = sadd.s32 %s37, 1
      %s39 = scalar_select %p36, %s37, %s38
      %p42 = pneg %p36
      %p43 = scmp.eq.s32.totalorder %s15, 1
      %p44 = por %p42, %p43
      %p45 = scmp.ne.s32.totalorder %s37, %s40
      %p46 = scmp.eq.s32.totalorder %s15, 0
      %p47 = por %p45, %p46
      %p48 = scmp.ne.s32.totalorder %s37, %s40
      %p49 = scmp.eq.s32.totalorder %s20, 1
      %p50 = por %p48, %p49
      %p51 = scmp.ne.s32.totalorder %s40, %s41
      %p52 = scmp.eq.s32.totalorder %s20, 0
      %p53 = por %p51, %p52
      %p54 = scmp.ne.s32.totalorder %s40, %s41
      %p55 = scmp.eq.s32.totalorder %s21, 1
      %p56 = por %p54, %p55
      %p58 = scmp.ne.s32.totalorder %s41, %s57
      %p59 = scmp.eq.s32.totalorder %s21, 0
      %p60 = por %p58, %p59
      %s61 = ssub.s32 %s22, %s34
      %s62 = ssub.s32 %s23, %s30
      %s63 = sor.u32 %s61, %s62
      %p64 = scmp.eq.s32.totalorder %s63, 0
      %s66 = sadd.s32 %s65, 1
      %s67 = scalar_select %p64, %s65, %s66
      %p70 = pneg %p64
      %p71 = scmp.eq.s32.totalorder %s15, 1
      %p72 = por %p70, %p71
      %p73 = scmp.ne.s32.totalorder %s65, %s68
      %p74 = scmp.eq.s32.totalorder %s15, 0
      %p75 = por %p73, %p74
      %p76 = scmp.ne.s32.totalorder %s65, %s68
      %p77 = scmp.eq.s32.totalorder %s20, 1
      %p78 = por %p76, %p77
      %p79 = scmp.ne.s32.totalorder %s68, %s69
      %p80 = scmp.eq.s32.totalorder %s20, 0
      %p81 = por %p79, %p80
      %p82 = scmp.ne.s32.totalorder %s68, %s69
      %p83 = scmp.eq.s32.totalorder %s21, 1
      %p84 = por %p82, %p83
      %p86 = scmp.ne.s32.totalorder %s69, %s85
      %p87 = scmp.eq.s32.totalorder %s21, 0
      %p88 = por %p86, %p87
      %s89 = ssub.s32 %s22, %s34
      %s90 = ssub.s32 %s23, %s30
      %s91 = sor.u32 %s89, %s90
      %p92 = scmp.eq.s32.totalorder %s91, 0
      %s94 = sadd.s32 %s93, 1
      %s95 = scalar_select %p92, %s93, %s94
      %p98 = pneg %p92
      %p99 = scmp.eq.s32.totalorder %s15, 1
      %p100 = por %p98, %p99
      %p101 = scmp.ne.s32.totalorder %s93, %s96
      %p102 = scmp.eq.s32.totalorder %s15, 0
      %p103 = por %p101, %p102
      %p104 = scmp.ne.s32.totalorder %s93, %s96
      %p105 = scmp.eq.s32.totalorder %s20, 1
      %p106 = por %p104, %p105
      %p107 = scmp.ne.s32.totalorder %s96, %s97
      %p108 = scmp.eq.s32.totalorder %s20, 0
      %p109 = por %p107, %p108
      %p110 = scmp.ne.s32.totalorder %s96, %s97
      %p111 = scmp.eq.s32.totalorder %s21, 1
      %p112 = por %p110, %p111
      %p114 = scmp.ne.s32.totalorder %s97, %s113
      %p115 = scmp.eq.s32.totalorder %s21, 0
      %p116 = por %p114, %p115
      %s117 = ssub.s32 %s22, %s34
      %s118 = ssub.s32 %s23, %s30
      %s119 = sor.u32 %s117, %s118
      %p120 = scmp.eq.s32.totalorder %s119, 0
      %s122 = sadd.s32 %s121, 1
      %s123 = scalar_select %p120, %s121, %s122
      %p126 = pneg %p120
      %p127 = scmp.eq.s32.totalorder %s15, 1
      %p128 = por %p126, %p127
      %p129 = scmp.ne.s32.totalorder %s121, %s124
      %p130 = scmp.eq.s32.totalorder %s15, 0
      %p131 = por %p129, %p130
      %p132 = scmp.ne.s32.totalorder %s121, %s124
      %p133 = scmp.eq.s32.totalorder %s20, 1
      %p134 = por %p132, %p133
      %p135 = scmp.ne.s32.totalorder %s124, %s125
      %p136 = scmp.eq.s32.totalorder %s20, 0
      %p137 = por %p135, %p136
      %p138 = scmp.ne.s32.totalorder %s124, %s125
      %p139 = scmp.eq.s32.totalorder %s21, 1
      %p140 = por %p138, %p139
      %p142 = scmp.ne.s32.totalorder %s125, %s141
      %p143 = scmp.eq.s32.totalorder %s21, 0
      %p144 = por %p142, %p143
      %s146 = sadd.s32 %s145, 1
      %p149 = scmp.eq.s32.totalorder %s15, 1
      %p150 = scmp.ne.s32.totalorder %s145, %s147
      %p151 = scmp.eq.s32.totalorder %s15, 0
      %p152 = por %p150, %p151
      %p153 = scmp.ne.s32.totalorder %s145, %s147
      %p154 = scmp.eq.s32.totalorder %s20, 1
      %p155 = por %p153, %p154
      %p156 = scmp.ne.s32.totalorder %s147, %s148
      %p157 = scmp.eq.s32.totalorder %s20, 0
      %p158 = por %p156, %p157
      %p159 = scmp.ne.s32.totalorder %s147, %s148
      %p160 = scmp.eq.s32.totalorder %s21, 1
      %p161 = por %p159, %p160
      %p163 = scmp.ne.s32.totalorder %s148, %s162
      %p164 = scmp.eq.s32.totalorder %s21, 0
      %p165 = por %p163, %p164
      %s167 = sadd.s32 %s166, 1
      %p170 = scmp.eq.s32.totalorder %s15, 1
      %p171 = scmp.ne.s32.totalorder %s166, %s168
      %p172 = scmp.eq.s32.totalorder %s15, 0
      %p173 = por %p171, %p172
      %p174 = scmp.ne.s32.totalorder %s166, %s168
      %p175 = scmp.eq.s32.totalorder %s20, 1
      %p176 = por %p174, %p175
      %p177 = scmp.ne.s32.totalorder %s168, %s169
      %p178 = scmp.eq.s32.totalorder %s20, 0
      %p179 = por %p177, %p178
      %p180 = scmp.ne.s32.totalorder %s168, %s169
      %p181 = scmp.eq.s32.totalorder %s21, 1
      %p182 = por %p180, %p181
      %p184 = scmp.ne.s32.totalorder %s169, %s183
      %p185 = scmp.eq.s32.totalorder %s21, 0
      %p186 = por %p184, %p185
      %s187 = ssub.s32 %s22, %s34
      %s188 = ssub.s32 %s23, %s30
      %s189 = sor.u32 %s187, %s188
      %p190 = scmp.eq.s32.totalorder %s189, 0
      %s192 = sadd.s32 %s191, 1
      %s193 = scalar_select %p190, %s191, %s192
      %p196 = pneg %p190
      %p197 = scmp.eq.s32.totalorder %s15, 1
      %p198 = por %p196, %p197
      %p199 = scmp.ne.s32.totalorder %s191, %s194
      %p200 = scmp.eq.s32.totalorder %s15, 0
      %p201 = por %p199, %p200
      %p202 = scmp.ne.s32.totalorder %s191, %s194
      %p203 = scmp.eq.s32.totalorder %s20, 1
      %p204 = por %p202, %p203
      %p205 = scmp.ne.s32.totalorder %s194, %s195
      %p206 = scmp.eq.s32.totalorder %s20, 0
      %p207 = por %p205, %p206
      %p208 = scmp.ne.s32.totalorder %s194, %s195
      %p209 = scmp.eq.s32.totalorder %s21, 1
      %p210 = por %p208, %p209
      %p212 = scmp.ne.s32.totalorder %s195, %s211
      %p213 = scmp.eq.s32.totalorder %s21, 0
      %p214 = por %p212, %p213
      %p215 = scmp.le.s32.totalorder 1, %s15
      %p216 = scmp.lt.s32.totalorder %s15, 3
      %p217 = pnand %p215, %p216
      %p218 = pneg %p217
      // Predicated region
      $region9: #{tpu_custom_call.1} parent=5 // pred_check
        _
      $region10: #{tpu_custom_call.1} parent=5 // pred_check_branch
        %220 = sbr.rel (%p217) target = $region12
      $region11: #{tpu_custom_call.1} parent=5 // pred_region
        %s221 = ssub.s32 %s15, 1
        // Predicated region
        $region13: #{tpu_custom_call.1} parent=11 // pred_check
          %p222 = pneg %p158
        $region14: #{tpu_custom_call.1} parent=11 // pred_check_branch
          %224 = sbr.rel (%p222) target = $region16
        $region15: #{tpu_custom_call.1} parent=11 // pred_region
          _
        $region16: #{tpu_custom_call.1} parent=11 // pred_fallthru
          _
        // Predicated region
        $region17: #{tpu_custom_call.1} parent=11 // pred_check
          %p225 = pneg %p179
        $region18: #{tpu_custom_call.1} parent=11 // pred_check_branch
          %227 = sbr.rel (%p225) target = $region20
        $region19: #{tpu_custom_call.1} parent=11 // pred_region
          _
        $region20: #{tpu_custom_call.1} parent=11 // pred_fallthru
          _
      $region12: #{tpu_custom_call.1} parent=5 // pred_fallthru
        _
      %p228 = scmp.lt.s32.totalorder %s15, 2
      // Predicated region
      $region21: #{tpu_custom_call.1} parent=5 // pred_check
        %p229 = pneg %p228
      $region22: #{tpu_custom_call.1} parent=5 // pred_check_branch
        %231 = sbr.rel (%p229) target = $region24
      $region23: #{tpu_custom_call.1} parent=5 // pred_region
        // Predicated region
        $region25: #{tpu_custom_call.1} parent=23 // pred_check
          %p232 = pneg %p47
        $region26: #{tpu_custom_call.1} parent=23 // pred_check_branch
          %234 = sbr.rel (%p232) target = $region28
        $region27: #{tpu_custom_call.1} parent=23 // pred_region
          %p235 = scmp.lt.s32.totalorder %s22, 1
          %s236 = scalar_select %p235, %s22, 1
          %s237 = scalar_lea.vmem %s0, %s236
        $region28: #{tpu_custom_call.1} parent=23 // pred_fallthru
          _
        // Predicated region
        $region29: #{tpu_custom_call.1} parent=23 // pred_check
          %p238 = pneg %p75
        $region30: #{tpu_custom_call.1} parent=23 // pred_check_branch
          %240 = sbr.rel (%p238) target = $region32
        $region31: #{tpu_custom_call.1} parent=23 // pred_region
          %s241 = smul.u32 2, %s23
          %p242 = scmp.lt.s32.totalorder %s22, 1
          %s243 = scalar_select %p242, %s22, 1
          %p244 = scmp.lt.s32.totalorder %s241, 1
          %s245 = scalar_select %p244, %s241, 1
          %s246 = smul.addr %s245, 8
          %s247 = smul.addr %s243, 16
          %s248 = sadd.s32 %s246, %s247
          %s249 = smul.addr %s248, 4
          %s250 = scalar_lea.vmem %s1, %s249
          %s251 = smul.u32 2, %s23
        $region32: #{tpu_custom_call.1} parent=23 // pred_fallthru
          _
        // Predicated region
        $region33: #{tpu_custom_call.1} parent=23 // pred_check
          %p252 = pneg %p103
        $region34: #{tpu_custom_call.1} parent=23 // pred_check_branch
          %254 = sbr.rel (%p252) target = $region36
        $region35: #{tpu_custom_call.1} parent=23 // pred_region
          %s255 = smul.u32 2, %s23
          %p256 = scmp.lt.s32.totalorder %s22, 1
          %s257 = scalar_select %p256, %s22, 1
          %p258 = scmp.lt.s32.totalorder %s255, 1
          %s259 = scalar_select %p258, %s255, 1
          %s260 = smul.addr %s259, 8
          %s261 = smul.addr %s257, 16
          %s262 = sadd.s32 %s260, %s261
          %s263 = smul.addr %s262, 4
          %s264 = scalar_lea.vmem %s2, %s263
          %s265 = smul.u32 2, %s23
        $region36: #{tpu_custom_call.1} parent=23 // pred_fallthru
          _
        // Predicated region
        $region37: #{tpu_custom_call.1} parent=23 // pred_check
          %p266 = pneg %p131
        $region38: #{tpu_custom_call.1} parent=23 // pred_check_branch
          %268 = sbr.rel (%p266) target = $region40
        $region39: #{tpu_custom_call.1} parent=23 // pred_region
          %s269 = smul.u32 2, %s23
          %p270 = scmp.lt.s32.totalorder %s22, 1
          %s271 = scalar_select %p270, %s22, 1
          %p272 = scmp.lt.s32.totalorder %s269, 1
          %s273 = scalar_select %p272, %s269, 1
          %s274 = smul.addr %s273, 8
          %s275 = smul.addr %s271, 16
          %s276 = sadd.s32 %s274, %s275
          %s277 = smul.addr %s276, 4
          %s278 = scalar_lea.vmem %s3, %s277
          %s279 = smul.u32 2, %s23
        $region40: #{tpu_custom_call.1} parent=23 // pred_fallthru
          _
      $region24: #{tpu_custom_call.1} parent=5 // pred_fallthru
        _
      %p280 = scmp.le.s32.totalorder 1, %s15
      %p281 = scmp.lt.s32.totalorder %s15, 3
      %p282 = pnand %p280, %p281
      %p283 = pneg %p282
      // Predicated region
      $region41: #{tpu_custom_call.1} parent=5 // pred_check
        _
      $region42: #{tpu_custom_call.1} parent=5 // pred_check_branch
        %285 = sbr.rel (%p282) target = $region44
      $region43: #{tpu_custom_call.1} parent=5 // pred_region
        %s286 = ssub.s32 %s15, 1
        %p287 = scmp.lt.s32.totalorder %s24, 1
        %s288 = scalar_select %p287, %s24, 1
        %s289 = scalar_lea.vmem %s0, %s288
        %p290 = pneg %p53
        %p291 = pneg %p50
        %s292 = smul.u32 2, %s25
        %p293 = scmp.lt.s32.totalorder %s24, 1
        %s294 = scalar_select %p293, %s24, 1
        %p295 = scmp.lt.s32.totalorder %s292, 1
        %s296 = scalar_select %p295, %s292, 1
        %s297 = smul.addr %s296, 8
        %s298 = smul.addr %s294, 16
        %s299 = sadd.s32 %s297, %s298
        %s300 = smul.addr %s299, 4
        %s301 = scalar_lea.vmem %s1, %s300
        %p302 = pneg %p81
        %p303 = pneg %p78
        %s304 = smul.u32 2, %s25
        %p305 = scmp.lt.s32.totalorder %s24, 1
        %s306 = scalar_select %p305, %s24, 1
        %p307 = scmp.lt.s32.totalorder %s304, 1
        %s308 = scalar_select %p307, %s304, 1
        %s309 = smul.addr %s308, 8
        %s310 = smul.addr %s306, 16
        %s311 = sadd.s32 %s309, %s310
        %s312 = smul.addr %s311, 4
        %s313 = scalar_lea.vmem %s2, %s312
        %p314 = pneg %p109
        %p315 = pneg %p106
        %s316 = smul.u32 2, %s25
        %p317 = scmp.lt.s32.totalorder %s24, 1
        %s318 = scalar_select %p317, %s24, 1
        %p319 = scmp.lt.s32.totalorder %s316, 1
        %s320 = scalar_select %p319, %s316, 1
        %s321 = smul.addr %s320, 8
        %s322 = smul.addr %s318, 16
        %s323 = sadd.s32 %s321, %s322
        %s324 = smul.addr %s323, 4
        %s325 = scalar_lea.vmem %s3, %s324
        %p326 = pneg %p137
        %p327 = pneg %p134
        %p328 = pneg %p158
        %p329 = pneg %p155
        %p330 = pneg %p179
        %p331 = pneg %p176
        %p332 = pneg %p207
        %p333 = pneg %p204
        %s334 = sand.u32 %s194, 1
        %s335 = scalar_lea.sflag [#allocation3], %s334
        %s336 = sand.u32 %s194, 1
        %s337 = smul.addr %s336, 64
        %s338 = scalar_lea.vmem [#allocation2], %s337
        %p339 = scmp.lt.s32.totalorder %s24, 1
        %s340 = scalar_select %p339, %s24, 1
        %s341 = scalar_lea.vmem %s0, %s340
        %s342 = smul.u32 2, %s25
        %p343 = scmp.lt.s32.totalorder %s24, 1
        %s344 = scalar_select %p343, %s24, 1
        %p345 = scmp.lt.s32.totalorder %s342, 1
        %s346 = scalar_select %p345, %s342, 1
        %s347 = smul.addr %s346, 8
        %s348 = smul.addr %s344, 16
        %s349 = sadd.s32 %s347, %s348
        %s350 = smul.addr %s349, 4
        %s351 = scalar_lea.vmem %s1, %s350
        %s352 = smul.u32 2, %s25
        %s353 = smul.u32 2, %s25
        %p354 = scmp.lt.s32.totalorder %s24, 1
        %s355 = scalar_select %p354, %s24, 1
        %p356 = scmp.lt.s32.totalorder %s353, 1
        %s357 = scalar_select %p356, %s353, 1
        %s358 = smul.addr %s357, 8
        %s359 = smul.addr %s355, 16
        %s360 = sadd.s32 %s358, %s359
        %s361 = smul.addr %s360, 4
        %s362 = scalar_lea.vmem %s2, %s361
        %s363 = smul.u32 2, %s25
        %s364 = smul.u32 2, %s25
        %p365 = scmp.lt.s32.totalorder %s24, 1
        %s366 = scalar_select %p365, %s24, 1
        %p367 = scmp.lt.s32.totalorder %s364, 1
        %s368 = scalar_select %p367, %s364, 1
        %s369 = smul.addr %s368, 8
        %s370 = smul.addr %s366, 16
        %s371 = sadd.s32 %s369, %s370
        %s372 = smul.addr %s371, 4
        %s373 = scalar_lea.vmem %s3, %s372
        %s374 = smul.u32 2, %s25
        %v376 = vld [vmem:[%s341] sm:$0x1]
        %v377 = vld [vmem:[%s4] sm:$0xf]
        %v378 = vld [vmem:[%s4 + $0x4] sm:$0xf]
        %v379 = vld [vmem:[%s4 + $0x8] sm:$0xf]
        %v380 = vld [vmem:[%s4 + $0xc] sm:$0xf]
        %v381 = vld [vmem:[%s4 + $0x10] sm:$0xf]
        %v382 = vld [vmem:[%s4 + $0x14] sm:$0xf]
        %v383 = vld [vmem:[%s4 + $0x18] sm:$0xf]
        %v384 = vld [vmem:[%s4 + $0x1c] sm:$0xf]
        %v385 = vld [vmem:[%s4 + $0x20] sm:$0xf]
        %v386 = vld [vmem:[%s4 + $0x24] sm:$0xf]
        %v387 = vld [vmem:[%s4 + $0x28] sm:$0xf]
        %v388 = vld [vmem:[%s4 + $0x2c] sm:$0xf]
        %v389 = vld [vmem:[%s4 + $0x30] sm:$0xf]
        %v390 = vld [vmem:[%s4 + $0x34] sm:$0xf]
        %v391 = vld [vmem:[%s4 + $0x38] sm:$0xf]
        %v392 = vld [vmem:[%s4 + $0x3c] sm:$0xf]
        %v393 = vld [vmem:[%s4 + $0x40] sm:$0xf]
        %v394 = vld [vmem:[%s4 + $0x44] sm:$0xf]
        %v395 = vld [vmem:[%s4 + $0x48] sm:$0xf]
        %v396 = vld [vmem:[%s4 + $0x4c] sm:$0xf]
        %v397 = vld [vmem:[%s4 + $0x50] sm:$0xf]
        %v398 = vld [vmem:[%s4 + $0x54] sm:$0xf]
        %v399 = vld [vmem:[%s4 + $0x58] sm:$0xf]
        %v400 = vld [vmem:[%s4 + $0x5c] sm:$0xf]
        %v401 = vld [vmem:[%s4 + $0x60] sm:$0xf]
        %v402 = vld [vmem:[%s4 + $0x64] sm:$0xf]
        %v403 = vld [vmem:[%s4 + $0x68] sm:$0xf]
        %v404 = vld [vmem:[%s4 + $0x6c] sm:$0xf]
        %v405 = vld [vmem:[%s4 + $0x70] sm:$0xf]
        %v406 = vld [vmem:[%s4 + $0x74] sm:$0xf]
        %v407 = vld [vmem:[%s4 + $0x78] sm:$0xf]
        %v408 = vld [vmem:[%s4 + $0x7c] sm:$0xf]
        %v409 = vld [vmem:[%s4 + $0x80] sm:$0xf]
        %v410 = vld [vmem:[%s4 + $0x84] sm:$0xf]
        %v411 = vld [vmem:[%s4 + $0x88] sm:$0xf]
        %v412 = vld [vmem:[%s4 + $0x8c] sm:$0xf]
        %v413 = vld [vmem:[%s4 + $0x90] sm:$0xf]
        %v414 = vld [vmem:[%s4 + $0x94] sm:$0xf]
        %v415 = vld [vmem:[%s4 + $0x98] sm:$0xf]
        %v416 = vld [vmem:[%s4 + $0x9c] sm:$0xf]
        %v417 = vld [vmem:[%s4 + $0xa0] sm:$0xf]
        %v418 = vld [vmem:[%s4 + $0xa4] sm:$0xf]
        %v419 = vld [vmem:[%s4 + $0xa8] sm:$0xf]
        %v420 = vld [vmem:[%s4 + $0xac] sm:$0xf]
        %v421 = vld [vmem:[%s4 + $0xb0] sm:$0xf]
        %v422 = vld [vmem:[%s4 + $0xb4] sm:$0xf]
        %v423 = vld [vmem:[%s4 + $0xb8] sm:$0xf]
        %v424 = vld [vmem:[%s4 + $0xbc] sm:$0xf]
        %v425 = vld [vmem:[%s4 + $0xc0] sm:$0xf]
        %v426 = vld [vmem:[%s4 + $0xc4] sm:$0xf]
        %v427 = vld [vmem:[%s4 + $0xc8] sm:$0xf]
        %v428 = vld [vmem:[%s4 + $0xcc] sm:$0xf]
        %v429 = vld [vmem:[%s4 + $0xd0] sm:$0xf]
        %v430 = vld [vmem:[%s4 + $0xd4] sm:$0xf]
        %v431 = vld [vmem:[%s4 + $0xd8] sm:$0xf]
        %v432 = vld [vmem:[%s4 + $0xdc] sm:$0xf]
        %v433 = vld [vmem:[%s4 + $0xe0] sm:$0xf]
        %v434 = vld [vmem:[%s4 + $0xe4] sm:$0xf]
        %v435 = vld [vmem:[%s4 + $0xe8] sm:$0xf]
        %v436 = vld [vmem:[%s4 + $0xec] sm:$0xf]
        %v437 = vld [vmem:[%s4 + $0xf0] sm:$0xf]
        %v438 = vld [vmem:[%s4 + $0xf4] sm:$0xf]
        %v439 = vld [vmem:[%s4 + $0xf8] sm:$0xf]
        %v440 = vld [vmem:[%s4 + $0xfc] sm:$0xf]
        %v441 = vld [vmem:[%s5] sm:$0xf]
        %v442 = vld [vmem:[%s5 + $0x4] sm:$0xf]
        %v443 = vld [vmem:[%s5 + $0x8] sm:$0xf]
        %v444 = vld [vmem:[%s5 + $0xc] sm:$0xf]
        %v445 = vld [vmem:[%s5 + $0x10] sm:$0xf]
        %v446 = vld [vmem:[%s5 + $0x14] sm:$0xf]
        %v447 = vld [vmem:[%s5 + $0x18] sm:$0xf]
        %v448 = vld [vmem:[%s5 + $0x1c] sm:$0xf]
        %v449 = vld [vmem:[%s5 + $0x20] sm:$0xf]
        %v450 = vld [vmem:[%s5 + $0x24] sm:$0xf]
        %v451 = vld [vmem:[%s5 + $0x28] sm:$0xf]
        %v452 = vld [vmem:[%s5 + $0x2c] sm:$0xf]
        %v453 = vld [vmem:[%s5 + $0x30] sm:$0xf]
        %v454 = vld [vmem:[%s5 + $0x34] sm:$0xf]
        %v455 = vld [vmem:[%s5 + $0x38] sm:$0xf]
        %v456 = vld [vmem:[%s5 + $0x3c] sm:$0xf]
        %v457 = vld [vmem:[%s5 + $0x40] sm:$0xf]
        %v458 = vld [vmem:[%s5 + $0x44] sm:$0xf]
        %v459 = vld [vmem:[%s5 + $0x48] sm:$0xf]
        %v460 = vld [vmem:[%s5 + $0x4c] sm:$0xf]
        %v461 = vld [vmem:[%s5 + $0x50] sm:$0xf]
        %v462 = vld [vmem:[%s5 + $0x54] sm:$0xf]
        %v463 = vld [vmem:[%s5 + $0x58] sm:$0xf]
        %v464 = vld [vmem:[%s5 + $0x5c] sm:$0xf]
        %v465 = vld [vmem:[%s5 + $0x60] sm:$0xf]
        %v466 = vld [vmem:[%s5 + $0x64] sm:$0xf]
        %v467 = vld [vmem:[%s5 + $0x68] sm:$0xf]
        %v468 = vld [vmem:[%s5 + $0x6c] sm:$0xf]
        %v469 = vld [vmem:[%s5 + $0x70] sm:$0xf]
        %v470 = vld [vmem:[%s5 + $0x74] sm:$0xf]
        %v471 = vld [vmem:[%s5 + $0x78] sm:$0xf]
        %v472 = vld [vmem:[%s5 + $0x7c] sm:$0xf]
        %v473 = vld [vmem:[%s5 + $0x80] sm:$0xf]
        %v474 = vld [vmem:[%s5 + $0x84] sm:$0xf]
        %v475 = vld [vmem:[%s5 + $0x88] sm:$0xf]
        %v476 = vld [vmem:[%s5 + $0x8c] sm:$0xf]
        %v477 = vld [vmem:[%s5 + $0x90] sm:$0xf]
        %v478 = vld [vmem:[%s5 + $0x94] sm:$0xf]
        %v479 = vld [vmem:[%s5 + $0x98] sm:$0xf]
        %v480 = vld [vmem:[%s5 + $0x9c] sm:$0xf]
        %v481 = vld [vmem:[%s5 + $0xa0] sm:$0xf]
        %v482 = vld [vmem:[%s5 + $0xa4] sm:$0xf]
        %v483 = vld [vmem:[%s5 + $0xa8] sm:$0xf]
        %v484 = vld [vmem:[%s5 + $0xac] sm:$0xf]
        %v485 = vld [vmem:[%s5 + $0xb0] sm:$0xf]
        %v486 = vld [vmem:[%s5 + $0xb4] sm:$0xf]
        %v487 = vld [vmem:[%s5 + $0xb8] sm:$0xf]
        %v488 = vld [vmem:[%s5 + $0xbc] sm:$0xf]
        %v489 = vld [vmem:[%s5 + $0xc0] sm:$0xf]
        %v490 = vld [vmem:[%s5 + $0xc4] sm:$0xf]
        %v491 = vld [vmem:[%s5 + $0xc8] sm:$0xf]
        %v492 = vld [vmem:[%s5 + $0xcc] sm:$0xf]
        %v493 = vld [vmem:[%s5 + $0xd0] sm:$0xf]
        %v494 = vld [vmem:[%s5 + $0xd4] sm:$0xf]
        %v495 = vld [vmem:[%s5 + $0xd8] sm:$0xf]
        %v496 = vld [vmem:[%s5 + $0xdc] sm:$0xf]
        %v497 = vld [vmem:[%s5 + $0xe0] sm:$0xf]
        %v498 = vld [vmem:[%s5 + $0xe4] sm:$0xf]
        %v499 = vld [vmem:[%s5 + $0xe8] sm:$0xf]
        %v500 = vld [vmem:[%s5 + $0xec] sm:$0xf]
        %v501 = vld [vmem:[%s5 + $0xf0] sm:$0xf]
        %v502 = vld [vmem:[%s5 + $0xf4] sm:$0xf]
        %v503 = vld [vmem:[%s5 + $0xf8] sm:$0xf]
        %v504 = vld [vmem:[%s5 + $0xfc] sm:$0xf]
        %v505 = vld [vmem:[%s351] sm:$0xf]
        %v506 = vld [vmem:[%s351 + $0x4] sm:$0xf]
        %v507 = vld [vmem:[%s351 + $0x8] sm:$0xf]
        %v508 = vld [vmem:[%s351 + $0xc] sm:$0xf]
        %v509 = vld [vmem:[%s351 + $0x10] sm:$0xf]
        %v510 = vld [vmem:[%s351 + $0x14] sm:$0xf]
        %v511 = vld [vmem:[%s351 + $0x18] sm:$0xf]
        %v512 = vld [vmem:[%s351 + $0x1c] sm:$0xf]
        %v513 = vld [vmem:[%s362] sm:$0xf]
        %v514 = vld [vmem:[%s362 + $0x4] sm:$0xf]
        %v515 = vld [vmem:[%s362 + $0x8] sm:$0xf]
        %v516 = vld [vmem:[%s362 + $0xc] sm:$0xf]
        %v517 = vld [vmem:[%s362 + $0x10] sm:$0xf]
        %v518 = vld [vmem:[%s362 + $0x14] sm:$0xf]
        %v519 = vld [vmem:[%s362 + $0x18] sm:$0xf]
        %v520 = vld [vmem:[%s362 + $0x1c] sm:$0xf]
        %v521 = vld [vmem:[%s373] sm:$0xf]
        %v522 = vld [vmem:[%s373 + $0x4] sm:$0xf]
        %v523 = vld [vmem:[%s373 + $0x8] sm:$0xf]
        %v524 = vld [vmem:[%s373 + $0xc] sm:$0xf]
        %v525 = vld [vmem:[%s373 + $0x10] sm:$0xf]
        %v526 = vld [vmem:[%s373 + $0x14] sm:$0xf]
        %v527 = vld [vmem:[%s373 + $0x18] sm:$0xf]
        %v528 = vld [vmem:[%s373 + $0x1c] sm:$0xf]
        %v529 = vadd.bf16 %v513, %v441
        %v530 = vadd.bf16 %v514, %v442
        %v531 = vadd.bf16 %v515, %v443
        %v532 = vadd.bf16 %v516, %v444
        %v533 = vadd.bf16 %v517, %v445
        %v534 = vadd.bf16 %v518, %v446
        %v535 = vadd.bf16 %v519, %v447
        %v536 = vadd.bf16 %v520, %v448
        %v537 = vadd.bf16 %v513, %v449
        %v538 = vadd.bf16 %v514, %v450
        %v539 = vadd.bf16 %v515, %v451
        %v540 = vadd.bf16 %v516, %v452
        %v541 = vadd.bf16 %v517, %v453
        %v542 = vadd.bf16 %v518, %v454
        %v543 = vadd.bf16 %v519, %v455
        %v544 = vadd.bf16 %v520, %v456
        %v545 = vadd.bf16 %v513, %v457
        %v546 = vadd.bf16 %v514, %v458
        %v547 = vadd.bf16 %v515, %v459
        %v548 = vadd.bf16 %v516, %v460
        %v549 = vadd.bf16 %v517, %v461
        %v550 = vadd.bf16 %v518, %v462
        %v551 = vadd.bf16 %v519, %v463
        %v552 = vadd.bf16 %v520, %v464
        %v553 = vadd.bf16 %v513, %v465
        %v554 = vadd.bf16 %v514, %v466
        %v555 = vadd.bf16 %v515, %v467
        %v556 = vadd.bf16 %v516, %v468
        %v557 = vadd.bf16 %v517, %v469
        %v558 = vadd.bf16 %v518, %v470
        %v559 = vadd.bf16 %v519, %v471
        %v560 = vadd.bf16 %v520, %v472
        %v561 = vadd.bf16 %v513, %v473
        %v562 = vadd.bf16 %v514, %v474
        %v563 = vadd.bf16 %v515, %v475
        %v564 = vadd.bf16 %v516, %v476
        %v565 = vadd.bf16 %v517, %v477
        %v566 = vadd.bf16 %v518, %v478
        %v567 = vadd.bf16 %v519, %v479
        %v568 = vadd.bf16 %v520, %v480
        %v569 = vadd.bf16 %v513, %v481
        %v570 = vadd.bf16 %v514, %v482
        %v571 = vadd.bf16 %v515, %v483
        %v572 = vadd.bf16 %v516, %v484
        %v573 = vadd.bf16 %v517, %v485
        %v574 = vadd.bf16 %v518, %v486
        %v575 = vadd.bf16 %v519, %v487
        %v576 = vadd.bf16 %v520, %v488
        %v577 = vadd.bf16 %v513, %v489
        %v578 = vadd.bf16 %v514, %v490
        %v579 = vadd.bf16 %v515, %v491
        %v580 = vadd.bf16 %v516, %v492
        %v581 = vadd.bf16 %v517, %v493
        %v582 = vadd.bf16 %v518, %v494
        %v583 = vadd.bf16 %v519, %v495
        %v584 = vadd.bf16 %v520, %v496
        %v585 = vadd.bf16 %v513, %v497
        %v586 = vadd.bf16 %v514, %v498
        %v587 = vadd.bf16 %v515, %v499
        %v588 = vadd.bf16 %v516, %v500
        %v589 = vadd.bf16 %v517, %v501
        %v590 = vadd.bf16 %v518, %v502
        %v591 = vadd.bf16 %v519, %v503
        %v592 = vadd.bf16 %v520, %v504
        %v593 = vcombine.low %v505, %v509
        %v595 = vunpack.c.l.s4 1983009808
        %v596 = vunpack.c.0.s8 %v595
        %v597 = vlaneseq
        %v598 = vshrl.u32 %v597, 7
        %v599 = vsub.s32 %v596, %v598
        %v600 = vrot.slane %v593, %v599
        %v601 = vcombine.low %v507, %v511
        %v603 = vunpack.c.l.s4 1983009808
        %v604 = vunpack.c.0.s8 %v603
        %v605 = vlaneseq
        %v606 = vshrl.u32 %v605, 7
        %v607 = vsub.s32 %v604, %v606
        %v608 = vrot.slane %v601, %v607
        %v609 = vcombine.low %v600, %v608
        %v610 = vcombine.high %v600, %v608
        %v612 = vunpack.c.l.s4 1934713408
        %v613 = vunpack.c.0.s8 %v612
        %v614 = vlaneseq
        %v615 = vshrl.u32 %v614, 7
        %v616 = vsub.s32 %v613, %v615
        %v617 = vrot.slane %v609, %v616
        %v619 = vunpack.c.l.s4 1934713408
        %v620 = vunpack.c.0.s8 %v619
        %v621 = vlaneseq
        %v622 = vshrl.u32 %v621, 7
        %v623 = vsub.s32 %v620, %v622
        %v624 = vrot.slane %v610, %v623
        %v625 = vcombine.high %v617, 0
        %v626 = vcombine.high %v624, 0
        %v627 = vcombine.low %v506, %v510
        %v629 = vunpack.c.l.s4 1983009808
        %v630 = vunpack.c.0.s8 %v629
        %v631 = vlaneseq
        %v632 = vshrl.u32 %v631, 7
        %v633 = vsub.s32 %v630, %v632
        %v634 = vrot.slane %v627, %v633
        %v635 = vcombine.low %v508, %v512
        %v637 = vunpack.c.l.s4 1983009808
        %v638 = vunpack.c.0.s8 %v637
        %v639 = vlaneseq
        %v640 = vshrl.u32 %v639, 7
        %v641 = vsub.s32 %v638, %v640
        %v642 = vrot.slane %v635, %v641
        %v643 = vcombine.low %v634, %v642
        %v644 = vcombine.high %v634, %v642
        %v646 = vunpack.c.l.s4 1934713408
        %v647 = vunpack.c.0.s8 %v646
        %v648 = vlaneseq
        %v649 = vshrl.u32 %v648, 7
        %v650 = vsub.s32 %v647, %v649
        %v651 = vrot.slane %v643, %v650
        %v653 = vunpack.c.l.s4 1934713408
        %v654 = vunpack.c.0.s8 %v653
        %v655 = vlaneseq
        %v656 = vshrl.u32 %v655, 7
        %v657 = vsub.s32 %v654, %v656
        %v658 = vrot.slane %v644, %v657
        %v659 = vcombine.high %v651, 0
        %v660 = vcombine.high %v658, 0
        %v663 = vpack.i.b16 %v651, %v617
        %v664 = vshrl.u32 %v617, 16
        %v665 = vshrl.u32 %v651, 16
        %v666 = vpack.i.b16 %v665, %v664
        %v669 = vpack.i.b16 %v659, %v625
        %v670 = vshrl.u32 %v625, 16
        %v671 = vshrl.u32 %v659, 16
        %v672 = vpack.i.b16 %v671, %v670
        %v675 = vpack.i.b16 %v658, %v624
        %v676 = vshrl.u32 %v624, 16
        %v677 = vshrl.u32 %v658, 16
        %v678 = vpack.i.b16 %v677, %v676
        %v681 = vpack.i.b16 %v660, %v626
        %v682 = vshrl.u32 %v626, 16
        %v683 = vshrl.u32 %v660, 16
        %v684 = vpack.i.b16 %v683, %v682
        %v693 = vunpack.c.l.b16 %v377
        %v694 = vunpack.c.l.b16 %v378
        %v695 = vunpack.c.l.b16 %v379
        %v696 = vunpack.c.l.b16 %v380
        %v697 = vunpack.c.l.b16 %v381
        %v698 = vunpack.c.l.b16 %v382
        %v699 = vunpack.c.l.b16 %v383
        %v700 = vunpack.c.l.b16 %v384
        %v701 = vpack.c.b16 %v694, %v693
        %v702 = vpack.c.b16 %v696, %v695
        %v703 = vpack.c.b16 %v698, %v697
        %v704 = vpack.c.b16 %v700, %v699
        %vm705 = vcmask 261120
        %v707 = vsel %vm705, %v663, 0
        %v710 = vsel %vm705, %v701, 0
        %v713 = vsel %vm705, %v702, 0
        %v716 = vsel %vm705, %v703, 0
        %v719 = vsel %vm705, %v704, 0
        %721 = vmatprep.subr.bf16.mxu0 0
        %722 = vmatpush1.bf16.xpose.msra.mxu0 %v710
        %723 = vmatprep.subr.bf16.mxu0 0
        %724 = vmatpush1.bf16.xpose.msra.mxu0 %v713
        %725 = vmatprep.subr.bf16.mxu0 0
        %726 = vmatpush1.bf16.xpose.msra.mxu0 %v716
        %727 = vmatprep.subr.bf16.mxu0 0
        %728 = vmatpush1.bf16.xpose.msra.mxu0 %v719
        %729 = vmatprep.subr.bf16.mxu0 0
        %730 = vmatpush1.bf16.xpose.msra.mxu0 0
        %731 = vmatprep.subr.bf16.mxu0 0
        %732 = vmatpush1.bf16.xpose.msra.mxu0 0
        %733 = vmatprep.subr.bf16.mxu0 0
        %734 = vmatpush1.bf16.xpose.msra.mxu0 0
        %735 = vmatprep.subr.bf16.mxu0 0
        %736 = vmatpush1.bf16.xpose.msra.mxu0 0
        %737 = vmatprep.subr.bf16.mxu0 0
        %738 = vmatpush1.bf16.xpose.msra.mxu0 0
        %739 = vmatprep.subr.bf16.mxu0 0
        %740 = vmatpush1.bf16.xpose.msra.mxu0 0
        %741 = vmatprep.subr.bf16.mxu0 0
        %742 = vmatpush1.bf16.xpose.msra.mxu0 0
        %743 = vmatprep.subr.bf16.mxu0 0
        %744 = vmatpush1.bf16.xpose.msra.mxu0 0
        %745 = vmatprep.subr.bf16.mxu0 0
        %746 = vmatpush1.bf16.xpose.msra.mxu0 0
        %747 = vmatprep.subr.bf16.mxu0 0
        %748 = vmatpush1.bf16.xpose.msra.mxu0 0
        %749 = vmatprep.subr.bf16.mxu0 0
        %750 = vmatpush1.bf16.xpose.msra.mxu0 0
        %751 = vmatprep.subr.bf16.mxu0 0
        %752 = vmatpush1.bf16.xpose.msra.mxu0 0
        %753 = vmatprep.mubr.bf16.mxu0 0
        %754 = vmatmul.mubr.bf16.gmra.mrb[0].mxu0 %v707
        %v755 = vpop.f32.mrb[0].mxu0
        %v756 = vadd.f32 0.0, %v755
        %v757 = vpop.f32.mrb[0].mxu0
        %v758 = vpop.f32.mrb[0].mxu0
        %v759 = vpop.f32.mrb[0].mxu0
        %760 = vdwg.mxu0
        %v769 = vunpack.c.l.b16 %v385
        %v770 = vunpack.c.l.b16 %v386
        %v771 = vunpack.c.l.b16 %v387
        %v772 = vunpack.c.l.b16 %v388
        %v773 = vunpack.c.l.b16 %v389
        %v774 = vunpack.c.l.b16 %v390
        %v775 = vunpack.c.l.b16 %v391
        %v776 = vunpack.c.l.b16 %v392
        %v777 = vpack.c.b16 %v770, %v769
        %v778 = vpack.c.b16 %v772, %v771
        %v779 = vpack.c.b16 %v774, %v773
        %v780 = vpack.c.b16 %v776, %v775
        %v782 = vsel %vm705, %v666, 0
        %v785 = vsel %vm705, %v777, 0
        %v788 = vsel %vm705, %v778, 0
        %v791 = vsel %vm705, %v779, 0
        %v794 = vsel %vm705, %v780, 0
        %796 = vmatprep.subr.bf16.mxu0 0
        %797 = vmatpush1.bf16.xpose.msra.mxu0 %v785
        %798 = vmatprep.subr.bf16.mxu0 0
        %799 = vmatpush1.bf16.xpose.msra.mxu0 %v788
        %800 = vmatprep.subr.bf16.mxu0 0
        %801 = vmatpush1.bf16.xpose.msra.mxu0 %v791
        %802 = vmatprep.subr.bf16.mxu0 0
        %803 = vmatpush1.bf16.xpose.msra.mxu0 %v794
        %804 = vmatprep.subr.bf16.mxu0 0
        %805 = vmatpush1.bf16.xpose.msra.mxu0 0
        %806 = vmatprep.subr.bf16.mxu0 0
        %807 = vmatpush1.bf16.xpose.msra.mxu0 0
        %808 = vmatprep.subr.bf16.mxu0 0
        %809 = vmatpush1.bf16.xpose.msra.mxu0 0
        %810 = vmatprep.subr.bf16.mxu0 0
        %811 = vmatpush1.bf16.xpose.msra.mxu0 0
        %812 = vmatprep.subr.bf16.mxu0 0
        %813 = vmatpush1.bf16.xpose.msra.mxu0 0
        %814 = vmatprep.subr.bf16.mxu0 0
        %815 = vmatpush1.bf16.xpose.msra.mxu0 0
        %816 = vmatprep.subr.bf16.mxu0 0
        %817 = vmatpush1.bf16.xpose.msra.mxu0 0
        %818 = vmatprep.subr.bf16.mxu0 0
        %819 = vmatpush1.bf16.xpose.msra.mxu0 0
        %820 = vmatprep.subr.bf16.mxu0 0
        %821 = vmatpush1.bf16.xpose.msra.mxu0 0
        %822 = vmatprep.subr.bf16.mxu0 0
        %823 = vmatpush1.bf16.xpose.msra.mxu0 0
        %824 = vmatprep.subr.bf16.mxu0 0
        %825 = vmatpush1.bf16.xpose.msra.mxu0 0
        %826 = vmatprep.subr.bf16.mxu0 0
        %827 = vmatpush1.bf16.xpose.msra.mxu0 0
        %828 = vmatprep.mubr.bf16.mxu0 0
        %829 = vmatmul.mubr.bf16.gmra.mrb[0].mxu0 %v782
        %v830 = vpop.f32.mrb[0].mxu0
        %v831 = vadd.f32 0.0, %v830
        %v832 = vpop.f32.mrb[0].mxu0
        %v833 = vpop.f32.mrb[0].mxu0
        %v834 = vpop.f32.mrb[0].mxu0
        %835 = vdwg.mxu0
        %v844 = vunpack.c.l.b16 %v393
        %v845 = vunpack.c.l.b16 %v394
        %v846 = vunpack.c.l.b16 %v395
        %v847 = vunpack.c.l.b16 %v396
        %v848 = vunpack.c.l.b16 %v397
        %v849 = vunpack.c.l.b16 %v398
        %v850 = vunpack.c.l.b16 %v399
        %v851 = vunpack.c.l.b16 %v400
        %v852 = vpack.c.b16 %v845, %v844
        %v853 = vpack.c.b16 %v847, %v846
        %v854 = vpack.c.b16 %v849, %v848
        %v855 = vpack.c.b16 %v851, %v850
        %v857 = vsel %vm705, %v669, 0
        %v860 = vsel %vm705, %v852, 0
        %v863 = vsel %vm705, %v853, 0
        %v866 = vsel %vm705, %v854, 0
        %v869 = vsel %vm705, %v855, 0
        %871 = vmatprep.subr.bf16.mxu0 0
        %872 = vmatpush1.bf16.xpose.msra.mxu0 %v860
        %873 = vmatprep.subr.bf16.mxu0 0
        %874 = vmatpush1.bf16.xpose.msra.mxu0 %v863
        %875 = vmatprep.subr.bf16.mxu0 0
        %876 = vmatpush1.bf16.xpose.msra.mxu0 %v866
        %877 = vmatprep.subr.bf16.mxu0 0
        %878 = vmatpush1.bf16.xpose.msra.mxu0 %v869
        %879 = vmatprep.subr.bf16.mxu0 0
        %880 = vmatpush1.bf16.xpose.msra.mxu0 0
        %881 = vmatprep.subr.bf16.mxu0 0
        %882 = vmatpush1.bf16.xpose.msra.mxu0 0
        %883 = vmatprep.subr.bf16.mxu0 0
        %884 = vmatpush1.bf16.xpose.msra.mxu0 0
        %885 = vmatprep.subr.bf16.mxu0 0
        %886 = vmatpush1.bf16.xpose.msra.mxu0 0
        %887 = vmatprep.subr.bf16.mxu0 0
        %888 = vmatpush1.bf16.xpose.msra.mxu0 0
        %889 = vmatprep.subr.bf16.mxu0 0
        %890 = vmatpush1.bf16.xpose.msra.mxu0 0
        %891 = vmatprep.subr.bf16.mxu0 0
        %892 = vmatpush1.bf16.xpose.msra.mxu0 0
        %893 = vmatprep.subr.bf16.mxu0 0
        %894 = vmatpush1.bf16.xpose.msra.mxu0 0
        %895 = vmatprep.subr.bf16.mxu0 0
        %896 = vmatpush1.bf16.xpose.msra.mxu0 0
        %897 = vmatprep.subr.bf16.mxu0 0
        %898 = vmatpush1.bf16.xpose.msra.mxu0 0
        %899 = vmatprep.subr.bf16.mxu0 0
        %900 = vmatpush1.bf16.xpose.msra.mxu0 0
        %901 = vmatprep.subr.bf16.mxu0 0
        %902 = vmatpush1.bf16.xpose.msra.mxu0 0
        %903 = vmatprep.mubr.bf16.mxu0 0
        %904 = vmatmul.mubr.bf16.gmra.mrb[0].mxu0 %v857
        %v905 = vpop.f32.mrb[0].mxu0
        %v906 = vadd.f32 0.0, %v905
        %v907 = vpop.f32.mrb[0].mxu0
        %v908 = vpop.f32.mrb[0].mxu0
        %v909 = vpop.f32.mrb[0].mxu0
        %910 = vdwg.mxu0
        %v919 = vunpack.c.l.b16 %v401
        %v920 = vunpack.c.l.b16 %v402
        %v921 = vunpack.c.l.b16 %v403
        %v922 = vunpack.c.l.b16 %v404
        %v923 = vunpack.c.l.b16 %v405
        %v924 = vunpack.c.l.b16 %v406
        %v925 = vunpack.c.l.b16 %v407
        %v926 = vunpack.c.l.b16 %v408
        %v927 = vpack.c.b16 %v920, %v919
        %v928 = vpack.c.b16 %v922, %v921
        %v929 = vpack.c.b16 %v924, %v923
        %v930 = vpack.c.b16 %v926, %v925
        %v932 = vsel %vm705, %v672, 0
        %v935 = vsel %vm705, %v927, 0
        %v938 = vsel %vm705, %v928, 0
        %v941 = vsel %vm705, %v929, 0
        %v944 = vsel %vm705, %v930, 0
        %946 = vmatprep.subr.bf16.mxu0 0
        %947 = vmatpush1.bf16.xpose.msra.mxu0 %v935
        %948 = vmatprep.subr.bf16.mxu0 0
        %949 = vmatpush1.bf16.xpose.msra.mxu0 %v938
        %950 = vmatprep.subr.bf16.mxu0 0
        %951 = vmatpush1.bf16.xpose.msra.mxu0 %v941
        %952 = vmatprep.subr.bf16.mxu0 0
        %953 = vmatpush1.bf16.xpose.msra.mxu0 %v944
        %954 = vmatprep.subr.bf16.mxu0 0
        %955 = vmatpush1.bf16.xpose.msra.mxu0 0
        %956 = vmatprep.subr.bf16.mxu0 0
        %957 = vmatpush1.bf16.xpose.msra.mxu0 0
        %958 = vmatprep.subr.bf16.mxu0 0
        %959 = vmatpush1.bf16.xpose.msra.mxu0 0
        %960 = vmatprep.subr.bf16.mxu0 0
        %961 = vmatpush1.bf16.xpose.msra.mxu0 0
        %962 = vmatprep.subr.bf16.mxu0 0
        %963 = vmatpush1.bf16.xpose.msra.mxu0 0
        %964 = vmatprep.subr.bf16.mxu0 0
        %965 = vmatpush1.bf16.xpose.msra.mxu0 0
        %966 = vmatprep.subr.bf16.mxu0 0
        %967 = vmatpush1.bf16.xpose.msra.mxu0 0
        %968 = vmatprep.subr.bf16.mxu0 0
        %969 = vmatpush1.bf16.xpose.msra.mxu0 0
        %970 = vmatprep.subr.bf16.mxu0 0
        %971 = vmatpush1.bf16.xpose.msra.mxu0 0
        %972 = vmatprep.subr.bf16.mxu0 0
        %973 = vmatpush1.bf16.xpose.msra.mxu0 0
        %974 = vmatprep.subr.bf16.mxu0 0
        %975 = vmatpush1.bf16.xpose.msra.mxu0 0
        %976 = vmatprep.subr.bf16.mxu0 0
        %977 = vmatpush1.bf16.xpose.msra.mxu0 0
        %978 = vmatprep.mubr.bf16.mxu0 0
        %979 = vmatmul.mubr.bf16.gmra.mrb[0].mxu0 %v932
        %v980 = vpop.f32.mrb[0].mxu0
        %v981 = vadd.f32 0.0, %v980
        %v982 = vpop.f32.mrb[0].mxu0
        %v983 = vpop.f32.mrb[0].mxu0
        %v984 = vpop.f32.mrb[0].mxu0
        %985 = vdwg.mxu0
        %v994 = vunpack.c.l.b16 %v409
        %v995 = vunpack.c.l.b16 %v410
        %v996 = vunpack.c.l.b16 %v411
        %v997 = vunpack.c.l.b16 %v412
        %v998 = vunpack.c.l.b16 %v413
        %v999 = vunpack.c.l.b16 %v414
        %v1000 = vunpack.c.l.b16 %v415
        %v1001 = vunpack.c.l.b16 %v416
        %v1002 = vpack.c.b16 %v995, %v994
        %v1003 = vpack.c.b16 %v997, %v996
        %v1004 = vpack.c.b16 %v999, %v998
        %v1005 = vpack.c.b16 %v1001, %v1000
        %v1007 = vsel %vm705, %v675, 0
        %v1010 = vsel %vm705, %v1002, 0
        %v1013 = vsel %vm705, %v1003, 0
        %v1016 = vsel %vm705, %v1004, 0
        %v1019 = vsel %vm705, %v1005, 0
        %1021 = vmatprep.subr.bf16.mxu0 0
        %1022 = vmatpush1.bf16.xpose.msra.mxu0 %v1010
        %1023 = vmatprep.subr.bf16.mxu0 0
        %1024 = vmatpush1.bf16.xpose.msra.mxu0 %v1013
        %1025 = vmatprep.subr.bf16.mxu0 0
        %1026 = vmatpush1.bf16.xpose.msra.mxu0 %v1016
        %1027 = vmatprep.subr.bf16.mxu0 0
        %1028 = vmatpush1.bf16.xpose.msra.mxu0 %v1019
        %1029 = vmatprep.subr.bf16.mxu0 0
        %1030 = vmatpush1.bf16.xpose.msra.mxu0 0
        %1031 = vmatprep.subr.bf16.mxu0 0
        %1032 = vmatpush1.bf16.xpose.msra.mxu0 0
        %1033 = vmatprep.subr.bf16.mxu0 0
        %1034 = vmatpush1.bf16.xpose.msra.mxu0 0
        %1035 = vmatprep.subr.bf16.mxu0 0
        %1036 = vmatpush1.bf16.xpose.msra.mxu0 0
        %1037 = vmatprep.subr.bf16.mxu0 0
        %1038 = vmatpush1.bf16.xpose.msra.mxu0 0
        %1039 = vmatprep.subr.bf16.mxu0 0
        %1040 = vmatpush1.bf16.xpose.msra.mxu0 0
        %1041 = vmatprep.subr.bf16.mxu0 0
        %1042 = vmatpush1.bf16.xpose.msra.mxu0 0
        %1043 = vmatprep.subr.bf16.mxu0 0
        %1044 = vmatpush1.bf16.xpose.msra.mxu0 0
        %1045 = vmatprep.subr.bf16.mxu0 0
        %1046 = vmatpush1.bf16.xpose.msra.mxu0 0
        %1047 = vmatprep.subr.bf16.mxu0 0
        %1048 = vmatpush1.bf16.xpose.msra.mxu0 0
        %1049 = vmatprep.subr.bf16.mxu0 0
        %1050 = vmatpush1.bf16.xpose.msra.mxu0 0
        %1051 = vmatprep.subr.bf16.mxu0 0
        %1052 = vmatpush1.bf16.xpose.msra.mxu0 0
        %1053 = vmatprep.mubr.bf16.mxu0 0
        %1054 = vmatmul.mubr.bf16.gmra.mrb[0].mxu0 %v1007
        %v1055 = vpop.f32.mrb[0].mxu0
        %v1056 = vadd.f32 0.0, %v1055
        %v1057 = vpop.f32.mrb[0].mxu0
        %v1058 = vpop.f32.mrb[0].mxu0
        %v1059 = vpop.f32.mrb[0].mxu0
        %1060 = vdwg.mxu0
        %v1069 = vunpack.c.l.b16 %v417
        %v1070 = vunpack.c.l.b16 %v418
        %v1071 = vunpack.c.l.b16 %v419
        %v1072 = vunpack.c.l.b16 %v420
        %v1073 = vunpack.c.l.b16 %v421
        %v1074 = vunpack.c.l.b16 %v422
        %v1075 = vunpack.c.l.b16 %v423
        %v1076 = vunpack.c.l.b16 %v424
        %v1077 = vpack.c.b16 %v1070, %v1069
        %v1078 = vpack.c.b16 %v1072, %v1071
        %v1079 = vpack.c.b16 %v1074, %v1073
        %v1080 = vpack.c.b16 %v1076, %v1075
        %v1082 = vsel %vm705, %v678, 0
        %v1085 = vsel %vm705, %v1077, 0
        %v1088 = vsel %vm705, %v1078, 0
        %v1091 = vsel %vm705, %v1079, 0
        %v1094 = vsel %vm705, %v1080, 0
        %1096 = vmatprep.subr.bf16.mxu0 0
        %1097 = vmatpush1.bf16.xpose.msra.mxu0 %v1085
        %1098 = vmatprep.subr.bf16.mxu0 0
        %1099 = vmatpush1.bf16.xpose.msra.mxu0 %v1088
        %1100 = vmatprep.subr.bf16.mxu0 0
        %1101 = vmatpush1.bf16.xpose.msra.mxu0 %v1091
        %1102 = vmatprep.subr.bf16.mxu0 0
        %1103 = vmatpush1.bf16.xpose.msra.mxu0 %v1094
        %1104 = vmatprep.subr.bf16.mxu0 0
        %1105 = vmatpush1.bf16.xpose.msra.mxu0 0
        %1106 = vmatprep.subr.bf16.mxu0 0
        %1107 = vmatpush1.bf16.xpose.msra.mxu0 0
        %1108 = vmatprep.subr.bf16.mxu0 0
        %1109 = vmatpush1.bf16.xpose.msra.mxu0 0
        %1110 = vmatprep.subr.bf16.mxu0 0
        %1111 = vmatpush1.bf16.xpose.msra.mxu0 0
        %1112 = vmatprep.subr.bf16.mxu0 0
        %1113 = vmatpush1.bf16.xpose.msra.mxu0 0
        %1114 = vmatprep.subr.bf16.mxu0 0
        %1115 = vmatpush1.bf16.xpose.msra.mxu0 0
        %1116 = vmatprep.subr.bf16.mxu0 0
        %1117 = vmatpush1.bf16.xpose.msra.mxu0 0
        %1118 = vmatprep.subr.bf16.mxu0 0
        %1119 = vmatpush1.bf16.xpose.msra.mxu0 0
        %1120 = vmatprep.subr.bf16.mxu0 0
        %1121 = vmatpush1.bf16.xpose.msra.mxu0 0
        %1122 = vmatprep.subr.bf16.mxu0 0
        %1123 = vmatpush1.bf16.xpose.msra.mxu0 0
        %1124 = vmatprep.subr.bf16.mxu0 0
        %1125 = vmatpush1.bf16.xpose.msra.mxu0 0
        %1126 = vmatprep.subr.bf16.mxu0 0
        %1127 = vmatpush1.bf16.xpose.msra.mxu0 0
        %1128 = vmatprep.mubr.bf16.mxu0 0
        %1129 = vmatmul.mubr.bf16.gmra.mrb[0].mxu0 %v1082
        %v1130 = vpop.f32.mrb[0].mxu0
        %v1131 = vadd.f32 0.0, %v1130
        %v1132 = vpop.f32.mrb[0].mxu0
        %v1133 = vpop.f32.mrb[0].mxu0
        %v1134 = vpop.f32.mrb[0].mxu0
        %1135 = vdwg.mxu0
        %v1144 = vunpack.c.l.b16 %v425
        %v1145 = vunpack.c.l.b16 %v426
        %v1146 = vunpack.c.l.b16 %v427
        %v1147 = vunpack.c.l.b16 %v428
        %v1148 = vunpack.c.l.b16 %v429
        %v1149 = vunpack.c.l.b16 %v430
        %v1150 = vunpack.c.l.b16 %v431
        %v1151 = vunpack.c.l.b16 %v432
        %v1152 = vpack.c.b16 %v1145, %v1144
        %v1153 = vpack.c.b16 %v1147, %v1146
        %v1154 = vpack.c.b16 %v1149, %v1148
        %v1155 = vpack.c.b16 %v1151, %v1150
        %v1157 = vsel %vm705, %v681, 0
        %v1160 = vsel %vm705, %v1152, 0
        %v1163 = vsel %vm705, %v1153, 0
        %v1166 = vsel %vm705, %v1154, 0
        %v1169 = vsel %vm705, %v1155, 0
        %1171 = vmatprep.subr.bf16.mxu0 0
        %1172 = vmatpush1.bf16.xpose.msra.mxu0 %v1160
        %1173 = vmatprep.subr.bf16.mxu0 0
        %1174 = vmatpush1.bf16.xpose.msra.mxu0 %v1163
        %1175 = vmatprep.subr.bf16.mxu0 0
        %1176 = vmatpush1.bf16.xpose.msra.mxu0 %v1166
        %1177 = vmatprep.subr.bf16.mxu0 0
        %1178 = vmatpush1.bf16.xpose.msra.mxu0 %v1169
        %1179 = vmatprep.subr.bf16.mxu0 0
        %1180 = vmatpush1.bf16.xpose.msra.mxu0 0
        %1181 = vmatprep.subr.bf16.mxu0 0
        %1182 = vmatpush1.bf16.xpose.msra.mxu0 0
        %1183 = vmatprep.subr.bf16.mxu0 0
        %1184 = vmatpush1.bf16.xpose.msra.mxu0 0
        %1185 = vmatprep.subr.bf16.mxu0 0
        %1186 = vmatpush1.bf16.xpose.msra.mxu0 0
        %1187 = vmatprep.subr.bf16.mxu0 0
        %1188 = vmatpush1.bf16.xpose.msra.mxu0 0
        %1189 = vmatprep.subr.bf16.mxu0 0
        %1190 = vmatpush1.bf16.xpose.msra.mxu0 0
        %1191 = vmatprep.subr.bf16.mxu0 0
        %1192 = vmatpush1.bf16.xpose.msra.mxu0 0
        %1193 = vmatprep.subr.bf16.mxu0 0
        %1194 = vmatpush1.bf16.xpose.msra.mxu0 0
        %1195 = vmatprep.subr.bf16.mxu0 0
        %1196 = vmatpush1.bf16.xpose.msra.mxu0 0
        %1197 = vmatprep.subr.bf16.mxu0 0
        %1198 = vmatpush1.bf16.xpose.msra.mxu0 0
        %1199 = vmatprep.subr.bf16.mxu0 0
        %1200 = vmatpush1.bf16.xpose.msra.mxu0 0
        %1201 = vmatprep.subr.bf16.mxu0 0
        %1202 = vmatpush1.bf16.xpose.msra.mxu0 0
        %1203 = vmatprep.mubr.bf16.mxu0 0
        %1204 = vmatmul.mubr.bf16.gmra.mrb[0].mxu0 %v1157
        %v1205 = vpop.f32.mrb[0].mxu0
        %v1206 = vadd.f32 0.0, %v1205
        %v1207 = vpop.f32.mrb[0].mxu0
        %v1208 = vpop.f32.mrb[0].mxu0
        %v1209 = vpop.f32.mrb[0].mxu0
        %1210 = vdwg.mxu0
        %v1219 = vunpack.c.l.b16 %v433
        %v1220 = vunpack.c.l.b16 %v434
        %v1221 = vunpack.c.l.b16 %v435
        %v1222 = vunpack.c.l.b16 %v436
        %v1223 = vunpack.c.l.b16 %v437
        %v1224 = vunpack.c.l.b16 %v438
        %v1225 = vunpack.c.l.b16 %v439
        %v1226 = vunpack.c.l.b16 %v440
        %v1227 = vpack.c.b16 %v1220, %v1219
        %v1228 = vpack.c.b16 %v1222, %v1221
        %v1229 = vpack.c.b16 %v1224, %v1223
        %v1230 = vpack.c.b16 %v1226, %v1225
        %v1232 = vsel %vm705, %v684, 0
        %v1235 = vsel %vm705, %v1227, 0
        %v1238 = vsel %vm705, %v1228, 0
        %v1241 = vsel %vm705, %v1229, 0
        %v1244 = vsel %vm705, %v1230, 0
        %1246 = vmatprep.subr.bf16.mxu0 0
        %1247 = vmatpush1.bf16.xpose.msra.mxu0 %v1235
        %1248 = vmatprep.subr.bf16.mxu0 0
        %1249 = vmatpush1.bf16.xpose.msra.mxu0 %v1238
        %1250 = vmatprep.subr.bf16.mxu0 0
        %1251 = vmatpush1.bf16.xpose.msra.mxu0 %v1241
        %1252 = vmatprep.subr.bf16.mxu0 0
        %1253 = vmatpush1.bf16.xpose.msra.mxu0 %v1244
        %1254 = vmatprep.subr.bf16.mxu0 0
        %1255 = vmatpush1.bf16.xpose.msra.mxu0 0
        %1256 = vmatprep.subr.bf16.mxu0 0
        %1257 = vmatpush1.bf16.xpose.msra.mxu0 0
        %1258 = vmatprep.subr.bf16.mxu0 0
        %1259 = vmatpush1.bf16.xpose.msra.mxu0 0
        %1260 = vmatprep.subr.bf16.mxu0 0
        %1261 = vmatpush1.bf16.xpose.msra.mxu0 0
        %1262 = vmatprep.subr.bf16.mxu0 0
        %1263 = vmatpush1.bf16.xpose.msra.mxu0 0
        %1264 = vmatprep.subr.bf16.mxu0 0
        %1265 = vmatpush1.bf16.xpose.msra.mxu0 0
        %1266 = vmatprep.subr.bf16.mxu0 0
        %1267 = vmatpush1.bf16.xpose.msra.mxu0 0
        %1268 = vmatprep.subr.bf16.mxu0 0
        %1269 = vmatpush1.bf16.xpose.msra.mxu0 0
        %1270 = vmatprep.subr.bf16.mxu0 0
        %1271 = vmatpush1.bf16.xpose.msra.mxu0 0
        %1272 = vmatprep.subr.bf16.mxu0 0
        %1273 = vmatpush1.bf16.xpose.msra.mxu0 0
        %1274 = vmatprep.subr.bf16.mxu0 0
        %1275 = vmatpush1.bf16.xpose.msra.mxu0 0
        %1276 = vmatprep.subr.bf16.mxu0 0
        %1277 = vmatpush1.bf16.xpose.msra.mxu0 0
        %1278 = vmatprep.mubr.bf16.mxu0 0
        %1279 = vmatmul.mubr.bf16.gmra.mrb[0].mxu0 %v1232
        %v1280 = vpop.f32.mrb[0].mxu0
        %v1281 = vadd.f32 0.0, %v1280
        %v1282 = vpop.f32.mrb[0].mxu0
        %v1283 = vpop.f32.mrb[0].mxu0
        %v1284 = vpop.f32.mrb[0].mxu0
        %1285 = vdwg.mxu0
        %v1286 = vcombine.low %v756, %v906
        %v1287 = vcombine.high %v756, %v906
        %v1289 = vunpack.c.l.s4 1983009808
        %v1290 = vunpack.c.0.s8 %v1289
        %v1291 = vlaneseq
        %v1292 = vshrl.u32 %v1291, 7
        %v1293 = vsub.s32 %v1290, %v1292
        %v1294 = vrot.slane %v1286, %v1293
        %v1296 = vunpack.c.l.s4 1983009808
        %v1297 = vunpack.c.0.s8 %v1296
        %v1298 = vlaneseq
        %v1299 = vshrl.u32 %v1298, 7
        %v1300 = vsub.s32 %v1297, %v1299
        %v1301 = vrot.slane %v1287, %v1300
        %v1302 = vcombine.low %v831, %v981
        %v1303 = vcombine.high %v831, %v981
        %v1305 = vunpack.c.l.s4 1983009808
        %v1306 = vunpack.c.0.s8 %v1305
        %v1307 = vlaneseq
        %v1308 = vshrl.u32 %v1307, 7
        %v1309 = vsub.s32 %v1306, %v1308
        %v1310 = vrot.slane %v1302, %v1309
        %v1312 = vunpack.c.l.s4 1983009808
        %v1313 = vunpack.c.0.s8 %v1312
        %v1314 = vlaneseq
        %v1315 = vshrl.u32 %v1314, 7
        %v1316 = vsub.s32 %v1313, %v1315
        %v1317 = vrot.slane %v1303, %v1316
        %v1318 = vcombine.low %v1056, %v1206
        %v1319 = vcombine.high %v1056, %v1206
        %v1321 = vunpack.c.l.s4 1983009808
        %v1322 = vunpack.c.0.s8 %v1321
        %v1323 = vlaneseq
        %v1324 = vshrl.u32 %v1323, 7
        %v1325 = vsub.s32 %v1322, %v1324
        %v1326 = vrot.slane %v1318, %v1325
        %v1328 = vunpack.c.l.s4 1983009808
        %v1329 = vunpack.c.0.s8 %v1328
        %v1330 = vlaneseq
        %v1331 = vshrl.u32 %v1330, 7
        %v1332 = vsub.s32 %v1329, %v1331
        %v1333 = vrot.slane %v1319, %v1332
        %v1334 = vcombine.low %v1131, %v1281
        %v1335 = vcombine.high %v1131, %v1281
        %v1337 = vunpack.c.l.s4 1983009808
        %v1338 = vunpack.c.0.s8 %v1337
        %v1339 = vlaneseq
        %v1340 = vshrl.u32 %v1339, 7
        %v1341 = vsub.s32 %v1338, %v1340
        %v1342 = vrot.slane %v1334, %v1341
        %v1344 = vunpack.c.l.s4 1983009808
        %v1345 = vunpack.c.0.s8 %v1344
        %v1346 = vlaneseq
        %v1347 = vshrl.u32 %v1346, 7
        %v1348 = vsub.s32 %v1345, %v1347
        %v1349 = vrot.slane %v1335, %v1348
        %v1350 = vcombine.low %v1294, %v1310
        %v1351 = vcombine.high %v1294, %v1310
        %v1353 = vunpack.c.l.s4 1934713408
        %v1354 = vunpack.c.0.s8 %v1353
        %v1355 = vlaneseq
        %v1356 = vshrl.u32 %v1355, 7
        %v1357 = vsub.s32 %v1354, %v1356
        %v1358 = vrot.slane %v1350, %v1357
        %v1360 = vunpack.c.l.s4 1934713408
        %v1361 = vunpack.c.0.s8 %v1360
        %v1362 = vlaneseq
        %v1363 = vshrl.u32 %v1362, 7
        %v1364 = vsub.s32 %v1361, %v1363
        %v1365 = vrot.slane %v1351, %v1364
        %v1366 = vcombine.low %v1301, %v1317
        %v1367 = vcombine.high %v1301, %v1317
        %v1369 = vunpack.c.l.s4 1934713408
        %v1370 = vunpack.c.0.s8 %v1369
        %v1371 = vlaneseq
        %v1372 = vshrl.u32 %v1371, 7
        %v1373 = vsub.s32 %v1370, %v1372
        %v1374 = vrot.slane %v1366, %v1373
        %v1376 = vunpack.c.l.s4 1934713408
        %v1377 = vunpack.c.0.s8 %v1376
        %v1378 = vlaneseq
        %v1379 = vshrl.u32 %v1378, 7
        %v1380 = vsub.s32 %v1377, %v1379
        %v1381 = vrot.slane %v1367, %v1380
        %v1382 = vcombine.low %v1326, %v1342
        %v1383 = vcombine.high %v1326, %v1342
        %v1385 = vunpack.c.l.s4 1934713408
        %v1386 = vunpack.c.0.s8 %v1385
        %v1387 = vlaneseq
        %v1388 = vshrl.u32 %v1387, 7
        %v1389 = vsub.s32 %v1386, %v1388
        %v1390 = vrot.slane %v1382, %v1389
        %v1392 = vunpack.c.l.s4 1934713408
        %v1393 = vunpack.c.0.s8 %v1392
        %v1394 = vlaneseq
        %v1395 = vshrl.u32 %v1394, 7
        %v1396 = vsub.s32 %v1393, %v1395
        %v1397 = vrot.slane %v1383, %v1396
        %v1398 = vcombine.low %v1333, %v1349
        %v1399 = vcombine.high %v1333, %v1349
        %v1401 = vunpack.c.l.s4 1934713408
        %v1402 = vunpack.c.0.s8 %v1401
        %v1403 = vlaneseq
        %v1404 = vshrl.u32 %v1403, 7
        %v1405 = vsub.s32 %v1402, %v1404
        %v1406 = vrot.slane %v1398, %v1405
        %v1408 = vunpack.c.l.s4 1934713408
        %v1409 = vunpack.c.0.s8 %v1408
        %v1410 = vlaneseq
        %v1411 = vshrl.u32 %v1410, 7
        %v1412 = vsub.s32 %v1409, %v1411
        %v1413 = vrot.slane %v1399, %v1412
        %v1414 = vcombine.low %v1358, %v1390
        %v1415 = vcombine.high %v1358, %v1390
        %v1416 = vcombine.low %v1365, %v1397
        %v1417 = vcombine.high %v1365, %v1397
        %v1418 = vcombine.low %v1374, %v1406
        %v1419 = vcombine.high %v1374, %v1406
        %v1420 = vcombine.low %v1381, %v1413
        %v1421 = vcombine.high %v1381, %v1413
        %v1430 = vunpack.c.l.b16 %v529
        %v1431 = vunpack.c.l.b16 %v530
        %v1432 = vunpack.c.l.b16 %v531
        %v1433 = vunpack.c.l.b16 %v532
        %v1434 = vunpack.c.l.b16 %v533
        %v1435 = vunpack.c.l.b16 %v534
        %v1436 = vunpack.c.l.b16 %v535
        %v1437 = vunpack.c.l.b16 %v536
        %v1438 = vpack.c.b16 %v1431, %v1430
        %v1439 = vpack.c.b16 %v1433, %v1432
        %v1440 = vpack.c.b16 %v1435, %v1434
        %v1441 = vpack.c.b16 %v1437, %v1436
        %v1443 = vsel %vm705, %v505, 0
        %v1446 = vsel %vm705, %v1438, 0
        %v1449 = vsel %vm705, %v1439, 0
        %v1452 = vsel %vm705, %v1440, 0
        %v1455 = vsel %vm705, %v1441, 0
        %1457 = vmatprep.subr.bf16.mxu0 0
        %1458 = vmatpush1.bf16.xpose.msra.mxu0 %v1446
        %1459 = vmatprep.subr.bf16.mxu0 0
        %1460 = vmatpush1.bf16.xpose.msra.mxu0 %v1449
        %1461 = vmatprep.subr.bf16.mxu0 0
        %1462 = vmatpush1.bf16.xpose.msra.mxu0 %v1452
        %1463 = vmatprep.subr.bf16.mxu0 0
        %1464 = vmatpush1.bf16.xpose.msra.mxu0 %v1455
        %1465 = vmatprep.subr.bf16.mxu0 0
        %1466 = vmatpush1.bf16.xpose.msra.mxu0 0
        %1467 = vmatprep.subr.bf16.mxu0 0
        %1468 = vmatpush1.bf16.xpose.msra.mxu0 0
        %1469 = vmatprep.subr.bf16.mxu0 0
        %1470 = vmatpush1.bf16.xpose.msra.mxu0 0
        %1471 = vmatprep.subr.bf16.mxu0 0
        %1472 = vmatpush1.bf16.xpose.msra.mxu0 0
        %1473 = vmatprep.subr.bf16.mxu0 0
        %1474 = vmatpush1.bf16.xpose.msra.mxu0 0
        %1475 = vmatprep.subr.bf16.mxu0 0
        %1476 = vmatpush1.bf16.xpose.msra.mxu0 0
        %1477 = vmatprep.subr.bf16.mxu0 0
        %1478 = vmatpush1.bf16.xpose.msra.mxu0 0
        %1479 = vmatprep.subr.bf16.mxu0 0
        %1480 = vmatpush1.bf16.xpose.msra.mxu0 0
        %1481 = vmatprep.subr.bf16.mxu0 0
        %1482 = vmatpush1.bf16.xpose.msra.mxu0 0
        %1483 = vmatprep.subr.bf16.mxu0 0
        %1484 = vmatpush1.bf16.xpose.msra.mxu0 0
        %1485 = vmatprep.subr.bf16.mxu0 0
        %1486 = vmatpush1.bf16.xpose.msra.mxu0 0
        %1487 = vmatprep.subr.bf16.mxu0 0
        %1488 = vmatpush1.bf16.xpose.msra.mxu0 0
        %1489 = vmatprep.mubr.bf16.mxu0 0
        %1490 = vmatmul.mubr.bf16.gmra.mrb[0].mxu0 %v1443
        %v1491 = vpop.f32.mrb[0].mxu0
        %v1492 = vadd.f32 %v1414, %v1491
        %v1493 = vpop.f32.mrb[0].mxu0
        %v1494 = vpop.f32.mrb[0].mxu0
        %v1495 = vpop.f32.mrb[0].mxu0
        %1496 = vdwg.mxu0
        %v1505 = vunpack.c.l.b16 %v537
        %v1506 = vunpack.c.l.b16 %v538
        %v1507 = vunpack.c.l.b16 %v539
        %v1508 = vunpack.c.l.b16 %v540
        %v1509 = vunpack.c.l.b16 %v541
        %v1510 = vunpack.c.l.b16 %v542
        %v1511 = vunpack.c.l.b16 %v543
        %v1512 = vunpack.c.l.b16 %v544
        %v1513 = vpack.c.b16 %v1506, %v1505
        %v1514 = vpack.c.b16 %v1508, %v1507
        %v1515 = vpack.c.b16 %v1510, %v1509
        %v1516 = vpack.c.b16 %v1512, %v1511
        %v1518 = vsel %vm705, %v506, 0
        %v1521 = vsel %vm705, %v1513, 0
        %v1524 = vsel %vm705, %v1514, 0
        %v1527 = vsel %vm705, %v1515, 0
        %v1530 = vsel %vm705, %v1516, 0
        %1532 = vmatprep.subr.bf16.mxu0 0
        %1533 = vmatpush1.bf16.xpose.msra.mxu0 %v1521
        %1534 = vmatprep.subr.bf16.mxu0 0
        %1535 = vmatpush1.bf16.xpose.msra.mxu0 %v1524
        %1536 = vmatprep.subr.bf16.mxu0 0
        %1537 = vmatpush1.bf16.xpose.msra.mxu0 %v1527
        %1538 = vmatprep.subr.bf16.mxu0 0
        %1539 = vmatpush1.bf16.xpose.msra.mxu0 %v1530
        %1540 = vmatprep.subr.bf16.mxu0 0
        %1541 = vmatpush1.bf16.xpose.msra.mxu0 0
        %1542 = vmatprep.subr.bf16.mxu0 0
        %1543 = vmatpush1.bf16.xpose.msra.mxu0 0
        %1544 = vmatprep.subr.bf16.mxu0 0
        %1545 = vmatpush1.bf16.xpose.msra.mxu0 0
        %1546 = vmatprep.subr.bf16.mxu0 0
        %1547 = vmatpush1.bf16.xpose.msra.mxu0 0
        %1548 = vmatprep.subr.bf16.mxu0 0
        %1549 = vmatpush1.bf16.xpose.msra.mxu0 0
        %1550 = vmatprep.subr.bf16.mxu0 0
        %1551 = vmatpush1.bf16.xpose.msra.mxu0 0
        %1552 = vmatprep.subr.bf16.mxu0 0
        %1553 = vmatpush1.bf16.xpose.msra.mxu0 0
        %1554 = vmatprep.subr.bf16.mxu0 0
        %1555 = vmatpush1.bf16.xpose.msra.mxu0 0
        %1556 = vmatprep.subr.bf16.mxu0 0
        %1557 = vmatpush1.bf16.xpose.msra.mxu0 0
        %1558 = vmatprep.subr.bf16.mxu0 0
        %1559 = vmatpush1.bf16.xpose.msra.mxu0 0
        %1560 = vmatprep.subr.bf16.mxu0 0
        %1561 = vmatpush1.bf16.xpose.msra.mxu0 0
        %1562 = vmatprep.subr.bf16.mxu0 0
        %1563 = vmatpush1.bf16.xpose.msra.mxu0 0
        %1564 = vmatprep.mubr.bf16.mxu0 0
        %1565 = vmatmul.mubr.bf16.gmra.mrb[0].mxu0 %v1518
        %v1566 = vpop.f32.mrb[0].mxu0
        %v1567 = vadd.f32 %v1415, %v1566
        %v1568 = vpop.f32.mrb[0].mxu0
        %v1569 = vpop.f32.mrb[0].mxu0
        %v1570 = vpop.f32.mrb[0].mxu0
        %1571 = vdwg.mxu0
        %v1580 = vunpack.c.l.b16 %v545
        %v1581 = vunpack.c.l.b16 %v546
        %v1582 = vunpack.c.l.b16 %v547
        %v1583 = vunpack.c.l.b16 %v548
        %v1584 = vunpack.c.l.b16 %v549
        %v1585 = vunpack.c.l.b16 %v550
        %v1586 = vunpack.c.l.b16 %v551
        %v1587 = vunpack.c.l.b16 %v552
        %v1588 = vpack.c.b16 %v1581, %v1580
        %v1589 = vpack.c.b16 %v1583, %v1582
        %v1590 = vpack.c.b16 %v1585, %v1584
        %v1591 = vpack.c.b16 %v1587, %v1586
        %v1593 = vsel %vm705, %v507, 0
        %v1596 = vsel %vm705, %v1588, 0
        %v1599 = vsel %vm705, %v1589, 0
        %v1602 = vsel %vm705, %v1590, 0
        %v1605 = vsel %vm705, %v1591, 0
        %1607 = vmatprep.subr.bf16.mxu0 0
        %1608 = vmatpush1.bf16.xpose.msra.mxu0 %v1596
        %1609 = vmatprep.subr.bf16.mxu0 0
        %1610 = vmatpush1.bf16.xpose.msra.mxu0 %v1599
        %1611 = vmatprep.subr.bf16.mxu0 0
        %1612 = vmatpush1.bf16.xpose.msra.mxu0 %v1602
        %1613 = vmatprep.subr.bf16.mxu0 0
        %1614 = vmatpush1.bf16.xpose.msra.mxu0 %v1605
        %1615 = vmatprep.subr.bf16.mxu0 0
        %1616 = vmatpush1.bf16.xpose.msra.mxu0 0
        %1617 = vmatprep.subr.bf16.mxu0 0
        %1618 = vmatpush1.bf16.xpose.msra.mxu0 0
        %1619 = vmatprep.subr.bf16.mxu0 0
        %1620 = vmatpush1.bf16.xpose.msra.mxu0 0
        %1621 = vmatprep.subr.bf16.mxu0 0
        %1622 = vmatpush1.bf16.xpose.msra.mxu0 0
        %1623 = vmatprep.subr.bf16.mxu0 0
        %1624 = vmatpush1.bf16.xpose.msra.mxu0 0
        %1625 = vmatprep.subr.bf16.mxu0 0
        %1626 = vmatpush1.bf16.xpose.msra.mxu0 0
        %1627 = vmatprep.subr.bf16.mxu0 0
        %1628 = vmatpush1.bf16.xpose.msra.mxu0 0
        %1629 = vmatprep.subr.bf16.mxu0 0
        %1630 = vmatpush1.bf16.xpose.msra.mxu0 0
        %1631 = vmatprep.subr.bf16.mxu0 0
        %1632 = vmatpush1.bf16.xpose.msra.mxu0 0
        %1633 = vmatprep.subr.bf16.mxu0 0
        %1634 = vmatpush1.bf16.xpose.msra.mxu0 0
        %1635 = vmatprep.subr.bf16.mxu0 0
        %1636 = vmatpush1.bf16.xpose.msra.mxu0 0
        %1637 = vmatprep.subr.bf16.mxu0 0
        %1638 = vmatpush1.bf16.xpose.msra.mxu0 0
        %1639 = vmatprep.mubr.bf16.mxu0 0
        %1640 = vmatmul.mubr.bf16.gmra.mrb[0].mxu0 %v1593
        %v1641 = vpop.f32.mrb[0].mxu0
        %v1642 = vadd.f32 %v1416, %v1641
        %v1643 = vpop.f32.mrb[0].mxu0
        %v1644 = vpop.f32.mrb[0].mxu0
        %v1645 = vpop.f32.mrb[0].mxu0
        %1646 = vdwg.mxu0
        %v1655 = vunpack.c.l.b16 %v553
        %v1656 = vunpack.c.l.b16 %v554
        %v1657 = vunpack.c.l.b16 %v555
        %v1658 = vunpack.c.l.b16 %v556
        %v1659 = vunpack.c.l.b16 %v557
        %v1660 = vunpack.c.l.b16 %v558
        %v1661 = vunpack.c.l.b16 %v559
        %v1662 = vunpack.c.l.b16 %v560
        %v1663 = vpack.c.b16 %v1656, %v1655
        %v1664 = vpack.c.b16 %v1658, %v1657
        %v1665 = vpack.c.b16 %v1660, %v1659
        %v1666 = vpack.c.b16 %v1662, %v1661
        %v1668 = vsel %vm705, %v508, 0
        %v1671 = vsel %vm705, %v1663, 0
        %v1674 = vsel %vm705, %v1664, 0
        %v1677 = vsel %vm705, %v1665, 0
        %v1680 = vsel %vm705, %v1666, 0
        %1682 = vmatprep.subr.bf16.mxu0 0
        %1683 = vmatpush1.bf16.xpose.msra.mxu0 %v1671
        %1684 = vmatprep.subr.bf16.mxu0 0
        %1685 = vmatpush1.bf16.xpose.msra.mxu0 %v1674
        %1686 = vmatprep.subr.bf16.mxu0 0
        %1687 = vmatpush1.bf16.xpose.msra.mxu0 %v1677
        %1688 = vmatprep.subr.bf16.mxu0 0
        %1689 = vmatpush1.bf16.xpose.msra.mxu0 %v1680
        %1690 = vmatprep.subr.bf16.mxu0 0
        %1691 = vmatpush1.bf16.xpose.msra.mxu0 0
        %1692 = vmatprep.subr.bf16.mxu0 0
        %1693 = vmatpush1.bf16.xpose.msra.mxu0 0
        %1694 = vmatprep.subr.bf16.mxu0 0
        %1695 = vmatpush1.bf16.xpose.msra.mxu0 0
        %1696 = vmatprep.subr.bf16.mxu0 0
        %1697 = vmatpush1.bf16.xpose.msra.mxu0 0
        %1698 = vmatprep.subr.bf16.mxu0 0
        %1699 = vmatpush1.bf16.xpose.msra.mxu0 0
        %1700 = vmatprep.subr.bf16.mxu0 0
        %1701 = vmatpush1.bf16.xpose.msra.mxu0 0
        %1702 = vmatprep.subr.bf16.mxu0 0
        %1703 = vmatpush1.bf16.xpose.msra.mxu0 0
        %1704 = vmatprep.subr.bf16.mxu0 0
        %1705 = vmatpush1.bf16.xpose.msra.mxu0 0
        %1706 = vmatprep.subr.bf16.mxu0 0
        %1707 = vmatpush1.bf16.xpose.msra.mxu0 0
        %1708 = vmatprep.subr.bf16.mxu0 0
        %1709 = vmatpush1.bf16.xpose.msra.mxu0 0
        %1710 = vmatprep.subr.bf16.mxu0 0
        %1711 = vmatpush1.bf16.xpose.msra.mxu0 0
        %1712 = vmatprep.subr.bf16.mxu0 0
        %1713 = vmatpush1.bf16.xpose.msra.mxu0 0
        %1714 = vmatprep.mubr.bf16.mxu0 0
        %1715 = vmatmul.mubr.bf16.gmra.mrb[0].mxu0 %v1668
        %v1716 = vpop.f32.mrb[0].mxu0
        %v1717 = vadd.f32 %v1417, %v1716
        %v1718 = vpop.f32.mrb[0].mxu0
        %v1719 = vpop.f32.mrb[0].mxu0
        %v1720 = vpop.f32.mrb[0].mxu0
        %1721 = vdwg.mxu0
        %v1730 = vunpack.c.l.b16 %v561
        %v1731 = vunpack.c.l.b16 %v562
        %v1732 = vunpack.c.l.b16 %v563
        %v1733 = vunpack.c.l.b16 %v564
        %v1734 = vunpack.c.l.b16 %v565
        %v1735 = vunpack.c.l.b16 %v566
        %v1736 = vunpack.c.l.b16 %v567
        %v1737 = vunpack.c.l.b16 %v568
        %v1738 = vpack.c.b16 %v1731, %v1730
        %v1739 = vpack.c.b16 %v1733, %v1732
        %v1740 = vpack.c.b16 %v1735, %v1734
        %v1741 = vpack.c.b16 %v1737, %v1736
        %v1743 = vsel %vm705, %v509, 0
        %v1746 = vsel %vm705, %v1738, 0
        %v1749 = vsel %vm705, %v1739, 0
        %v1752 = vsel %vm705, %v1740, 0
        %v1755 = vsel %vm705, %v1741, 0
        %1757 = vmatprep.subr.bf16.mxu0 0
        %1758 = vmatpush1.bf16.xpose.msra.mxu0 %v1746
        %1759 = vmatprep.subr.bf16.mxu0 0
        %1760 = vmatpush1.bf16.xpose.msra.mxu0 %v1749
        %1761 = vmatprep.subr.bf16.mxu0 0
        %1762 = vmatpush1.bf16.xpose.msra.mxu0 %v1752
        %1763 = vmatprep.subr.bf16.mxu0 0
        %1764 = vmatpush1.bf16.xpose.msra.mxu0 %v1755
        %1765 = vmatprep.subr.bf16.mxu0 0
        %1766 = vmatpush1.bf16.xpose.msra.mxu0 0
        %1767 = vmatprep.subr.bf16.mxu0 0
        %1768 = vmatpush1.bf16.xpose.msra.mxu0 0
        %1769 = vmatprep.subr.bf16.mxu0 0
        %1770 = vmatpush1.bf16.xpose.msra.mxu0 0
        %1771 = vmatprep.subr.bf16.mxu0 0
        %1772 = vmatpush1.bf16.xpose.msra.mxu0 0
        %1773 = vmatprep.subr.bf16.mxu0 0
        %1774 = vmatpush1.bf16.xpose.msra.mxu0 0
        %1775 = vmatprep.subr.bf16.mxu0 0
        %1776 = vmatpush1.bf16.xpose.msra.mxu0 0
        %1777 = vmatprep.subr.bf16.mxu0 0
        %1778 = vmatpush1.bf16.xpose.msra.mxu0 0
        %1779 = vmatprep.subr.bf16.mxu0 0
        %1780 = vmatpush1.bf16.xpose.msra.mxu0 0
        %1781 = vmatprep.subr.bf16.mxu0 0
        %1782 = vmatpush1.bf16.xpose.msra.mxu0 0
        %1783 = vmatprep.subr.bf16.mxu0 0
        %1784 = vmatpush1.bf16.xpose.msra.mxu0 0
        %1785 = vmatprep.subr.bf16.mxu0 0
        %1786 = vmatpush1.bf16.xpose.msra.mxu0 0
        %1787 = vmatprep.subr.bf16.mxu0 0
        %1788 = vmatpush1.bf16.xpose.msra.mxu0 0
        %1789 = vmatprep.mubr.bf16.mxu0 0
        %1790 = vmatmul.mubr.bf16.gmra.mrb[0].mxu0 %v1743
        %v1791 = vpop.f32.mrb[0].mxu0
        %v1792 = vadd.f32 %v1418, %v1791
        %v1793 = vpop.f32.mrb[0].mxu0
        %v1794 = vpop.f32.mrb[0].mxu0
        %v1795 = vpop.f32.mrb[0].mxu0
        %1796 = vdwg.mxu0
        %v1805 = vunpack.c.l.b16 %v569
        %v1806 = vunpack.c.l.b16 %v570
        %v1807 = vunpack.c.l.b16 %v571
        %v1808 = vunpack.c.l.b16 %v572
        %v1809 = vunpack.c.l.b16 %v573
        %v1810 = vunpack.c.l.b16 %v574
        %v1811 = vunpack.c.l.b16 %v575
        %v1812 = vunpack.c.l.b16 %v576
        %v1813 = vpack.c.b16 %v1806, %v1805
        %v1814 = vpack.c.b16 %v1808, %v1807
        %v1815 = vpack.c.b16 %v1810, %v1809
        %v1816 = vpack.c.b16 %v1812, %v1811
        %v1818 = vsel %vm705, %v510, 0
        %v1821 = vsel %vm705, %v1813, 0
        %v1824 = vsel %vm705, %v1814, 0
        %v1827 = vsel %vm705, %v1815, 0
        %v1830 = vsel %vm705, %v1816, 0
        %1832 = vmatprep.subr.bf16.mxu0 0
        %1833 = vmatpush1.bf16.xpose.msra.mxu0 %v1821
        %1834 = vmatprep.subr.bf16.mxu0 0
        %1835 = vmatpush1.bf16.xpose.msra.mxu0 %v1824
        %1836 = vmatprep.subr.bf16.mxu0 0
        %1837 = vmatpush1.bf16.xpose.msra.mxu0 %v1827
        %1838 = vmatprep.subr.bf16.mxu0 0
        %1839 = vmatpush1.bf16.xpose.msra.mxu0 %v1830
        %1840 = vmatprep.subr.bf16.mxu0 0
        %1841 = vmatpush1.bf16.xpose.msra.mxu0 0
        %1842 = vmatprep.subr.bf16.mxu0 0
        %1843 = vmatpush1.bf16.xpose.msra.mxu0 0
        %1844 = vmatprep.subr.bf16.mxu0 0
        %1845 = vmatpush1.bf16.xpose.msra.mxu0 0
        %1846 = vmatprep.subr.bf16.mxu0 0
        %1847 = vmatpush1.bf16.xpose.msra.mxu0 0
        %1848 = vmatprep.subr.bf16.mxu0 0
        %1849 = vmatpush1.bf16.xpose.msra.mxu0 0
        %1850 = vmatprep.subr.bf16.mxu0 0
        %1851 = vmatpush1.bf16.xpose.msra.mxu0 0
        %1852 = vmatprep.subr.bf16.mxu0 0
        %1853 = vmatpush1.bf16.xpose.msra.mxu0 0
        %1854 = vmatprep.subr.bf16.mxu0 0
        %1855 = vmatpush1.bf16.xpose.msra.mxu0 0
        %1856 = vmatprep.subr.bf16.mxu0 0
        %1857 = vmatpush1.bf16.xpose.msra.mxu0 0
        %1858 = vmatprep.subr.bf16.mxu0 0
        %1859 = vmatpush1.bf16.xpose.msra.mxu0 0
        %1860 = vmatprep.subr.bf16.mxu0 0
        %1861 = vmatpush1.bf16.xpose.msra.mxu0 0
        %1862 = vmatprep.subr.bf16.mxu0 0
        %1863 = vmatpush1.bf16.xpose.msra.mxu0 0
        %1864 = vmatprep.mubr.bf16.mxu0 0
        %1865 = vmatmul.mubr.bf16.gmra.mrb[0].mxu0 %v1818
        %v1866 = vpop.f32.mrb[0].mxu0
        %v1867 = vadd.f32 %v1419, %v1866
        %v1868 = vpop.f32.mrb[0].mxu0
        %v1869 = vpop.f32.mrb[0].mxu0
        %v1870 = vpop.f32.mrb[0].mxu0
        %1871 = vdwg.mxu0
        %v1880 = vunpack.c.l.b16 %v577
        %v1881 = vunpack.c.l.b16 %v578
        %v1882 = vunpack.c.l.b16 %v579
        %v1883 = vunpack.c.l.b16 %v580
        %v1884 = vunpack.c.l.b16 %v581
        %v1885 = vunpack.c.l.b16 %v582
        %v1886 = vunpack.c.l.b16 %v583
        %v1887 = vunpack.c.l.b16 %v584
        %v1888 = vpack.c.b16 %v1881, %v1880
        %v1889 = vpack.c.b16 %v1883, %v1882
        %v1890 = vpack.c.b16 %v1885, %v1884
        %v1891 = vpack.c.b16 %v1887, %v1886
        %v1893 = vsel %vm705, %v511, 0
        %v1896 = vsel %vm705, %v1888, 0
        %v1899 = vsel %vm705, %v1889, 0
        %v1902 = vsel %vm705, %v1890, 0
        %v1905 = vsel %vm705, %v1891, 0
        %1907 = vmatprep.subr.bf16.mxu0 0
        %1908 = vmatpush1.bf16.xpose.msra.mxu0 %v1896
        %1909 = vmatprep.subr.bf16.mxu0 0
        %1910 = vmatpush1.bf16.xpose.msra.mxu0 %v1899
        %1911 = vmatprep.subr.bf16.mxu0 0
        %1912 = vmatpush1.bf16.xpose.msra.mxu0 %v1902
        %1913 = vmatprep.subr.bf16.mxu0 0
        %1914 = vmatpush1.bf16.xpose.msra.mxu0 %v1905
        %1915 = vmatprep.subr.bf16.mxu0 0
        %1916 = vmatpush1.bf16.xpose.msra.mxu0 0
        %1917 = vmatprep.subr.bf16.mxu0 0
        %1918 = vmatpush1.bf16.xpose.msra.mxu0 0
        %1919 = vmatprep.subr.bf16.mxu0 0
        %1920 = vmatpush1.bf16.xpose.msra.mxu0 0
        %1921 = vmatprep.subr.bf16.mxu0 0
        %1922 = vmatpush1.bf16.xpose.msra.mxu0 0
        %1923 = vmatprep.subr.bf16.mxu0 0
        %1924 = vmatpush1.bf16.xpose.msra.mxu0 0
        %1925 = vmatprep.subr.bf16.mxu0 0
        %1926 = vmatpush1.bf16.xpose.msra.mxu0 0
        %1927 = vmatprep.subr.bf16.mxu0 0
        %1928 = vmatpush1.bf16.xpose.msra.mxu0 0
        %1929 = vmatprep.subr.bf16.mxu0 0
        %1930 = vmatpush1.bf16.xpose.msra.mxu0 0
        %1931 = vmatprep.subr.bf16.mxu0 0
        %1932 = vmatpush1.bf16.xpose.msra.mxu0 0
        %1933 = vmatprep.subr.bf16.mxu0 0
        %1934 = vmatpush1.bf16.xpose.msra.mxu0 0
        %1935 = vmatprep.subr.bf16.mxu0 0
        %1936 = vmatpush1.bf16.xpose.msra.mxu0 0
        %1937 = vmatprep.subr.bf16.mxu0 0
        %1938 = vmatpush1.bf16.xpose.msra.mxu0 0
        %1939 = vmatprep.mubr.bf16.mxu0 0
        %1940 = vmatmul.mubr.bf16.gmra.mrb[0].mxu0 %v1893
        %v1941 = vpop.f32.mrb[0].mxu0
        %v1942 = vadd.f32 %v1420, %v1941
        %v1943 = vpop.f32.mrb[0].mxu0
        %v1944 = vpop.f32.mrb[0].mxu0
        %v1945 = vpop.f32.mrb[0].mxu0
        %1946 = vdwg.mxu0
        %v1955 = vunpack.c.l.b16 %v585
        %v1956 = vunpack.c.l.b16 %v586
        %v1957 = vunpack.c.l.b16 %v587
        %v1958 = vunpack.c.l.b16 %v588
        %v1959 = vunpack.c.l.b16 %v589
        %v1960 = vunpack.c.l.b16 %v590
        %v1961 = vunpack.c.l.b16 %v591
        %v1962 = vunpack.c.l.b16 %v592
        %v1963 = vpack.c.b16 %v1956, %v1955
        %v1964 = vpack.c.b16 %v1958, %v1957
        %v1965 = vpack.c.b16 %v1960, %v1959
        %v1966 = vpack.c.b16 %v1962, %v1961
        %v1968 = vsel %vm705, %v512, 0
        %v1971 = vsel %vm705, %v1963, 0
        %v1974 = vsel %vm705, %v1964, 0
        %v1977 = vsel %vm705, %v1965, 0
        %v1980 = vsel %vm705, %v1966, 0
        %1982 = vmatprep.subr.bf16.mxu0 0
        %1983 = vmatpush1.bf16.xpose.msra.mxu0 %v1971
        %1984 = vmatprep.subr.bf16.mxu0 0
        %1985 = vmatpush1.bf16.xpose.msra.mxu0 %v1974
        %1986 = vmatprep.subr.bf16.mxu0 0
        %1987 = vmatpush1.bf16.xpose.msra.mxu0 %v1977
        %1988 = vmatprep.subr.bf16.mxu0 0
        %1989 = vmatpush1.bf16.xpose.msra.mxu0 %v1980
        %1990 = vmatprep.subr.bf16.mxu0 0
        %1991 = vmatpush1.bf16.xpose.msra.mxu0 0
        %1992 = vmatprep.subr.bf16.mxu0 0
        %1993 = vmatpush1.bf16.xpose.msra.mxu0 0
        %1994 = vmatprep.subr.bf16.mxu0 0
        %1995 = vmatpush1.bf16.xpose.msra.mxu0 0
        %1996 = vmatprep.subr.bf16.mxu0 0
        %1997 = vmatpush1.bf16.xpose.msra.mxu0 0
        %1998 = vmatprep.subr.bf16.mxu0 0
        %1999 = vmatpush1.bf16.xpose.msra.mxu0 0
        %2000 = vmatprep.subr.bf16.mxu0 0
        %2001 = vmatpush1.bf16.xpose.msra.mxu0 0
        %2002 = vmatprep.subr.bf16.mxu0 0
        %2003 = vmatpush1.bf16.xpose.msra.mxu0 0
        %2004 = vmatprep.subr.bf16.mxu0 0
        %2005 = vmatpush1.bf16.xpose.msra.mxu0 0
        %2006 = vmatprep.subr.bf16.mxu0 0
        %2007 = vmatpush1.bf16.xpose.msra.mxu0 0
        %2008 = vmatprep.subr.bf16.mxu0 0
        %2009 = vmatpush1.bf16.xpose.msra.mxu0 0
        %2010 = vmatprep.subr.bf16.mxu0 0
        %2011 = vmatpush1.bf16.xpose.msra.mxu0 0
        %2012 = vmatprep.subr.bf16.mxu0 0
        %2013 = vmatpush1.bf16.xpose.msra.mxu0 0
        %2014 = vmatprep.mubr.bf16.mxu0 0
        %2015 = vmatmul.mubr.bf16.gmra.mrb[0].mxu0 %v1968
        %v2016 = vpop.f32.mrb[0].mxu0
        %v2017 = vadd.f32 %v1421, %v2016
        %v2018 = vpop.f32.mrb[0].mxu0
        %v2019 = vpop.f32.mrb[0].mxu0
        %v2020 = vpop.f32.mrb[0].mxu0
        %2021 = vdwg.mxu0
        %v2023 = vlaneseq
        %v2024 = vshrl.u32 %v2023, 7
        %v2025 = vsub.s32 0, %v2024
        %v2026 = vrot.slane %v376, %v2025
        %v2028 = vadd.f32 %v1492, %v2026
        %v2029 = vadd.f32 %v1567, %v2026
        %v2030 = vadd.f32 %v1642, %v2026
        %v2031 = vadd.f32 %v1717, %v2026
        %v2032 = vadd.f32 %v1792, %v2026
        %v2033 = vadd.f32 %v1867, %v2026
        %v2034 = vadd.f32 %v1942, %v2026
        %v2035 = vadd.f32 %v2017, %v2026
        %vm2036 = vcmask 523264
        %v2037 = vsel %vm2036, %v2028, -inf
        %2038 = vmax.xlane.f32.xlu0 %v2037
        %v2039 = vpop.xlane.xlu0 %2038
        %v2040 = vsel %vm2036, %v2029, -inf
        %2041 = vmax.xlane.f32.xlu0 %v2040
        %v2042 = vpop.xlane.xlu0 %2041
        %v2043 = vsel %vm2036, %v2030, -inf
        %2044 = vmax.xlane.f32.xlu0 %v2043
        %v2045 = vpop.xlane.xlu0 %2044
        %v2046 = vsel %vm2036, %v2031, -inf
        %2047 = vmax.xlane.f32.xlu0 %v2046
        %v2048 = vpop.xlane.xlu0 %2047
        %v2049 = vsel %vm2036, %v2032, -inf
        %2050 = vmax.xlane.f32.xlu0 %v2049
        %v2051 = vpop.xlane.xlu0 %2050
        %v2052 = vsel %vm2036, %v2033, -inf
        %2053 = vmax.xlane.f32.xlu0 %v2052
        %v2054 = vpop.xlane.xlu0 %2053
        %v2055 = vsel %vm2036, %v2034, -inf
        %2056 = vmax.xlane.f32.xlu0 %v2055
        %v2057 = vpop.xlane.xlu0 %2056
        %v2058 = vsel %vm2036, %v2035, -inf
        %2059 = vmax.xlane.f32.xlu0 %v2058
        %v2060 = vpop.xlane.xlu0 %2059
        %v2061 = vsub.f32 %v2028, %v2039
        %v2062 = vsub.f32 %v2029, %v2042
        %v2063 = vsub.f32 %v2030, %v2045
        %v2064 = vsub.f32 %v2031, %v2048
        %v2065 = vsub.f32 %v2032, %v2051
        %v2066 = vsub.f32 %v2033, %v2054
        %v2067 = vsub.f32 %v2034, %v2057
        %v2068 = vsub.f32 %v2035, %v2060
        %v2069 = vmul.f32 %v2061, 1.442695
        %v2070 = vpow.pop %v2069
        %v2071 = vmul.f32 %v2062, 1.442695
        %v2072 = vpow.pop %v2071
        %v2073 = vmul.f32 %v2063, 1.442695
        %v2074 = vpow.pop %v2073
        %v2075 = vmul.f32 %v2064, 1.442695
        %v2076 = vpow.pop %v2075
        %v2077 = vmul.f32 %v2065, 1.442695
        %v2078 = vpow.pop %v2077
        %v2079 = vmul.f32 %v2066, 1.442695
        %v2080 = vpow.pop %v2079
        %v2081 = vmul.f32 %v2067, 1.442695
        %v2082 = vpow.pop %v2081
        %v2083 = vmul.f32 %v2068, 1.442695
        %v2084 = vpow.pop %v2083
        %v2085 = vsel %vm2036, %v2070, 0.0
        %2086 = vadd.xlane.f32.xlu0 %v2085
        %v2087 = vpop.xlane.xlu0 %2086
        %v2088 = vsel %vm2036, %v2072, 0.0
        %2089 = vadd.xlane.f32.xlu0 %v2088
        %v2090 = vpop.xlane.xlu0 %2089
        %v2091 = vsel %vm2036, %v2074, 0.0
        %2092 = vadd.xlane.f32.xlu0 %v2091
        %v2093 = vpop.xlane.xlu0 %2092
        %v2094 = vsel %vm2036, %v2076, 0.0
        %2095 = vadd.xlane.f32.xlu0 %v2094
        %v2096 = vpop.xlane.xlu0 %2095
        %v2097 = vsel %vm2036, %v2078, 0.0
        %2098 = vadd.xlane.f32.xlu0 %v2097
        %v2099 = vpop.xlane.xlu0 %2098
        %v2100 = vsel %vm2036, %v2080, 0.0
        %2101 = vadd.xlane.f32.xlu0 %v2100
        %v2102 = vpop.xlane.xlu0 %2101
        %v2103 = vsel %vm2036, %v2082, 0.0
        %2104 = vadd.xlane.f32.xlu0 %v2103
        %v2105 = vpop.xlane.xlu0 %2104
        %v2106 = vsel %vm2036, %v2084, 0.0
        %2107 = vadd.xlane.f32.xlu0 %v2106
        %v2108 = vpop.xlane.xlu0 %2107
        %v2109 = vrcp.pop %v2087
        %v2110 = vrcp.pop %v2090
        %v2111 = vrcp.pop %v2093
        %v2112 = vrcp.pop %v2096
        %v2113 = vrcp.pop %v2099
        %v2114 = vrcp.pop %v2102
        %v2115 = vrcp.pop %v2105
        %v2116 = vrcp.pop %v2108
        %v2117 = vmul.f32 %v2070, %v2109
        %v2118 = vmul.f32 %v2072, %v2110
        %v2119 = vmul.f32 %v2074, %v2111
        %v2120 = vmul.f32 %v2076, %v2112
        %v2121 = vmul.f32 %v2078, %v2113
        %v2122 = vmul.f32 %v2080, %v2114
        %v2123 = vmul.f32 %v2082, %v2115
        %v2124 = vmul.f32 %v2084, %v2116
        %v2125 = vpack.c.bf16 %v2118, %v2117
        %v2126 = vpack.c.bf16 %v2120, %v2119
        %v2127 = vpack.c.bf16 %v2122, %v2121
        %v2128 = vpack.c.bf16 %v2124, %v2123
        %v2137 = vunpack.c.l.b16 %v521
        %v2138 = vunpack.c.l.b16 %v522
        %v2139 = vunpack.c.l.b16 %v523
        %v2140 = vunpack.c.l.b16 %v524
        %v2141 = vunpack.c.l.b16 %v525
        %v2142 = vunpack.c.l.b16 %v526
        %v2143 = vunpack.c.l.b16 %v527
        %v2144 = vunpack.c.l.b16 %v528
        %v2145 = vpack.c.b16 %v2138, %v2137
        %v2146 = vpack.c.b16 %v2140, %v2139
        %v2147 = vpack.c.b16 %v2142, %v2141
        %v2148 = vpack.c.b16 %v2144, %v2143
        %v2154 = vsel %vm2036, %v2125, 0
        %v2157 = vsel %vm2036, %v2126, 0
        %v2160 = vsel %vm2036, %v2127, 0
        %v2163 = vsel %vm2036, %v2128, 0
        %2165 = vmatprep.subr.bf16.mxu0 0
        %2166 = vmatpush1.bf16.msra.mxu0 %v2145
        %2167 = vmatprep.subr.bf16.mxu0 0
        %2168 = vmatpush1.bf16.msra.mxu0 %v2146
        %2169 = vmatprep.subr.bf16.mxu0 0
        %2170 = vmatpush1.bf16.msra.mxu0 %v2147
        %2171 = vmatprep.subr.bf16.mxu0 0
        %2172 = vmatpush1.bf16.msra.mxu0 %v2148
        %2173 = vmatprep.subr.bf16.mxu0 0
        %2174 = vmatpush1.bf16.msra.mxu0 0
        %2175 = vmatprep.subr.bf16.mxu0 0
        %2176 = vmatpush1.bf16.msra.mxu0 0
        %2177 = vmatprep.subr.bf16.mxu0 0
        %2178 = vmatpush1.bf16.msra.mxu0 0
        %2179 = vmatprep.subr.bf16.mxu0 0
        %2180 = vmatpush1.bf16.msra.mxu0 0
        %2181 = vmatprep.subr.bf16.mxu0 0
        %2182 = vmatpush1.bf16.msra.mxu0 0
        %2183 = vmatprep.subr.bf16.mxu0 0
        %2184 = vmatpush1.bf16.msra.mxu0 0
        %2185 = vmatprep.subr.bf16.mxu0 0
        %2186 = vmatpush1.bf16.msra.mxu0 0
        %2187 = vmatprep.subr.bf16.mxu0 0
        %2188 = vmatpush1.bf16.msra.mxu0 0
        %2189 = vmatprep.subr.bf16.mxu0 0
        %2190 = vmatpush1.bf16.msra.mxu0 0
        %2191 = vmatprep.subr.bf16.mxu0 0
        %2192 = vmatpush1.bf16.msra.mxu0 0
        %2193 = vmatprep.subr.bf16.mxu0 0
        %2194 = vmatpush1.bf16.msra.mxu0 0
        %2195 = vmatprep.subr.bf16.mxu0 0
        %2196 = vmatpush1.bf16.msra.mxu0 0
        %2197 = vmatprep.mubr.bf16.mxu0 0
        %2198 = vmatmul.mubr.bf16.gmra.mrb[0].mxu0 %v2154
        %v2199 = vpop.f32.mrb[0].mxu0
        %v2200 = vadd.f32 0.0, %v2199
        %v2201 = vpop.f32.mrb[0].mxu0
        %v2202 = vpop.f32.mrb[0].mxu0
        %v2203 = vadd.f32 0.0, %v2202
        %v2204 = vpop.f32.mrb[0].mxu0
        %2205 = vmatprep.mubr.bf16.mxu0 0
        %2206 = vmatmul.mubr.bf16.gmra.mrb[0].mxu0 %v2157
        %v2207 = vpop.f32.mrb[0].mxu0
        %v2208 = vadd.f32 0.0, %v2207
        %v2209 = vpop.f32.mrb[0].mxu0
        %v2210 = vpop.f32.mrb[0].mxu0
        %v2211 = vadd.f32 0.0, %v2210
        %v2212 = vpop.f32.mrb[0].mxu0
        %2213 = vmatprep.mubr.bf16.mxu0 0
        %2214 = vmatmul.mubr.bf16.gmra.mrb[0].mxu0 %v2160
        %v2215 = vpop.f32.mrb[0].mxu0
        %v2216 = vadd.f32 0.0, %v2215
        %v2217 = vpop.f32.mrb[0].mxu0
        %v2218 = vpop.f32.mrb[0].mxu0
        %v2219 = vadd.f32 0.0, %v2218
        %v2220 = vpop.f32.mrb[0].mxu0
        %2221 = vmatprep.mubr.bf16.mxu0 0
        %2222 = vmatmul.mubr.bf16.gmra.mrb[0].mxu0 %v2163
        %v2223 = vpop.f32.mrb[0].mxu0
        %v2224 = vadd.f32 0.0, %v2223
        %v2225 = vpop.f32.mrb[0].mxu0
        %v2226 = vpop.f32.mrb[0].mxu0
        %v2227 = vadd.f32 0.0, %v2226
        %v2228 = vpop.f32.mrb[0].mxu0
        %2229 = vdwg.mxu0
        %2230 = vst.msk [vmem:[%s338] sm:$0xff] %vm705, %v2200
        %2231 = vst.msk [vmem:[%s338 + $0x8] sm:$0xff] %vm705, %v2203
        %2232 = vst.msk [vmem:[%s338 + $0x10] sm:$0xff] %vm705, %v2208
        %2233 = vst.msk [vmem:[%s338 + $0x18] sm:$0xff] %vm705, %v2211
        %2234 = vst.msk [vmem:[%s338 + $0x20] sm:$0xff] %vm705, %v2216
        %2235 = vst.msk [vmem:[%s338 + $0x28] sm:$0xff] %vm705, %v2219
        %2236 = vst.msk [vmem:[%s338 + $0x30] sm:$0xff] %vm705, %v2224
        %2237 = vst.msk [vmem:[%s338 + $0x38] sm:$0xff] %vm705, %v2227
        %s2238 = scalar_lea.vmem %s351, 32
        %v2239 = vld [vmem:[%s2238] sm:$0xf]
        %v2240 = vld [vmem:[%s2238 + $0x4] sm:$0xf]
        %v2241 = vld [vmem:[%s2238 + $0x8] sm:$0xf]
        %v2242 = vld [vmem:[%s2238 + $0xc] sm:$0xf]
        %v2243 = vld [vmem:[%s2238 + $0x10] sm:$0xf]
        %v2244 = vld [vmem:[%s2238 + $0x14] sm:$0xf]
        %v2245 = vld [vmem:[%s2238 + $0x18] sm:$0xf]
        %v2246 = vld [vmem:[%s2238 + $0x1c] sm:$0xf]
        %s2247 = scalar_lea.vmem %s362, 32
        %v2248 = vld [vmem:[%s2247] sm:$0xf]
        %v2249 = vld [vmem:[%s2247 + $0x4] sm:$0xf]
        %v2250 = vld [vmem:[%s2247 + $0x8] sm:$0xf]
        %v2251 = vld [vmem:[%s2247 + $0xc] sm:$0xf]
        %v2252 = vld [vmem:[%s2247 + $0x10] sm:$0xf]
        %v2253 = vld [vmem:[%s2247 + $0x14] sm:$0xf]
        %v2254 = vld [vmem:[%s2247 + $0x18] sm:$0xf]
        %v2255 = vld [vmem:[%s2247 + $0x1c] sm:$0xf]
        %s2256 = scalar_lea.vmem %s373, 32
        %v2257 = vld [vmem:[%s2256] sm:$0xf]
        %v2258 = vld [vmem:[%s2256 + $0x4] sm:$0xf]
        %v2259 = vld [vmem:[%s2256 + $0x8] sm:$0xf]
        %v2260 = vld [vmem:[%s2256 + $0xc] sm:$0xf]
        %v2261 = vld [vmem:[%s2256 + $0x10] sm:$0xf]
        %v2262 = vld [vmem:[%s2256 + $0x14] sm:$0xf]
        %v2263 = vld [vmem:[%s2256 + $0x18] sm:$0xf]
        %v2264 = vld [vmem:[%s2256 + $0x1c] sm:$0xf]
        %v2265 = vadd.bf16 %v2248, %v441
        %v2266 = vadd.bf16 %v2249, %v442
        %v2267 = vadd.bf16 %v2250, %v443
        %v2268 = vadd.bf16 %v2251, %v444
        %v2269 = vadd.bf16 %v2252, %v445
        %v2270 = vadd.bf16 %v2253, %v446
        %v2271 = vadd.bf16 %v2254, %v447
        %v2272 = vadd.bf16 %v2255, %v448
        %v2273 = vadd.bf16 %v2248, %v449
        %v2274 = vadd.bf16 %v2249, %v450
        %v2275 = vadd.bf16 %v2250, %v451
        %v2276 = vadd.bf16 %v2251, %v452
        %v2277 = vadd.bf16 %v2252, %v453
        %v2278 = vadd.bf16 %v2253, %v454
        %v2279 = vadd.bf16 %v2254, %v455
        %v2280 = vadd.bf16 %v2255, %v456
        %v2281 = vadd.bf16 %v2248, %v457
        %v2282 = vadd.bf16 %v2249, %v458
        %v2283 = vadd.bf16 %v2250, %v459
        %v2284 = vadd.bf16 %v2251, %v460
        %v2285 = vadd.bf16 %v2252, %v461
        %v2286 = vadd.bf16 %v2253, %v462
        %v2287 = vadd.bf16 %v2254, %v463
        %v2288 = vadd.bf16 %v2255, %v464
        %v2289 = vadd.bf16 %v2248, %v465
        %v2290 = vadd.bf16 %v2249, %v466
        %v2291 = vadd.bf16 %v2250, %v467
        %v2292 = vadd.bf16 %v2251, %v468
        %v2293 = vadd.bf16 %v2252, %v469
        %v2294 = vadd.bf16 %v2253, %v470
        %v2295 = vadd.bf16 %v2254, %v471
        %v2296 = vadd.bf16 %v2255, %v472
        %v2297 = vadd.bf16 %v2248, %v473
        %v2298 = vadd.bf16 %v2249, %v474
        %v2299 = vadd.bf16 %v2250, %v475
        %v2300 = vadd.bf16 %v2251, %v476
        %v2301 = vadd.bf16 %v2252, %v477
        %v2302 = vadd.bf16 %v2253, %v478
        %v2303 = vadd.bf16 %v2254, %v479
        %v2304 = vadd.bf16 %v2255, %v480
        %v2305 = vadd.bf16 %v2248, %v481
        %v2306 = vadd.bf16 %v2249, %v482
        %v2307 = vadd.bf16 %v2250, %v483
        %v2308 = vadd.bf16 %v2251, %v484
        %v2309 = vadd.bf16 %v2252, %v485
        %v2310 = vadd.bf16 %v2253, %v486
        %v2311 = vadd.bf16 %v2254, %v487
        %v2312 = vadd.bf16 %v2255, %v488
        %v2313 = vadd.bf16 %v2248, %v489
        %v2314 = vadd.bf16 %v2249, %v490
        %v2315 = vadd.bf16 %v2250, %v491
        %v2316 = vadd.bf16 %v2251, %v492
        %v2317 = vadd.bf16 %v2252, %v493
        %v2318 = vadd.bf16 %v2253, %v494
        %v2319 = vadd.bf16 %v2254, %v495
        %v2320 = vadd.bf16 %v2255, %v496
        %v2321 = vadd.bf16 %v2248, %v497
        %v2322 = vadd.bf16 %v2249, %v498
        %v2323 = vadd.bf16 %v2250, %v499
        %v2324 = vadd.bf16 %v2251, %v500
        %v2325 = vadd.bf16 %v2252, %v501
        %v2326 = vadd.bf16 %v2253, %v502
        %v2327 = vadd.bf16 %v2254, %v503
        %v2328 = vadd.bf16 %v2255, %v504
        %v2329 = vcombine.low %v2239, %v2243
        %v2331 = vunpack.c.l.s4 1983009808
        %v2332 = vunpack.c.0.s8 %v2331
        %v2333 = vlaneseq
        %v2334 = vshrl.u32 %v2333, 7
        %v2335 = vsub.s32 %v2332, %v2334
        %v2336 = vrot.slane %v2329, %v2335
        %v2337 = vcombine.low %v2241, %v2245
        %v2339 = vunpack.c.l.s4 1983009808
        %v2340 = vunpack.c.0.s8 %v2339
        %v2341 = vlaneseq
        %v2342 = vshrl.u32 %v2341, 7
        %v2343 = vsub.s32 %v2340, %v2342
        %v2344 = vrot.slane %v2337, %v2343
        %v2345 = vcombine.low %v2336, %v2344
        %v2346 = vcombine.high %v2336, %v2344
        %v2348 = vunpack.c.l.s4 1934713408
        %v2349 = vunpack.c.0.s8 %v2348
        %v2350 = vlaneseq
        %v2351 = vshrl.u32 %v2350, 7
        %v2352 = vsub.s32 %v2349, %v2351
        %v2353 = vrot.slane %v2345, %v2352
        %v2355 = vunpack.c.l.s4 1934713408
        %v2356 = vunpack.c.0.s8 %v2355
        %v2357 = vlaneseq
        %v2358 = vshrl.u32 %v2357, 7
        %v2359 = vsub.s32 %v2356, %v2358
        %v2360 = vrot.slane %v2346, %v2359
        %v2361 = vcombine.high %v2353, 0
        %v2362 = vcombine.high %v2360, 0
        %v2363 = vcombine.low %v2240, %v2244
        %v2365 = vunpack.c.l.s4 1983009808
        %v2366 = vunpack.c.0.s8 %v2365
        %v2367 = vlaneseq
        %v2368 = vshrl.u32 %v2367, 7
        %v2369 = vsub.s32 %v2366, %v2368
        %v2370 = vrot.slane %v2363, %v2369
        %v2371 = vcombine.low %v2242, %v2246
        %v2373 = vunpack.c.l.s4 1983009808
        %v2374 = vunpack.c.0.s8 %v2373
        %v2375 = vlaneseq
        %v2376 = vshrl.u32 %v2375, 7
        %v2377 = vsub.s32 %v2374, %v2376
        %v2378 = vrot.slane %v2371, %v2377
        %v2379 = vcombine.low %v2370, %v2378
        %v2380 = vcombine.high %v2370, %v2378
        %v2382 = vunpack.c.l.s4 1934713408
        %v2383 = vunpack.c.0.s8 %v2382
        %v2384 = vlaneseq
        %v2385 = vshrl.u32 %v2384, 7
        %v2386 = vsub.s32 %v2383, %v2385
        %v2387 = vrot.slane %v2379, %v2386
        %v2389 = vunpack.c.l.s4 1934713408
        %v2390 = vunpack.c.0.s8 %v2389
        %v2391 = vlaneseq
        %v2392 = vshrl.u32 %v2391, 7
        %v2393 = vsub.s32 %v2390, %v2392
        %v2394 = vrot.slane %v2380, %v2393
        %v2395 = vcombine.high %v2387, 0
        %v2396 = vcombine.high %v2394, 0
        %v2399 = vpack.i.b16 %v2387, %v2353
        %v2400 = vshrl.u32 %v2353, 16
        %v2401 = vshrl.u32 %v2387, 16
        %v2402 = vpack.i.b16 %v2401, %v2400
        %v2405 = vpack.i.b16 %v2395, %v2361
        %v2406 = vshrl.u32 %v2361, 16
        %v2407 = vshrl.u32 %v2395, 16
        %v2408 = vpack.i.b16 %v2407, %v2406
        %v2411 = vpack.i.b16 %v2394, %v2360
        %v2412 = vshrl.u32 %v2360, 16
        %v2413 = vshrl.u32 %v2394, 16
        %v2414 = vpack.i.b16 %v2413, %v2412
        %v2417 = vpack.i.b16 %v2396, %v2362
        %v2418 = vshrl.u32 %v2362, 16
        %v2419 = vshrl.u32 %v2396, 16
        %v2420 = vpack.i.b16 %v2419, %v2418
        %v2422 = vsel %vm705, %v2399, 0
        %2424 = vmatprep.subr.bf16.mxu0 0
        %2425 = vmatpush1.bf16.xpose.msra.mxu0 %v710
        %2426 = vmatprep.subr.bf16.mxu0 0
        %2427 = vmatpush1.bf16.xpose.msra.mxu0 %v713
        %2428 = vmatprep.subr.bf16.mxu0 0
        %2429 = vmatpush1.bf16.xpose.msra.mxu0 %v716
        %2430 = vmatprep.subr.bf16.mxu0 0
        %2431 = vmatpush1.bf16.xpose.msra.mxu0 %v719
        %2432 = vmatprep.subr.bf16.mxu0 0
        %2433 = vmatpush1.bf16.xpose.msra.mxu0 0
        %2434 = vmatprep.subr.bf16.mxu0 0
        %2435 = vmatpush1.bf16.xpose.msra.mxu0 0
        %2436 = vmatprep.subr.bf16.mxu0 0
        %2437 = vmatpush1.bf16.xpose.msra.mxu0 0
        %2438 = vmatprep.subr.bf16.mxu0 0
        %2439 = vmatpush1.bf16.xpose.msra.mxu0 0
        %2440 = vmatprep.subr.bf16.mxu0 0
        %2441 = vmatpush1.bf16.xpose.msra.mxu0 0
        %2442 = vmatprep.subr.bf16.mxu0 0
        %2443 = vmatpush1.bf16.xpose.msra.mxu0 0
        %2444 = vmatprep.subr.bf16.mxu0 0
        %2445 = vmatpush1.bf16.xpose.msra.mxu0 0
        %2446 = vmatprep.subr.bf16.mxu0 0
        %2447 = vmatpush1.bf16.xpose.msra.mxu0 0
        %2448 = vmatprep.subr.bf16.mxu0 0
        %2449 = vmatpush1.bf16.xpose.msra.mxu0 0
        %2450 = vmatprep.subr.bf16.mxu0 0
        %2451 = vmatpush1.bf16.xpose.msra.mxu0 0
        %2452 = vmatprep.subr.bf16.mxu0 0
        %2453 = vmatpush1.bf16.xpose.msra.mxu0 0
        %2454 = vmatprep.subr.bf16.mxu0 0
        %2455 = vmatpush1.bf16.xpose.msra.mxu0 0
        %2456 = vmatprep.mubr.bf16.mxu0 0
        %2457 = vmatmul.mubr.bf16.gmra.mrb[0].mxu0 %v2422
        %v2458 = vpop.f32.mrb[0].mxu0
        %v2459 = vadd.f32 0.0, %v2458
        %v2460 = vpop.f32.mrb[0].mxu0
        %v2461 = vpop.f32.mrb[0].mxu0
        %v2462 = vpop.f32.mrb[0].mxu0
        %2463 = vdwg.mxu0
        %v2465 = vsel %vm705, %v2402, 0
        %2467 = vmatprep.subr.bf16.mxu0 0
        %2468 = vmatpush1.bf16.xpose.msra.mxu0 %v785
        %2469 = vmatprep.subr.bf16.mxu0 0
        %2470 = vmatpush1.bf16.xpose.msra.mxu0 %v788
        %2471 = vmatprep.subr.bf16.mxu0 0
        %2472 = vmatpush1.bf16.xpose.msra.mxu0 %v791
        %2473 = vmatprep.subr.bf16.mxu0 0
        %2474 = vmatpush1.bf16.xpose.msra.mxu0 %v794
        %2475 = vmatprep.subr.bf16.mxu0 0
        %2476 = vmatpush1.bf16.xpose.msra.mxu0 0
        %2477 = vmatprep.subr.bf16.mxu0 0
        %2478 = vmatpush1.bf16.xpose.msra.mxu0 0
        %2479 = vmatprep.subr.bf16.mxu0 0
        %2480 = vmatpush1.bf16.xpose.msra.mxu0 0
        %2481 = vmatprep.subr.bf16.mxu0 0
        %2482 = vmatpush1.bf16.xpose.msra.mxu0 0
        %2483 = vmatprep.subr.bf16.mxu0 0
        %2484 = vmatpush1.bf16.xpose.msra.mxu0 0
        %2485 = vmatprep.subr.bf16.mxu0 0
        %2486 = vmatpush1.bf16.xpose.msra.mxu0 0
        %2487 = vmatprep.subr.bf16.mxu0 0
        %2488 = vmatpush1.bf16.xpose.msra.mxu0 0
        %2489 = vmatprep.subr.bf16.mxu0 0
        %2490 = vmatpush1.bf16.xpose.msra.mxu0 0
        %2491 = vmatprep.subr.bf16.mxu0 0
        %2492 = vmatpush1.bf16.xpose.msra.mxu0 0
        %2493 = vmatprep.subr.bf16.mxu0 0
        %2494 = vmatpush1.bf16.xpose.msra.mxu0 0
        %2495 = vmatprep.subr.bf16.mxu0 0
        %2496 = vmatpush1.bf16.xpose.msra.mxu0 0
        %2497 = vmatprep.subr.bf16.mxu0 0
        %2498 = vmatpush1.bf16.xpose.msra.mxu0 0
        %2499 = vmatprep.mubr.bf16.mxu0 0
        %2500 = vmatmul.mubr.bf16.gmra.mrb[0].mxu0 %v2465
        %v2501 = vpop.f32.mrb[0].mxu0
        %v2502 = vadd.f32 0.0, %v2501
        %v2503 = vpop.f32.mrb[0].mxu0
        %v2504 = vpop.f32.mrb[0].mxu0
        %v2505 = vpop.f32.mrb[0].mxu0
        %2506 = vdwg.mxu0
        %v2508 = vsel %vm705, %v2405, 0
        %2510 = vmatprep.subr.bf16.mxu0 0
        %2511 = vmatpush1.bf16.xpose.msra.mxu0 %v860
        %2512 = vmatprep.subr.bf16.mxu0 0
        %2513 = vmatpush1.bf16.xpose.msra.mxu0 %v863
        %2514 = vmatprep.subr.bf16.mxu0 0
        %2515 = vmatpush1.bf16.xpose.msra.mxu0 %v866
        %2516 = vmatprep.subr.bf16.mxu0 0
        %2517 = vmatpush1.bf16.xpose.msra.mxu0 %v869
        %2518 = vmatprep.subr.bf16.mxu0 0
        %2519 = vmatpush1.bf16.xpose.msra.mxu0 0
        %2520 = vmatprep.subr.bf16.mxu0 0
        %2521 = vmatpush1.bf16.xpose.msra.mxu0 0
        %2522 = vmatprep.subr.bf16.mxu0 0
        %2523 = vmatpush1.bf16.xpose.msra.mxu0 0
        %2524 = vmatprep.subr.bf16.mxu0 0
        %2525 = vmatpush1.bf16.xpose.msra.mxu0 0
        %2526 = vmatprep.subr.bf16.mxu0 0
        %2527 = vmatpush1.bf16.xpose.msra.mxu0 0
        %2528 = vmatprep.subr.bf16.mxu0 0
        %2529 = vmatpush1.bf16.xpose.msra.mxu0 0
        %2530 = vmatprep.subr.bf16.mxu0 0
        %2531 = vmatpush1.bf16.xpose.msra.mxu0 0
        %2532 = vmatprep.subr.bf16.mxu0 0
        %2533 = vmatpush1.bf16.xpose.msra.mxu0 0
        %2534 = vmatprep.subr.bf16.mxu0 0
        %2535 = vmatpush1.bf16.xpose.msra.mxu0 0
        %2536 = vmatprep.subr.bf16.mxu0 0
        %2537 = vmatpush1.bf16.xpose.msra.mxu0 0
        %2538 = vmatprep.subr.bf16.mxu0 0
        %2539 = vmatpush1.bf16.xpose.msra.mxu0 0
        %2540 = vmatprep.subr.bf16.mxu0 0
        %2541 = vmatpush1.bf16.xpose.msra.mxu0 0
        %2542 = vmatprep.mubr.bf16.mxu0 0
        %2543 = vmatmul.mubr.bf16.gmra.mrb[0].mxu0 %v2508
        %v2544 = vpop.f32.mrb[0].mxu0
        %v2545 = vadd.f32 0.0, %v2544
        %v2546 = vpop.f32.mrb[0].mxu0
        %v2547 = vpop.f32.mrb[0].mxu0
        %v2548 = vpop.f32.mrb[0].mxu0
        %2549 = vdwg.mxu0
        %v2551 = vsel %vm705, %v2408, 0
        %2553 = vmatprep.subr.bf16.mxu0 0
        %2554 = vmatpush1.bf16.xpose.msra.mxu0 %v935
        %2555 = vmatprep.subr.bf16.mxu0 0
        %2556 = vmatpush1.bf16.xpose.msra.mxu0 %v938
        %2557 = vmatprep.subr.bf16.mxu0 0
        %2558 = vmatpush1.bf16.xpose.msra.mxu0 %v941
        %2559 = vmatprep.subr.bf16.mxu0 0
        %2560 = vmatpush1.bf16.xpose.msra.mxu0 %v944
        %2561 = vmatprep.subr.bf16.mxu0 0
        %2562 = vmatpush1.bf16.xpose.msra.mxu0 0
        %2563 = vmatprep.subr.bf16.mxu0 0
        %2564 = vmatpush1.bf16.xpose.msra.mxu0 0
        %2565 = vmatprep.subr.bf16.mxu0 0
        %2566 = vmatpush1.bf16.xpose.msra.mxu0 0
        %2567 = vmatprep.subr.bf16.mxu0 0
        %2568 = vmatpush1.bf16.xpose.msra.mxu0 0
        %2569 = vmatprep.subr.bf16.mxu0 0
        %2570 = vmatpush1.bf16.xpose.msra.mxu0 0
        %2571 = vmatprep.subr.bf16.mxu0 0
        %2572 = vmatpush1.bf16.xpose.msra.mxu0 0
        %2573 = vmatprep.subr.bf16.mxu0 0
        %2574 = vmatpush1.bf16.xpose.msra.mxu0 0
        %2575 = vmatprep.subr.bf16.mxu0 0
        %2576 = vmatpush1.bf16.xpose.msra.mxu0 0
        %2577 = vmatprep.subr.bf16.mxu0 0
        %2578 = vmatpush1.bf16.xpose.msra.mxu0 0
        %2579 = vmatprep.subr.bf16.mxu0 0
        %2580 = vmatpush1.bf16.xpose.msra.mxu0 0
        %2581 = vmatprep.subr.bf16.mxu0 0
        %2582 = vmatpush1.bf16.xpose.msra.mxu0 0
        %2583 = vmatprep.subr.bf16.mxu0 0
        %2584 = vmatpush1.bf16.xpose.msra.mxu0 0
        %2585 = vmatprep.mubr.bf16.mxu0 0
        %2586 = vmatmul.mubr.bf16.gmra.mrb[0].mxu0 %v2551
        %v2587 = vpop.f32.mrb[0].mxu0
        %v2588 = vadd.f32 0.0, %v2587
        %v2589 = vpop.f32.mrb[0].mxu0
        %v2590 = vpop.f32.mrb[0].mxu0
        %v2591 = vpop.f32.mrb[0].mxu0
        %2592 = vdwg.mxu0
        %v2594 = vsel %vm705, %v2411, 0
        %2596 = vmatprep.subr.bf16.mxu0 0
        %2597 = vmatpush1.bf16.xpose.msra.mxu0 %v1010
        %2598 = vmatprep.subr.bf16.mxu0 0
        %2599 = vmatpush1.bf16.xpose.msra.mxu0 %v1013
        %2600 = vmatprep.subr.bf16.mxu0 0
        %2601 = vmatpush1.bf16.xpose.msra.mxu0 %v1016
        %2602 = vmatprep.subr.bf16.mxu0 0
        %2603 = vmatpush1.bf16.xpose.msra.mxu0 %v1019
        %2604 = vmatprep.subr.bf16.mxu0 0
        %2605 = vmatpush1.bf16.xpose.msra.mxu0 0
        %2606 = vmatprep.subr.bf16.mxu0 0
        %2607 = vmatpush1.bf16.xpose.msra.mxu0 0
        %2608 = vmatprep.subr.bf16.mxu0 0
        %2609 = vmatpush1.bf16.xpose.msra.mxu0 0
        %2610 = vmatprep.subr.bf16.mxu0 0
        %2611 = vmatpush1.bf16.xpose.msra.mxu0 0
        %2612 = vmatprep.subr.bf16.mxu0 0
        %2613 = vmatpush1.bf16.xpose.msra.mxu0 0
        %2614 = vmatprep.subr.bf16.mxu0 0
        %2615 = vmatpush1.bf16.xpose.msra.mxu0 0
        %2616 = vmatprep.subr.bf16.mxu0 0
        %2617 = vmatpush1.bf16.xpose.msra.mxu0 0
        %2618 = vmatprep.subr.bf16.mxu0 0
        %2619 = vmatpush1.bf16.xpose.msra.mxu0 0
        %2620 = vmatprep.subr.bf16.mxu0 0
        %2621 = vmatpush1.bf16.xpose.msra.mxu0 0
        %2622 = vmatprep.subr.bf16.mxu0 0
        %2623 = vmatpush1.bf16.xpose.msra.mxu0 0
        %2624 = vmatprep.subr.bf16.mxu0 0
        %2625 = vmatpush1.bf16.xpose.msra.mxu0 0
        %2626 = vmatprep.subr.bf16.mxu0 0
        %2627 = vmatpush1.bf16.xpose.msra.mxu0 0
        %2628 = vmatprep.mubr.bf16.mxu0 0
        %2629 = vmatmul.mubr.bf16.gmra.mrb[0].mxu0 %v2594
        %v2630 = vpop.f32.mrb[0].mxu0
        %v2631 = vadd.f32 0.0, %v2630
        %v2632 = vpop.f32.mrb[0].mxu0
        %v2633 = vpop.f32.mrb[0].mxu0
        %v2634 = vpop.f32.mrb[0].mxu0
        %2635 = vdwg.mxu0
        %v2637 = vsel %vm705, %v2414, 0
        %2639 = vmatprep.subr.bf16.mxu0 0
        %2640 = vmatpush1.bf16.xpose.msra.mxu0 %v1085
        %2641 = vmatprep.subr.bf16.mxu0 0
        %2642 = vmatpush1.bf16.xpose.msra.mxu0 %v1088
        %2643 = vmatprep.subr.bf16.mxu0 0
        %2644 = vmatpush1.bf16.xpose.msra.mxu0 %v1091
        %2645 = vmatprep.subr.bf16.mxu0 0
        %2646 = vmatpush1.bf16.xpose.msra.mxu0 %v1094
        %2647 = vmatprep.subr.bf16.mxu0 0
        %2648 = vmatpush1.bf16.xpose.msra.mxu0 0
        %2649 = vmatprep.subr.bf16.mxu0 0
        %2650 = vmatpush1.bf16.xpose.msra.mxu0 0
        %2651 = vmatprep.subr.bf16.mxu0 0
        %2652 = vmatpush1.bf16.xpose.msra.mxu0 0
        %2653 = vmatprep.subr.bf16.mxu0 0
        %2654 = vmatpush1.bf16.xpose.msra.mxu0 0
        %2655 = vmatprep.subr.bf16.mxu0 0
        %2656 = vmatpush1.bf16.xpose.msra.mxu0 0
        %2657 = vmatprep.subr.bf16.mxu0 0
        %2658 = vmatpush1.bf16.xpose.msra.mxu0 0
        %2659 = vmatprep.subr.bf16.mxu0 0
        %2660 = vmatpush1.bf16.xpose.msra.mxu0 0
        %2661 = vmatprep.subr.bf16.mxu0 0
        %2662 = vmatpush1.bf16.xpose.msra.mxu0 0
        %2663 = vmatprep.subr.bf16.mxu0 0
        %2664 = vmatpush1.bf16.xpose.msra.mxu0 0
        %2665 = vmatprep.subr.bf16.mxu0 0
        %2666 = vmatpush1.bf16.xpose.msra.mxu0 0
        %2667 = vmatprep.subr.bf16.mxu0 0
        %2668 = vmatpush1.bf16.xpose.msra.mxu0 0
        %2669 = vmatprep.subr.bf16.mxu0 0
        %2670 = vmatpush1.bf16.xpose.msra.mxu0 0
        %2671 = vmatprep.mubr.bf16.mxu0 0
        %2672 = vmatmul.mubr.bf16.gmra.mrb[0].mxu0 %v2637
        %v2673 = vpop.f32.mrb[0].mxu0
        %v2674 = vadd.f32 0.0, %v2673
        %v2675 = vpop.f32.mrb[0].mxu0
        %v2676 = vpop.f32.mrb[0].mxu0
        %v2677 = vpop.f32.mrb[0].mxu0
        %2678 = vdwg.mxu0
        %v2680 = vsel %vm705, %v2417, 0
        %2682 = vmatprep.subr.bf16.mxu0 0
        %2683 = vmatpush1.bf16.xpose.msra.mxu0 %v1160
        %2684 = vmatprep.subr.bf16.mxu0 0
        %2685 = vmatpush1.bf16.xpose.msra.mxu0 %v1163
        %2686 = vmatprep.subr.bf16.mxu0 0
        %2687 = vmatpush1.bf16.xpose.msra.mxu0 %v1166
        %2688 = vmatprep.subr.bf16.mxu0 0
        %2689 = vmatpush1.bf16.xpose.msra.mxu0 %v1169
        %2690 = vmatprep.subr.bf16.mxu0 0
        %2691 = vmatpush1.bf16.xpose.msra.mxu0 0
        %2692 = vmatprep.subr.bf16.mxu0 0
        %2693 = vmatpush1.bf16.xpose.msra.mxu0 0
        %2694 = vmatprep.subr.bf16.mxu0 0
        %2695 = vmatpush1.bf16.xpose.msra.mxu0 0
        %2696 = vmatprep.subr.bf16.mxu0 0
        %2697 = vmatpush1.bf16.xpose.msra.mxu0 0
        %2698 = vmatprep.subr.bf16.mxu0 0
        %2699 = vmatpush1.bf16.xpose.msra.mxu0 0
        %2700 = vmatprep.subr.bf16.mxu0 0
        %2701 = vmatpush1.bf16.xpose.msra.mxu0 0
        %2702 = vmatprep.subr.bf16.mxu0 0
        %2703 = vmatpush1.bf16.xpose.msra.mxu0 0
        %2704 = vmatprep.subr.bf16.mxu0 0
        %2705 = vmatpush1.bf16.xpose.msra.mxu0 0
        %2706 = vmatprep.subr.bf16.mxu0 0
        %2707 = vmatpush1.bf16.xpose.msra.mxu0 0
        %2708 = vmatprep.subr.bf16.mxu0 0
        %2709 = vmatpush1.bf16.xpose.msra.mxu0 0
        %2710 = vmatprep.subr.bf16.mxu0 0
        %2711 = vmatpush1.bf16.xpose.msra.mxu0 0
        %2712 = vmatprep.subr.bf16.mxu0 0
        %2713 = vmatpush1.bf16.xpose.msra.mxu0 0
        %2714 = vmatprep.mubr.bf16.mxu0 0
        %2715 = vmatmul.mubr.bf16.gmra.mrb[0].mxu0 %v2680
        %v2716 = vpop.f32.mrb[0].mxu0
        %v2717 = vadd.f32 0.0, %v2716
        %v2718 = vpop.f32.mrb[0].mxu0
        %v2719 = vpop.f32.mrb[0].mxu0
        %v2720 = vpop.f32.mrb[0].mxu0
        %2721 = vdwg.mxu0
        %v2723 = vsel %vm705, %v2420, 0
        %2725 = vmatprep.subr.bf16.mxu0 0
        %2726 = vmatpush1.bf16.xpose.msra.mxu0 %v1235
        %2727 = vmatprep.subr.bf16.mxu0 0
        %2728 = vmatpush1.bf16.xpose.msra.mxu0 %v1238
        %2729 = vmatprep.subr.bf16.mxu0 0
        %2730 = vmatpush1.bf16.xpose.msra.mxu0 %v1241
        %2731 = vmatprep.subr.bf16.mxu0 0
        %2732 = vmatpush1.bf16.xpose.msra.mxu0 %v1244
        %2733 = vmatprep.subr.bf16.mxu0 0
        %2734 = vmatpush1.bf16.xpose.msra.mxu0 0
        %2735 = vmatprep.subr.bf16.mxu0 0
        %2736 = vmatpush1.bf16.xpose.msra.mxu0 0
        %2737 = vmatprep.subr.bf16.mxu0 0
        %2738 = vmatpush1.bf16.xpose.msra.mxu0 0
        %2739 = vmatprep.subr.bf16.mxu0 0
        %2740 = vmatpush1.bf16.xpose.msra.mxu0 0
        %2741 = vmatprep.subr.bf16.mxu0 0
        %2742 = vmatpush1.bf16.xpose.msra.mxu0 0
        %2743 = vmatprep.subr.bf16.mxu0 0
        %2744 = vmatpush1.bf16.xpose.msra.mxu0 0
        %2745 = vmatprep.subr.bf16.mxu0 0
        %2746 = vmatpush1.bf16.xpose.msra.mxu0 0
        %2747 = vmatprep.subr.bf16.mxu0 0
        %2748 = vmatpush1.bf16.xpose.msra.mxu0 0
        %2749 = vmatprep.subr.bf16.mxu0 0
        %2750 = vmatpush1.bf16.xpose.msra.mxu0 0
        %2751 = vmatprep.subr.bf16.mxu0 0
        %2752 = vmatpush1.bf16.xpose.msra.mxu0 0
        %2753 = vmatprep.subr.bf16.mxu0 0
        %2754 = vmatpush1.bf16.xpose.msra.mxu0 0
        %2755 = vmatprep.subr.bf16.mxu0 0
        %2756 = vmatpush1.bf16.xpose.msra.mxu0 0
        %2757 = vmatprep.mubr.bf16.mxu0 0
        %2758 = vmatmul.mubr.bf16.gmra.mrb[0].mxu0 %v2723
        %v2759 = vpop.f32.mrb[0].mxu0
        %v2760 = vadd.f32 0.0, %v2759
        %v2761 = vpop.f32.mrb[0].mxu0
        %v2762 = vpop.f32.mrb[0].mxu0
        %v2763 = vpop.f32.mrb[0].mxu0
        %2764 = vdwg.mxu0
        %v2765 = vcombine.low %v2459, %v2545
        %v2766 = vcombine.high %v2459, %v2545
        %v2768 = vunpack.c.l.s4 1983009808
        %v2769 = vunpack.c.0.s8 %v2768
        %v2770 = vlaneseq
        %v2771 = vshrl.u32 %v2770, 7
        %v2772 = vsub.s32 %v2769, %v2771
        %v2773 = vrot.slane %v2765, %v2772
        %v2775 = vunpack.c.l.s4 1983009808
        %v2776 = vunpack.c.0.s8 %v2775
        %v2777 = vlaneseq
        %v2778 = vshrl.u32 %v2777, 7
        %v2779 = vsub.s32 %v2776, %v2778
        %v2780 = vrot.slane %v2766, %v2779
        %v2781 = vcombine.low %v2502, %v2588
        %v2782 = vcombine.high %v2502, %v2588
        %v2784 = vunpack.c.l.s4 1983009808
        %v2785 = vunpack.c.0.s8 %v2784
        %v2786 = vlaneseq
        %v2787 = vshrl.u32 %v2786, 7
        %v2788 = vsub.s32 %v2785, %v2787
        %v2789 = vrot.slane %v2781, %v2788
        %v2791 = vunpack.c.l.s4 1983009808
        %v2792 = vunpack.c.0.s8 %v2791
        %v2793 = vlaneseq
        %v2794 = vshrl.u32 %v2793, 7
        %v2795 = vsub.s32 %v2792, %v2794
        %v2796 = vrot.slane %v2782, %v2795
        %v2797 = vcombine.low %v2631, %v2717
        %v2798 = vcombine.high %v2631, %v2717
        %v2800 = vunpack.c.l.s4 1983009808
        %v2801 = vunpack.c.0.s8 %v2800
        %v2802 = vlaneseq
        %v2803 = vshrl.u32 %v2802, 7
        %v2804 = vsub.s32 %v2801, %v2803
        %v2805 = vrot.slane %v2797, %v2804
        %v2807 = vunpack.c.l.s4 1983009808
        %v2808 = vunpack.c.0.s8 %v2807
        %v2809 = vlaneseq
        %v2810 = vshrl.u32 %v2809, 7
        %v2811 = vsub.s32 %v2808, %v2810
        %v2812 = vrot.slane %v2798, %v2811
        %v2813 = vcombine.low %v2674, %v2760
        %v2814 = vcombine.high %v2674, %v2760
        %v2816 = vunpack.c.l.s4 1983009808
        %v2817 = vunpack.c.0.s8 %v2816
        %v2818 = vlaneseq
        %v2819 = vshrl.u32 %v2818, 7
        %v2820 = vsub.s32 %v2817, %v2819
        %v2821 = vrot.slane %v2813, %v2820
        %v2823 = vunpack.c.l.s4 1983009808
        %v2824 = vunpack.c.0.s8 %v2823
        %v2825 = vlaneseq
        %v2826 = vshrl.u32 %v2825, 7
        %v2827 = vsub.s32 %v2824, %v2826
        %v2828 = vrot.slane %v2814, %v2827
        %v2829 = vcombine.low %v2773, %v2789
        %v2830 = vcombine.high %v2773, %v2789
        %v2832 = vunpack.c.l.s4 1934713408
        %v2833 = vunpack.c.0.s8 %v2832
        %v2834 = vlaneseq
        %v2835 = vshrl.u32 %v2834, 7
        %v2836 = vsub.s32 %v2833, %v2835
        %v2837 = vrot.slane %v2829, %v2836
        %v2839 = vunpack.c.l.s4 1934713408
        %v2840 = vunpack.c.0.s8 %v2839
        %v2841 = vlaneseq
        %v2842 = vshrl.u32 %v2841, 7
        %v2843 = vsub.s32 %v2840, %v2842
        %v2844 = vrot.slane %v2830, %v2843
        %v2845 = vcombine.low %v2780, %v2796
        %v2846 = vcombine.high %v2780, %v2796
        %v2848 = vunpack.c.l.s4 1934713408
        %v2849 = vunpack.c.0.s8 %v2848
        %v2850 = vlaneseq
        %v2851 = vshrl.u32 %v2850, 7
        %v2852 = vsub.s32 %v2849, %v2851
        %v2853 = vrot.slane %v2845, %v2852
        %v2855 = vunpack.c.l.s4 1934713408
        %v2856 = vunpack.c.0.s8 %v2855
        %v2857 = vlaneseq
        %v2858 = vshrl.u32 %v2857, 7
        %v2859 = vsub.s32 %v2856, %v2858
        %v2860 = vrot.slane %v2846, %v2859
        %v2861 = vcombine.low %v2805, %v2821
        %v2862 = vcombine.high %v2805, %v2821
        %v2864 = vunpack.c.l.s4 1934713408
        %v2865 = vunpack.c.0.s8 %v2864
        %v2866 = vlaneseq
        %v2867 = vshrl.u32 %v2866, 7
        %v2868 = vsub.s32 %v2865, %v2867
        %v2869 = vrot.slane %v2861, %v2868
        %v2871 = vunpack.c.l.s4 1934713408
        %v2872 = vunpack.c.0.s8 %v2871
        %v2873 = vlaneseq
        %v2874 = vshrl.u32 %v2873, 7
        %v2875 = vsub.s32 %v2872, %v2874
        %v2876 = vrot.slane %v2862, %v2875
        %v2877 = vcombine.low %v2812, %v2828
        %v2878 = vcombine.high %v2812, %v2828
        %v2880 = vunpack.c.l.s4 1934713408
        %v2881 = vunpack.c.0.s8 %v2880
        %v2882 = vlaneseq
        %v2883 = vshrl.u32 %v2882, 7
        %v2884 = vsub.s32 %v2881, %v2883
        %v2885 = vrot.slane %v2877, %v2884
        %v2887 = vunpack.c.l.s4 1934713408
        %v2888 = vunpack.c.0.s8 %v2887
        %v2889 = vlaneseq
        %v2890 = vshrl.u32 %v2889, 7
        %v2891 = vsub.s32 %v2888, %v2890
        %v2892 = vrot.slane %v2878, %v2891
        %v2893 = vcombine.low %v2837, %v2869
        %v2894 = vcombine.high %v2837, %v2869
        %v2895 = vcombine.low %v2844, %v2876
        %v2896 = vcombine.high %v2844, %v2876
        %v2897 = vcombine.low %v2853, %v2885
        %v2898 = vcombine.high %v2853, %v2885
        %v2899 = vcombine.low %v2860, %v2892
        %v2900 = vcombine.high %v2860, %v2892
        %v2909 = vunpack.c.l.b16 %v2265
        %v2910 = vunpack.c.l.b16 %v2266
        %v2911 = vunpack.c.l.b16 %v2267
        %v2912 = vunpack.c.l.b16 %v2268
        %v2913 = vunpack.c.l.b16 %v2269
        %v2914 = vunpack.c.l.b16 %v2270
        %v2915 = vunpack.c.l.b16 %v2271
        %v2916 = vunpack.c.l.b16 %v2272
        %v2917 = vpack.c.b16 %v2910, %v2909
        %v2918 = vpack.c.b16 %v2912, %v2911
        %v2919 = vpack.c.b16 %v2914, %v2913
        %v2920 = vpack.c.b16 %v2916, %v2915
        %v2922 = vsel %vm705, %v2239, 0
        %v2925 = vsel %vm705, %v2917, 0
        %v2928 = vsel %vm705, %v2918, 0
        %v2931 = vsel %vm705, %v2919, 0
        %v2934 = vsel %vm705, %v2920, 0
        %2936 = vmatprep.subr.bf16.mxu0 0
        %2937 = vmatpush1.bf16.xpose.msra.mxu0 %v2925
        %2938 = vmatprep.subr.bf16.mxu0 0
        %2939 = vmatpush1.bf16.xpose.msra.mxu0 %v2928
        %2940 = vmatprep.subr.bf16.mxu0 0
        %2941 = vmatpush1.bf16.xpose.msra.mxu0 %v2931
        %2942 = vmatprep.subr.bf16.mxu0 0
        %2943 = vmatpush1.bf16.xpose.msra.mxu0 %v2934
        %2944 = vmatprep.subr.bf16.mxu0 0
        %2945 = vmatpush1.bf16.xpose.msra.mxu0 0
        %2946 = vmatprep.subr.bf16.mxu0 0
        %2947 = vmatpush1.bf16.xpose.msra.mxu0 0
        %2948 = vmatprep.subr.bf16.mxu0 0
        %2949 = vmatpush1.bf16.xpose.msra.mxu0 0
        %2950 = vmatprep.subr.bf16.mxu0 0
        %2951 = vmatpush1.bf16.xpose.msra.mxu0 0
        %2952 = vmatprep.subr.bf16.mxu0 0
        %2953 = vmatpush1.bf16.xpose.msra.mxu0 0
        %2954 = vmatprep.subr.bf16.mxu0 0
        %2955 = vmatpush1.bf16.xpose.msra.mxu0 0
        %2956 = vmatprep.subr.bf16.mxu0 0
        %2957 = vmatpush1.bf16.xpose.msra.mxu0 0
        %2958 = vmatprep.subr.bf16.mxu0 0
        %2959 = vmatpush1.bf16.xpose.msra.mxu0 0
        %2960 = vmatprep.subr.bf16.mxu0 0
        %2961 = vmatpush1.bf16.xpose.msra.mxu0 0
        %2962 = vmatprep.subr.bf16.mxu0 0
        %2963 = vmatpush1.bf16.xpose.msra.mxu0 0
        %2964 = vmatprep.subr.bf16.mxu0 0
        %2965 = vmatpush1.bf16.xpose.msra.mxu0 0
        %2966 = vmatprep.subr.bf16.mxu0 0
        %2967 = vmatpush1.bf16.xpose.msra.mxu0 0
        %2968 = vmatprep.mubr.bf16.mxu0 0
        %2969 = vmatmul.mubr.bf16.gmra.mrb[0].mxu0 %v2922
        %v2970 = vpop.f32.mrb[0].mxu0
        %v2971 = vadd.f32 %v2893, %v2970
        %v2972 = vpop.f32.mrb[0].mxu0
        %v2973 = vpop.f32.mrb[0].mxu0
        %v2974 = vpop.f32.mrb[0].mxu0
        %2975 = vdwg.mxu0
        %v2984 = vunpack.c.l.b16 %v2273
        %v2985 = vunpack.c.l.b16 %v2274
        %v2986 = vunpack.c.l.b16 %v2275
        %v2987 = vunpack.c.l.b16 %v2276
        %v2988 = vunpack.c.l.b16 %v2277
        %v2989 = vunpack.c.l.b16 %v2278
        %v2990 = vunpack.c.l.b16 %v2279
        %v2991 = vunpack.c.l.b16 %v2280
        %v2992 = vpack.c.b16 %v2985, %v2984
        %v2993 = vpack.c.b16 %v2987, %v2986
        %v2994 = vpack.c.b16 %v2989, %v2988
        %v2995 = vpack.c.b16 %v2991, %v2990
        %v2997 = vsel %vm705, %v2240, 0
        %v3000 = vsel %vm705, %v2992, 0
        %v3003 = vsel %vm705, %v2993, 0
        %v3006 = vsel %vm705, %v2994, 0
        %v3009 = vsel %vm705, %v2995, 0
        %3011 = vmatprep.subr.bf16.mxu0 0
        %3012 = vmatpush1.bf16.xpose.msra.mxu0 %v3000
        %3013 = vmatprep.subr.bf16.mxu0 0
        %3014 = vmatpush1.bf16.xpose.msra.mxu0 %v3003
        %3015 = vmatprep.subr.bf16.mxu0 0
        %3016 = vmatpush1.bf16.xpose.msra.mxu0 %v3006
        %3017 = vmatprep.subr.bf16.mxu0 0
        %3018 = vmatpush1.bf16.xpose.msra.mxu0 %v3009
        %3019 = vmatprep.subr.bf16.mxu0 0
        %3020 = vmatpush1.bf16.xpose.msra.mxu0 0
        %3021 = vmatprep.subr.bf16.mxu0 0
        %3022 = vmatpush1.bf16.xpose.msra.mxu0 0
        %3023 = vmatprep.subr.bf16.mxu0 0
        %3024 = vmatpush1.bf16.xpose.msra.mxu0 0
        %3025 = vmatprep.subr.bf16.mxu0 0
        %3026 = vmatpush1.bf16.xpose.msra.mxu0 0
        %3027 = vmatprep.subr.bf16.mxu0 0
        %3028 = vmatpush1.bf16.xpose.msra.mxu0 0
        %3029 = vmatprep.subr.bf16.mxu0 0
        %3030 = vmatpush1.bf16.xpose.msra.mxu0 0
        %3031 = vmatprep.subr.bf16.mxu0 0
        %3032 = vmatpush1.bf16.xpose.msra.mxu0 0
        %3033 = vmatprep.subr.bf16.mxu0 0
        %3034 = vmatpush1.bf16.xpose.msra.mxu0 0
        %3035 = vmatprep.subr.bf16.mxu0 0
        %3036 = vmatpush1.bf16.xpose.msra.mxu0 0
        %3037 = vmatprep.subr.bf16.mxu0 0
        %3038 = vmatpush1.bf16.xpose.msra.mxu0 0
        %3039 = vmatprep.subr.bf16.mxu0 0
        %3040 = vmatpush1.bf16.xpose.msra.mxu0 0
        %3041 = vmatprep.subr.bf16.mxu0 0
        %3042 = vmatpush1.bf16.xpose.msra.mxu0 0
        %3043 = vmatprep.mubr.bf16.mxu0 0
        %3044 = vmatmul.mubr.bf16.gmra.mrb[0].mxu0 %v2997
        %v3045 = vpop.f32.mrb[0].mxu0
        %v3046 = vadd.f32 %v2894, %v3045
        %v3047 = vpop.f32.mrb[0].mxu0
        %v3048 = vpop.f32.mrb[0].mxu0
        %v3049 = vpop.f32.mrb[0].mxu0
        %3050 = vdwg.mxu0
        %v3059 = vunpack.c.l.b16 %v2281
        %v3060 = vunpack.c.l.b16 %v2282
        %v3061 = vunpack.c.l.b16 %v2283
        %v3062 = vunpack.c.l.b16 %v2284
        %v3063 = vunpack.c.l.b16 %v2285
        %v3064 = vunpack.c.l.b16 %v2286
        %v3065 = vunpack.c.l.b16 %v2287
        %v3066 = vunpack.c.l.b16 %v2288
        %v3067 = vpack.c.b16 %v3060, %v3059
        %v3068 = vpack.c.b16 %v3062, %v3061
        %v3069 = vpack.c.b16 %v3064, %v3063
        %v3070 = vpack.c.b16 %v3066, %v3065
        %v3072 = vsel %vm705, %v2241, 0
        %v3075 = vsel %vm705, %v3067, 0
        %v3078 = vsel %vm705, %v3068, 0
        %v3081 = vsel %vm705, %v3069, 0
        %v3084 = vsel %vm705, %v3070, 0
        %3086 = vmatprep.subr.bf16.mxu0 0
        %3087 = vmatpush1.bf16.xpose.msra.mxu0 %v3075
        %3088 = vmatprep.subr.bf16.mxu0 0
        %3089 = vmatpush1.bf16.xpose.msra.mxu0 %v3078
        %3090 = vmatprep.subr.bf16.mxu0 0
        %3091 = vmatpush1.bf16.xpose.msra.mxu0 %v3081
        %3092 = vmatprep.subr.bf16.mxu0 0
        %3093 = vmatpush1.bf16.xpose.msra.mxu0 %v3084
        %3094 = vmatprep.subr.bf16.mxu0 0
        %3095 = vmatpush1.bf16.xpose.msra.mxu0 0
        %3096 = vmatprep.subr.bf16.mxu0 0
        %3097 = vmatpush1.bf16.xpose.msra.mxu0 0
        %3098 = vmatprep.subr.bf16.mxu0 0
        %3099 = vmatpush1.bf16.xpose.msra.mxu0 0
        %3100 = vmatprep.subr.bf16.mxu0 0
        %3101 = vmatpush1.bf16.xpose.msra.mxu0 0
        %3102 = vmatprep.subr.bf16.mxu0 0
        %3103 = vmatpush1.bf16.xpose.msra.mxu0 0
        %3104 = vmatprep.subr.bf16.mxu0 0
        %3105 = vmatpush1.bf16.xpose.msra.mxu0 0
        %3106 = vmatprep.subr.bf16.mxu0 0
        %3107 = vmatpush1.bf16.xpose.msra.mxu0 0
        %3108 = vmatprep.subr.bf16.mxu0 0
        %3109 = vmatpush1.bf16.xpose.msra.mxu0 0
        %3110 = vmatprep.subr.bf16.mxu0 0
        %3111 = vmatpush1.bf16.xpose.msra.mxu0 0
        %3112 = vmatprep.subr.bf16.mxu0 0
        %3113 = vmatpush1.bf16.xpose.msra.mxu0 0
        %3114 = vmatprep.subr.bf16.mxu0 0
        %3115 = vmatpush1.bf16.xpose.msra.mxu0 0
        %3116 = vmatprep.subr.bf16.mxu0 0
        %3117 = vmatpush1.bf16.xpose.msra.mxu0 0
        %3118 = vmatprep.mubr.bf16.mxu0 0
        %3119 = vmatmul.mubr.bf16.gmra.mrb[0].mxu0 %v3072
        %v3120 = vpop.f32.mrb[0].mxu0
        %v3121 = vadd.f32 %v2895, %v3120
        %v3122 = vpop.f32.mrb[0].mxu0
        %v3123 = vpop.f32.mrb[0].mxu0
        %v3124 = vpop.f32.mrb[0].mxu0
        %3125 = vdwg.mxu0
        %v3134 = vunpack.c.l.b16 %v2289
        %v3135 = vunpack.c.l.b16 %v2290
        %v3136 = vunpack.c.l.b16 %v2291
        %v3137 = vunpack.c.l.b16 %v2292
        %v3138 = vunpack.c.l.b16 %v2293
        %v3139 = vunpack.c.l.b16 %v2294
        %v3140 = vunpack.c.l.b16 %v2295
        %v3141 = vunpack.c.l.b16 %v2296
        %v3142 = vpack.c.b16 %v3135, %v3134
        %v3143 = vpack.c.b16 %v3137, %v3136
        %v3144 = vpack.c.b16 %v3139, %v3138
        %v3145 = vpack.c.b16 %v3141, %v3140
        %v3147 = vsel %vm705, %v2242, 0
        %v3150 = vsel %vm705, %v3142, 0
        %v3153 = vsel %vm705, %v3143, 0
        %v3156 = vsel %vm705, %v3144, 0
        %v3159 = vsel %vm705, %v3145, 0
        %3161 = vmatprep.subr.bf16.mxu0 0
        %3162 = vmatpush1.bf16.xpose.msra.mxu0 %v3150
        %3163 = vmatprep.subr.bf16.mxu0 0
        %3164 = vmatpush1.bf16.xpose.msra.mxu0 %v3153
        %3165 = vmatprep.subr.bf16.mxu0 0
        %3166 = vmatpush1.bf16.xpose.msra.mxu0 %v3156
        %3167 = vmatprep.subr.bf16.mxu0 0
        %3168 = vmatpush1.bf16.xpose.msra.mxu0 %v3159
        %3169 = vmatprep.subr.bf16.mxu0 0
        %3170 = vmatpush1.bf16.xpose.msra.mxu0 0
        %3171 = vmatprep.subr.bf16.mxu0 0
        %3172 = vmatpush1.bf16.xpose.msra.mxu0 0
        %3173 = vmatprep.subr.bf16.mxu0 0
        %3174 = vmatpush1.bf16.xpose.msra.mxu0 0
        %3175 = vmatprep.subr.bf16.mxu0 0
        %3176 = vmatpush1.bf16.xpose.msra.mxu0 0
        %3177 = vmatprep.subr.bf16.mxu0 0
        %3178 = vmatpush1.bf16.xpose.msra.mxu0 0
        %3179 = vmatprep.subr.bf16.mxu0 0
        %3180 = vmatpush1.bf16.xpose.msra.mxu0 0
        %3181 = vmatprep.subr.bf16.mxu0 0
        %3182 = vmatpush1.bf16.xpose.msra.mxu0 0
        %3183 = vmatprep.subr.bf16.mxu0 0
        %3184 = vmatpush1.bf16.xpose.msra.mxu0 0
        %3185 = vmatprep.subr.bf16.mxu0 0
        %3186 = vmatpush1.bf16.xpose.msra.mxu0 0
        %3187 = vmatprep.subr.bf16.mxu0 0
        %3188 = vmatpush1.bf16.xpose.msra.mxu0 0
        %3189 = vmatprep.subr.bf16.mxu0 0
        %3190 = vmatpush1.bf16.xpose.msra.mxu0 0
        %3191 = vmatprep.subr.bf16.mxu0 0
        %3192 = vmatpush1.bf16.xpose.msra.mxu0 0
        %3193 = vmatprep.mubr.bf16.mxu0 0
        %3194 = vmatmul.mubr.bf16.gmra.mrb[0].mxu0 %v3147
        %v3195 = vpop.f32.mrb[0].mxu0
        %v3196 = vadd.f32 %v2896, %v3195
        %v3197 = vpop.f32.mrb[0].mxu0
        %v3198 = vpop.f32.mrb[0].mxu0
        %v3199 = vpop.f32.mrb[0].mxu0
        %3200 = vdwg.mxu0
        %v3209 = vunpack.c.l.b16 %v2297
        %v3210 = vunpack.c.l.b16 %v2298
        %v3211 = vunpack.c.l.b16 %v2299
        %v3212 = vunpack.c.l.b16 %v2300
        %v3213 = vunpack.c.l.b16 %v2301
        %v3214 = vunpack.c.l.b16 %v2302
        %v3215 = vunpack.c.l.b16 %v2303
        %v3216 = vunpack.c.l.b16 %v2304
        %v3217 = vpack.c.b16 %v3210, %v3209
        %v3218 = vpack.c.b16 %v3212, %v3211
        %v3219 = vpack.c.b16 %v3214, %v3213
        %v3220 = vpack.c.b16 %v3216, %v3215
        %v3222 = vsel %vm705, %v2243, 0
        %v3225 = vsel %vm705, %v3217, 0
        %v3228 = vsel %vm705, %v3218, 0
        %v3231 = vsel %vm705, %v3219, 0
        %v3234 = vsel %vm705, %v3220, 0
        %3236 = vmatprep.subr.bf16.mxu0 0
        %3237 = vmatpush1.bf16.xpose.msra.mxu0 %v3225
        %3238 = vmatprep.subr.bf16.mxu0 0
        %3239 = vmatpush1.bf16.xpose.msra.mxu0 %v3228
        %3240 = vmatprep.subr.bf16.mxu0 0
        %3241 = vmatpush1.bf16.xpose.msra.mxu0 %v3231
        %3242 = vmatprep.subr.bf16.mxu0 0
        %3243 = vmatpush1.bf16.xpose.msra.mxu0 %v3234
        %3244 = vmatprep.subr.bf16.mxu0 0
        %3245 = vmatpush1.bf16.xpose.msra.mxu0 0
        %3246 = vmatprep.subr.bf16.mxu0 0
        %3247 = vmatpush1.bf16.xpose.msra.mxu0 0
        %3248 = vmatprep.subr.bf16.mxu0 0
        %3249 = vmatpush1.bf16.xpose.msra.mxu0 0
        %3250 = vmatprep.subr.bf16.mxu0 0
        %3251 = vmatpush1.bf16.xpose.msra.mxu0 0
        %3252 = vmatprep.subr.bf16.mxu0 0
        %3253 = vmatpush1.bf16.xpose.msra.mxu0 0
        %3254 = vmatprep.subr.bf16.mxu0 0
        %3255 = vmatpush1.bf16.xpose.msra.mxu0 0
        %3256 = vmatprep.subr.bf16.mxu0 0
        %3257 = vmatpush1.bf16.xpose.msra.mxu0 0
        %3258 = vmatprep.subr.bf16.mxu0 0
        %3259 = vmatpush1.bf16.xpose.msra.mxu0 0
        %3260 = vmatprep.subr.bf16.mxu0 0
        %3261 = vmatpush1.bf16.xpose.msra.mxu0 0
        %3262 = vmatprep.subr.bf16.mxu0 0
        %3263 = vmatpush1.bf16.xpose.msra.mxu0 0
        %3264 = vmatprep.subr.bf16.mxu0 0
        %3265 = vmatpush1.bf16.xpose.msra.mxu0 0
        %3266 = vmatprep.subr.bf16.mxu0 0
        %3267 = vmatpush1.bf16.xpose.msra.mxu0 0
        %3268 = vmatprep.mubr.bf16.mxu0 0
        %3269 = vmatmul.mubr.bf16.gmra.mrb[0].mxu0 %v3222
        %v3270 = vpop.f32.mrb[0].mxu0
        %v3271 = vadd.f32 %v2897, %v3270
        %v3272 = vpop.f32.mrb[0].mxu0
        %v3273 = vpop.f32.mrb[0].mxu0
        %v3274 = vpop.f32.mrb[0].mxu0
        %3275 = vdwg.mxu0
        %v3284 = vunpack.c.l.b16 %v2305
        %v3285 = vunpack.c.l.b16 %v2306
        %v3286 = vunpack.c.l.b16 %v2307
        %v3287 = vunpack.c.l.b16 %v2308
        %v3288 = vunpack.c.l.b16 %v2309
        %v3289 = vunpack.c.l.b16 %v2310
        %v3290 = vunpack.c.l.b16 %v2311
        %v3291 = vunpack.c.l.b16 %v2312
        %v3292 = vpack.c.b16 %v3285, %v3284
        %v3293 = vpack.c.b16 %v3287, %v3286
        %v3294 = vpack.c.b16 %v3289, %v3288
        %v3295 = vpack.c.b16 %v3291, %v3290
        %v3297 = vsel %vm705, %v2244, 0
        %v3300 = vsel %vm705, %v3292, 0
        %v3303 = vsel %vm705, %v3293, 0
        %v3306 = vsel %vm705, %v3294, 0
        %v3309 = vsel %vm705, %v3295, 0
        %3311 = vmatprep.subr.bf16.mxu0 0
        %3312 = vmatpush1.bf16.xpose.msra.mxu0 %v3300
        %3313 = vmatprep.subr.bf16.mxu0 0
        %3314 = vmatpush1.bf16.xpose.msra.mxu0 %v3303
        %3315 = vmatprep.subr.bf16.mxu0 0
        %3316 = vmatpush1.bf16.xpose.msra.mxu0 %v3306
        %3317 = vmatprep.subr.bf16.mxu0 0
        %3318 = vmatpush1.bf16.xpose.msra.mxu0 %v3309
        %3319 = vmatprep.subr.bf16.mxu0 0
        %3320 = vmatpush1.bf16.xpose.msra.mxu0 0
        %3321 = vmatprep.subr.bf16.mxu0 0
        %3322 = vmatpush1.bf16.xpose.msra.mxu0 0
        %3323 = vmatprep.subr.bf16.mxu0 0
        %3324 = vmatpush1.bf16.xpose.msra.mxu0 0
        %3325 = vmatprep.subr.bf16.mxu0 0
        %3326 = vmatpush1.bf16.xpose.msra.mxu0 0
        %3327 = vmatprep.subr.bf16.mxu0 0
        %3328 = vmatpush1.bf16.xpose.msra.mxu0 0
        %3329 = vmatprep.subr.bf16.mxu0 0
        %3330 = vmatpush1.bf16.xpose.msra.mxu0 0
        %3331 = vmatprep.subr.bf16.mxu0 0
        %3332 = vmatpush1.bf16.xpose.msra.mxu0 0
        %3333 = vmatprep.subr.bf16.mxu0 0
        %3334 = vmatpush1.bf16.xpose.msra.mxu0 0
        %3335 = vmatprep.subr.bf16.mxu0 0
        %3336 = vmatpush1.bf16.xpose.msra.mxu0 0
        %3337 = vmatprep.subr.bf16.mxu0 0
        %3338 = vmatpush1.bf16.xpose.msra.mxu0 0
        %3339 = vmatprep.subr.bf16.mxu0 0
        %3340 = vmatpush1.bf16.xpose.msra.mxu0 0
        %3341 = vmatprep.subr.bf16.mxu0 0
        %3342 = vmatpush1.bf16.xpose.msra.mxu0 0
        %3343 = vmatprep.mubr.bf16.mxu0 0
        %3344 = vmatmul.mubr.bf16.gmra.mrb[0].mxu0 %v3297
        %v3345 = vpop.f32.mrb[0].mxu0
        %v3346 = vadd.f32 %v2898, %v3345
        %v3347 = vpop.f32.mrb[0].mxu0
        %v3348 = vpop.f32.mrb[0].mxu0
        %v3349 = vpop.f32.mrb[0].mxu0
        %3350 = vdwg.mxu0
        %v3359 = vunpack.c.l.b16 %v2313
        %v3360 = vunpack.c.l.b16 %v2314
        %v3361 = vunpack.c.l.b16 %v2315
        %v3362 = vunpack.c.l.b16 %v2316
        %v3363 = vunpack.c.l.b16 %v2317
        %v3364 = vunpack.c.l.b16 %v2318
        %v3365 = vunpack.c.l.b16 %v2319
        %v3366 = vunpack.c.l.b16 %v2320
        %v3367 = vpack.c.b16 %v3360, %v3359
        %v3368 = vpack.c.b16 %v3362, %v3361
        %v3369 = vpack.c.b16 %v3364, %v3363
        %v3370 = vpack.c.b16 %v3366, %v3365
        %v3372 = vsel %vm705, %v2245, 0
        %v3375 = vsel %vm705, %v3367, 0
        %v3378 = vsel %vm705, %v3368, 0
        %v3381 = vsel %vm705, %v3369, 0
        %v3384 = vsel %vm705, %v3370, 0
        %3386 = vmatprep.subr.bf16.mxu0 0
        %3387 = vmatpush1.bf16.xpose.msra.mxu0 %v3375
        %3388 = vmatprep.subr.bf16.mxu0 0
        %3389 = vmatpush1.bf16.xpose.msra.mxu0 %v3378
        %3390 = vmatprep.subr.bf16.mxu0 0
        %3391 = vmatpush1.bf16.xpose.msra.mxu0 %v3381
        %3392 = vmatprep.subr.bf16.mxu0 0
        %3393 = vmatpush1.bf16.xpose.msra.mxu0 %v3384
        %3394 = vmatprep.subr.bf16.mxu0 0
        %3395 = vmatpush1.bf16.xpose.msra.mxu0 0
        %3396 = vmatprep.subr.bf16.mxu0 0
        %3397 = vmatpush1.bf16.xpose.msra.mxu0 0
        %3398 = vmatprep.subr.bf16.mxu0 0
        %3399 = vmatpush1.bf16.xpose.msra.mxu0 0
        %3400 = vmatprep.subr.bf16.mxu0 0
        %3401 = vmatpush1.bf16.xpose.msra.mxu0 0
        %3402 = vmatprep.subr.bf16.mxu0 0
        %3403 = vmatpush1.bf16.xpose.msra.mxu0 0
        %3404 = vmatprep.subr.bf16.mxu0 0
        %3405 = vmatpush1.bf16.xpose.msra.mxu0 0
        %3406 = vmatprep.subr.bf16.mxu0 0
        %3407 = vmatpush1.bf16.xpose.msra.mxu0 0
        %3408 = vmatprep.subr.bf16.mxu0 0
        %3409 = vmatpush1.bf16.xpose.msra.mxu0 0
        %3410 = vmatprep.subr.bf16.mxu0 0
        %3411 = vmatpush1.bf16.xpose.msra.mxu0 0
        %3412 = vmatprep.subr.bf16.mxu0 0
        %3413 = vmatpush1.bf16.xpose.msra.mxu0 0
        %3414 = vmatprep.subr.bf16.mxu0 0
        %3415 = vmatpush1.bf16.xpose.msra.mxu0 0
        %3416 = vmatprep.subr.bf16.mxu0 0
        %3417 = vmatpush1.bf16.xpose.msra.mxu0 0
        %3418 = vmatprep.mubr.bf16.mxu0 0
        %3419 = vmatmul.mubr.bf16.gmra.mrb[0].mxu0 %v3372
        %v3420 = vpop.f32.mrb[0].mxu0
        %v3421 = vadd.f32 %v2899, %v3420
        %v3422 = vpop.f32.mrb[0].mxu0
        %v3423 = vpop.f32.mrb[0].mxu0
        %v3424 = vpop.f32.mrb[0].mxu0
        %3425 = vdwg.mxu0
        %v3434 = vunpack.c.l.b16 %v2321
        %v3435 = vunpack.c.l.b16 %v2322
        %v3436 = vunpack.c.l.b16 %v2323
        %v3437 = vunpack.c.l.b16 %v2324
        %v3438 = vunpack.c.l.b16 %v2325
        %v3439 = vunpack.c.l.b16 %v2326
        %v3440 = vunpack.c.l.b16 %v2327
        %v3441 = vunpack.c.l.b16 %v2328
        %v3442 = vpack.c.b16 %v3435, %v3434
        %v3443 = vpack.c.b16 %v3437, %v3436
        %v3444 = vpack.c.b16 %v3439, %v3438
        %v3445 = vpack.c.b16 %v3441, %v3440
        %v3447 = vsel %vm705, %v2246, 0
        %v3450 = vsel %vm705, %v3442, 0
        %v3453 = vsel %vm705, %v3443, 0
        %v3456 = vsel %vm705, %v3444, 0
        %v3459 = vsel %vm705, %v3445, 0
        %3461 = vmatprep.subr.bf16.mxu0 0
        %3462 = vmatpush1.bf16.xpose.msra.mxu0 %v3450
        %3463 = vmatprep.subr.bf16.mxu0 0
        %3464 = vmatpush1.bf16.xpose.msra.mxu0 %v3453
        %3465 = vmatprep.subr.bf16.mxu0 0
        %3466 = vmatpush1.bf16.xpose.msra.mxu0 %v3456
        %3467 = vmatprep.subr.bf16.mxu0 0
        %3468 = vmatpush1.bf16.xpose.msra.mxu0 %v3459
        %3469 = vmatprep.subr.bf16.mxu0 0
        %3470 = vmatpush1.bf16.xpose.msra.mxu0 0
        %3471 = vmatprep.subr.bf16.mxu0 0
        %3472 = vmatpush1.bf16.xpose.msra.mxu0 0
        %3473 = vmatprep.subr.bf16.mxu0 0
        %3474 = vmatpush1.bf16.xpose.msra.mxu0 0
        %3475 = vmatprep.subr.bf16.mxu0 0
        %3476 = vmatpush1.bf16.xpose.msra.mxu0 0
        %3477 = vmatprep.subr.bf16.mxu0 0
        %3478 = vmatpush1.bf16.xpose.msra.mxu0 0
        %3479 = vmatprep.subr.bf16.mxu0 0
        %3480 = vmatpush1.bf16.xpose.msra.mxu0 0
        %3481 = vmatprep.subr.bf16.mxu0 0
        %3482 = vmatpush1.bf16.xpose.msra.mxu0 0
        %3483 = vmatprep.subr.bf16.mxu0 0
        %3484 = vmatpush1.bf16.xpose.msra.mxu0 0
        %3485 = vmatprep.subr.bf16.mxu0 0
        %3486 = vmatpush1.bf16.xpose.msra.mxu0 0
        %3487 = vmatprep.subr.bf16.mxu0 0
        %3488 = vmatpush1.bf16.xpose.msra.mxu0 0
        %3489 = vmatprep.subr.bf16.mxu0 0
        %3490 = vmatpush1.bf16.xpose.msra.mxu0 0
        %3491 = vmatprep.subr.bf16.mxu0 0
        %3492 = vmatpush1.bf16.xpose.msra.mxu0 0
        %3493 = vmatprep.mubr.bf16.mxu0 0
        %3494 = vmatmul.mubr.bf16.gmra.mrb[0].mxu0 %v3447
        %v3495 = vpop.f32.mrb[0].mxu0
        %v3496 = vadd.f32 %v2900, %v3495
        %v3497 = vpop.f32.mrb[0].mxu0
        %v3498 = vpop.f32.mrb[0].mxu0
        %v3499 = vpop.f32.mrb[0].mxu0
        %3500 = vdwg.mxu0
        %v3501 = vadd.f32 %v2971, %v2026
        %v3502 = vadd.f32 %v3046, %v2026
        %v3503 = vadd.f32 %v3121, %v2026
        %v3504 = vadd.f32 %v3196, %v2026
        %v3505 = vadd.f32 %v3271, %v2026
        %v3506 = vadd.f32 %v3346, %v2026
        %v3507 = vadd.f32 %v3421, %v2026
        %v3508 = vadd.f32 %v3496, %v2026
        %v3509 = vsel %vm2036, %v3501, -inf
        %3510 = vmax.xlane.f32.xlu0 %v3509
        %v3511 = vpop.xlane.xlu0 %3510
        %v3512 = vsel %vm2036, %v3502, -inf
        %3513 = vmax.xlane.f32.xlu0 %v3512
        %v3514 = vpop.xlane.xlu0 %3513
        %v3515 = vsel %vm2036, %v3503, -inf
        %3516 = vmax.xlane.f32.xlu0 %v3515
        %v3517 = vpop.xlane.xlu0 %3516
        %v3518 = vsel %vm2036, %v3504, -inf
        %3519 = vmax.xlane.f32.xlu0 %v3518
        %v3520 = vpop.xlane.xlu0 %3519
        %v3521 = vsel %vm2036, %v3505, -inf
        %3522 = vmax.xlane.f32.xlu0 %v3521
        %v3523 = vpop.xlane.xlu0 %3522
        %v3524 = vsel %vm2036, %v3506, -inf
        %3525 = vmax.xlane.f32.xlu0 %v3524
        %v3526 = vpop.xlane.xlu0 %3525
        %v3527 = vsel %vm2036, %v3507, -inf
        %3528 = vmax.xlane.f32.xlu0 %v3527
        %v3529 = vpop.xlane.xlu0 %3528
        %v3530 = vsel %vm2036, %v3508, -inf
        %3531 = vmax.xlane.f32.xlu0 %v3530
        %v3532 = vpop.xlane.xlu0 %3531
        %v3533 = vsub.f32 %v3501, %v3511
        %v3534 = vsub.f32 %v3502, %v3514
        %v3535 = vsub.f32 %v3503, %v3517
        %v3536 = vsub.f32 %v3504, %v3520
        %v3537 = vsub.f32 %v3505, %v3523
        %v3538 = vsub.f32 %v3506, %v3526
        %v3539 = vsub.f32 %v3507, %v3529
        %v3540 = vsub.f32 %v3508, %v3532
        %v3541 = vmul.f32 %v3533, 1.442695
        %v3542 = vpow.pop %v3541
        %v3543 = vmul.f32 %v3534, 1.442695
        %v3544 = vpow.pop %v3543
        %v3545 = vmul.f32 %v3535, 1.442695
        %v3546 = vpow.pop %v3545
        %v3547 = vmul.f32 %v3536, 1.442695
        %v3548 = vpow.pop %v3547
        %v3549 = vmul.f32 %v3537, 1.442695
        %v3550 = vpow.pop %v3549
        %v3551 = vmul.f32 %v3538, 1.442695
        %v3552 = vpow.pop %v3551
        %v3553 = vmul.f32 %v3539, 1.442695
        %v3554 = vpow.pop %v3553
        %v3555 = vmul.f32 %v3540, 1.442695
        %v3556 = vpow.pop %v3555
        %v3557 = vsel %vm2036, %v3542, 0.0
        %3558 = vadd.xlane.f32.xlu0 %v3557
        %v3559 = vpop.xlane.xlu0 %3558
        %v3560 = vsel %vm2036, %v3544, 0.0
        %3561 = vadd.xlane.f32.xlu0 %v3560
        %v3562 = vpop.xlane.xlu0 %3561
        %v3563 = vsel %vm2036, %v3546, 0.0
        %3564 = vadd.xlane.f32.xlu0 %v3563
        %v3565 = vpop.xlane.xlu0 %3564
        %v3566 = vsel %vm2036, %v3548, 0.0
        %3567 = vadd.xlane.f32.xlu0 %v3566
        %v3568 = vpop.xlane.xlu0 %3567
        %v3569 = vsel %vm2036, %v3550, 0.0
        %3570 = vadd.xlane.f32.xlu0 %v3569
        %v3571 = vpop.xlane.xlu0 %3570
        %v3572 = vsel %vm2036, %v3552, 0.0
        %3573 = vadd.xlane.f32.xlu0 %v3572
        %v3574 = vpop.xlane.xlu0 %3573
        %v3575 = vsel %vm2036, %v3554, 0.0
        %3576 = vadd.xlane.f32.xlu0 %v3575
        %v3577 = vpop.xlane.xlu0 %3576
        %v3578 = vsel %vm2036, %v3556, 0.0
        %3579 = vadd.xlane.f32.xlu0 %v3578
        %v3580 = vpop.xlane.xlu0 %3579
        %v3581 = vrcp.pop %v3559
        %v3582 = vrcp.pop %v3562
        %v3583 = vrcp.pop %v3565
        %v3584 = vrcp.pop %v3568
        %v3585 = vrcp.pop %v3571
        %v3586 = vrcp.pop %v3574
        %v3587 = vrcp.pop %v3577
        %v3588 = vrcp.pop %v3580
        %v3589 = vmul.f32 %v3542, %v3581
        %v3590 = vmul.f32 %v3544, %v3582
        %v3591 = vmul.f32 %v3546, %v3583
        %v3592 = vmul.f32 %v3548, %v3584
        %v3593 = vmul.f32 %v3550, %v3585
        %v3594 = vmul.f32 %v3552, %v3586
        %v3595 = vmul.f32 %v3554, %v3587
        %v3596 = vmul.f32 %v3556, %v3588
        %v3597 = vpack.c.bf16 %v3590, %v3589
        %v3598 = vpack.c.bf16 %v3592, %v3591
        %v3599 = vpack.c.bf16 %v3594, %v3593
        %v3600 = vpack.c.bf16 %v3596, %v3595
        %v3609 = vunpack.c.l.b16 %v2257
        %v3610 = vunpack.c.l.b16 %v2258
        %v3611 = vunpack.c.l.b16 %v2259
        %v3612 = vunpack.c.l.b16 %v2260
        %v3613 = vunpack.c.l.b16 %v2261
        %v3614 = vunpack.c.l.b16 %v2262
        %v3615 = vunpack.c.l.b16 %v2263
        %v3616 = vunpack.c.l.b16 %v2264
        %v3617 = vpack.c.b16 %v3610, %v3609
        %v3618 = vpack.c.b16 %v3612, %v3611
        %v3619 = vpack.c.b16 %v3614, %v3613
        %v3620 = vpack.c.b16 %v3616, %v3615
        %v3626 = vsel %vm2036, %v3597, 0
        %v3629 = vsel %vm2036, %v3598, 0
        %v3632 = vsel %vm2036, %v3599, 0
        %v3635 = vsel %vm2036, %v3600, 0
        %3637 = vmatprep.subr.bf16.mxu0 0
        %3638 = vmatpush1.bf16.msra.mxu0 %v3617
        %3639 = vmatprep.subr.bf16.mxu0 0
        %3640 = vmatpush1.bf16.msra.mxu0 %v3618
        %3641 = vmatprep.subr.bf16.mxu0 0
        %3642 = vmatpush1.bf16.msra.mxu0 %v3619
        %3643 = vmatprep.subr.bf16.mxu0 0
        %3644 = vmatpush1.bf16.msra.mxu0 %v3620
        %3645 = vmatprep.subr.bf16.mxu0 0
        %3646 = vmatpush1.bf16.msra.mxu0 0
        %3647 = vmatprep.subr.bf16.mxu0 0
        %3648 = vmatpush1.bf16.msra.mxu0 0
        %3649 = vmatprep.subr.bf16.mxu0 0
        %3650 = vmatpush1.bf16.msra.mxu0 0
        %3651 = vmatprep.subr.bf16.mxu0 0
        %3652 = vmatpush1.bf16.msra.mxu0 0
        %3653 = vmatprep.subr.bf16.mxu0 0
        %3654 = vmatpush1.bf16.msra.mxu0 0
        %3655 = vmatprep.subr.bf16.mxu0 0
        %3656 = vmatpush1.bf16.msra.mxu0 0
        %3657 = vmatprep.subr.bf16.mxu0 0
        %3658 = vmatpush1.bf16.msra.mxu0 0
        %3659 = vmatprep.subr.bf16.mxu0 0
        %3660 = vmatpush1.bf16.msra.mxu0 0
        %3661 = vmatprep.subr.bf16.mxu0 0
        %3662 = vmatpush1.bf16.msra.mxu0 0
        %3663 = vmatprep.subr.bf16.mxu0 0
        %3664 = vmatpush1.bf16.msra.mxu0 0
        %3665 = vmatprep.subr.bf16.mxu0 0
        %3666 = vmatpush1.bf16.msra.mxu0 0
        %3667 = vmatprep.subr.bf16.mxu0 0
        %3668 = vmatpush1.bf16.msra.mxu0 0
        %3669 = vmatprep.mubr.bf16.mxu0 0
        %3670 = vmatmul.mubr.bf16.gmra.mrb[0].mxu0 %v3626
        %v3671 = vpop.f32.mrb[0].mxu0
        %v3672 = vadd.f32 0.0, %v3671
        %v3673 = vpop.f32.mrb[0].mxu0
        %v3674 = vpop.f32.mrb[0].mxu0
        %v3675 = vadd.f32 0.0, %v3674
        %v3676 = vpop.f32.mrb[0].mxu0
        %3677 = vmatprep.mubr.bf16.mxu0 0
        %3678 = vmatmul.mubr.bf16.gmra.mrb[0].mxu0 %v3629
        %v3679 = vpop.f32.mrb[0].mxu0
        %v3680 = vadd.f32 0.0, %v3679
        %v3681 = vpop.f32.mrb[0].mxu0
        %v3682 = vpop.f32.mrb[0].mxu0
        %v3683 = vadd.f32 0.0, %v3682
        %v3684 = vpop.f32.mrb[0].mxu0
        %3685 = vmatprep.mubr.bf16.mxu0 0
        %3686 = vmatmul.mubr.bf16.gmra.mrb[0].mxu0 %v3632
        %v3687 = vpop.f32.mrb[0].mxu0
        %v3688 = vadd.f32 0.0, %v3687
        %v3689 = vpop.f32.mrb[0].mxu0
        %v3690 = vpop.f32.mrb[0].mxu0
        %v3691 = vadd.f32 0.0, %v3690
        %v3692 = vpop.f32.mrb[0].mxu0
        %3693 = vmatprep.mubr.bf16.mxu0 0
        %3694 = vmatmul.mubr.bf16.gmra.mrb[0].mxu0 %v3635
        %v3695 = vpop.f32.mrb[0].mxu0
        %v3696 = vadd.f32 0.0, %v3695
        %v3697 = vpop.f32.mrb[0].mxu0
        %v3698 = vpop.f32.mrb[0].mxu0
        %v3699 = vadd.f32 0.0, %v3698
        %v3700 = vpop.f32.mrb[0].mxu0
        %3701 = vdwg.mxu0
        %3710 = vrot.lane.b32.xlu0 %v3672, 32
        %v3711 = vpop.permute.xlu0 %3710
        %3712 = vrot.lane.b32.xlu0 %v3675, 32
        %v3713 = vpop.permute.xlu0 %3712
        %3714 = vrot.lane.b32.xlu0 %v3680, 32
        %v3715 = vpop.permute.xlu0 %3714
        %3716 = vrot.lane.b32.xlu0 %v3683, 32
        %v3717 = vpop.permute.xlu0 %3716
        %3718 = vrot.lane.b32.xlu0 %v3688, 32
        %v3719 = vpop.permute.xlu0 %3718
        %3720 = vrot.lane.b32.xlu0 %v3691, 32
        %v3721 = vpop.permute.xlu0 %3720
        %3722 = vrot.lane.b32.xlu0 %v3696, 32
        %v3723 = vpop.permute.xlu0 %3722
        %3724 = vrot.lane.b32.xlu0 %v3699, 32
        %v3725 = vpop.permute.xlu0 %3724
        %vm3734 = vcmask 523520
        %3735 = vst.msk [vmem:[%s338] sm:$0xff] %vm3734, %v3711
        %3736 = vst.msk [vmem:[%s338 + $0x8] sm:$0xff] %vm3734, %v3713
        %3737 = vst.msk [vmem:[%s338 + $0x10] sm:$0xff] %vm3734, %v3715
        %3738 = vst.msk [vmem:[%s338 + $0x18] sm:$0xff] %vm3734, %v3717
        %3739 = vst.msk [vmem:[%s338 + $0x20] sm:$0xff] %vm3734, %v3719
        %3740 = vst.msk [vmem:[%s338 + $0x28] sm:$0xff] %vm3734, %v3721
        %3741 = vst.msk [vmem:[%s338 + $0x30] sm:$0xff] %vm3734, %v3723
        %3742 = vst.msk [vmem:[%s338 + $0x38] sm:$0xff] %vm3734, %v3725
        %s3743 = sand.u32 %s194, 1
        %s3744 = scalar_lea.sflag [#allocation3], %s3743
        %s3745 = sand.u32 %s194, 1
        %s3746 = smul.addr %s3745, 64
        %s3747 = scalar_lea.vmem [#allocation2], %s3746
        // Predicated region
        $region45: #{tpu_custom_call.1} parent=43 // pred_check
          %p3748 = pneg %p204
        $region46: #{tpu_custom_call.1} parent=43 // pred_check_branch
          %3750 = sbr.rel (%p3748) target = $region48
        $region47: #{tpu_custom_call.1} parent=43 // pred_region
          %s3752 = ssub.s32 1024, 1024
          %3753 = vsyncadd %s3744, %s3752
          %s3754 = smul.addr %s24, 8
          %s3755 = sadd.s32 %s25, %s3754
          %s3756 = smul.addr %s3755, 128
          %s3757 = scalar_lea.hbm %s6, %s3756
          %s3758 = sshll.u32 %s3747, 4
          %s3759 = int_to_ptr.vmem [resolvable:$true] %s3758
          %3764 = dma.vmem_to_hbm [thread:$0]  %s3759, 1024, %s3757, %s3744, 128, 128, 8
        $region48: #{tpu_custom_call.1} parent=43 // pred_fallthru
          _
      $region44: #{tpu_custom_call.1} parent=5 // pred_fallthru
        _
      %p3765 = scmp.le.s32.totalorder 2, %s15
      // Predicated region
      $region49: #{tpu_custom_call.1} parent=5 // pred_check
        %p3766 = pneg %p3765
      $region50: #{tpu_custom_call.1} parent=5 // pred_check_branch
        %3768 = sbr.rel (%p3766) target = $region52
      $region51: #{tpu_custom_call.1} parent=5 // pred_region
        %s3769 = ssub.s32 %s15, 2
        // Predicated region
        $region53: #{tpu_custom_call.1} parent=51 // pred_check
          %p3770 = pneg %p210
        $region54: #{tpu_custom_call.1} parent=51 // pred_check_branch
          %3772 = sbr.rel (%p3770) target = $region56
        $region55: #{tpu_custom_call.1} parent=51 // pred_region
          %s3773 = sand.u32 %s195, 1
          %s3774 = scalar_lea.sflag [#allocation3], %s3773
          %s3775 = sand.u32 %s195, 1
          %s3776 = smul.addr %s3775, 64
          %s3777 = scalar_lea.vmem [#allocation2], %s3776
          %3778 = dma.done %s3774, 1024
        $region56: #{tpu_custom_call.1} parent=51 // pred_fallthru
          _
      $region52: #{tpu_custom_call.1} parent=5 // pred_fallthru
        _
    $region6: #{tpu_custom_call.1} parent=1 // loop_footer
      %s19 = sadd.s32 1, %s15
    $region7: #{tpu_custom_call.1} parent=1 // loop_footer_branch
      %14 = sbr.rel target = $region3
    $region8: #{tpu_custom_call.1} parent=1 // loop_exit
      _
    %3779 = vsyncpa [#allocation3], 1
    %s3780 = scalar_lea.sflag [#allocation3], 1
    %3781 = vsyncpa %s3780, 1

</llo_original>
